<compile_context>
chip_gen: v5e
topology: v5e:2x2
jax: 0.10.0
libtpu: 0.0.40
codegen_flags: <defaults>
</compile_context>

<pallas_src>
import numpy as np
import jax
import jax.numpy as jnp
from jax.experimental import pallas as pl
from jax.experimental.pallas import tpu as pltpu

BN_EPS = 1e-5


def _full_spec(shape):
    # Whole-array VMEM block, no grid.
    return pl.BlockSpec(shape, lambda: (0,) * len(shape))


# ---------------------------------------------------------------------------
# Fused Pallas kernel: conv1+bn1+relu -> conv2+bn2+relu -> conv3+abs
# ---------------------------------------------------------------------------
def _make_fused_kernel(n, d, h, c, w_in, wo1, wo2, wo3):
    m = n * d * h                       # rows of every layer's matmul
    taps = [(kd, kh) for kd in range(3) for kh in range(3)]

    def conv_taps(src_ref, w_ref, k_lanes, out_lanes):
        # 3x3 (D, H) halo taps; the W-kernel / stride / W-padding live in the
        # banded weight matrix, so each tap is a dense (m, K) x (K, Wo*C) dot.
        acc = jnp.zeros((m, out_lanes), jnp.float32)
        for t, (kd, kh) in enumerate(taps):
            xt = src_ref[:, kd:kd + d, kh:kh + h, :]            # (n, d, h, K) f32
            xt = xt.reshape(m, k_lanes).astype(jnp.bfloat16)    # bf16 MXU operand
            acc = acc + jnp.dot(xt, w_ref[t],
                                preferred_element_type=jnp.float32)
        return acc

    def bn_relu(y, s_ref, st_ref, g_ref, be_ref, wo):
        # Training-mode BatchNorm (batch stats, biased variance) folded into a
        # single per-channel scale/shift.  Per-channel sums over the
        # (W-position, channel)-interleaved lane dim go through a one-hot
        # matmul (no lane-splitting reshape).  Conv bias is omitted upstream
        # because the mean subtraction cancels it exactly.
        inv_cnt = 1.0 / float(m * wo)
        sel = s_ref[...]                                        # (wo*c, c)
        mean = jnp.sum(jnp.dot(y, sel, preferred_element_type=jnp.float32),
                       axis=0, keepdims=True) * inv_cnt         # (1, c)
        ex2 = jnp.sum(jnp.dot(y * y, sel, preferred_element_type=jnp.float32),
                      axis=0, keepdims=True) * inv_cnt          # (1, c)
        var = ex2 - mean * mean                                 # biased (torch BN)
        scale_c = g_ref[...] * jax.lax.rsqrt(var + BN_EPS)      # (1, c)
        shift_c = be_ref[...] - mean * scale_c                  # (1, c)
        # Broadcast channel-space scale/shift back to the (wo*c) lane layout.
        scale = jnp.dot(jnp.broadcast_to(scale_c, (m, c)), st_ref[...],
                        preferred_element_type=jnp.float32)     # (m, wo*c)
        shift = jnp.dot(jnp.broadcast_to(shift_c, (m, c)), st_ref[...],
                        preferred_element_type=jnp.float32)
        return jnp.maximum(y * scale + shift, 0.0)

    def stash_padded(dst_ref, y, out_lanes):
        # Zero the (D, H) halo once, then write the valid interior so the next
        # layer's halo taps see correct zero padding.
        dst_ref[...] = jnp.zeros_like(dst_ref)
        dst_ref[:, 1:1 + d, 1:1 + h, :] = y.reshape(n, d, h, out_lanes)

    def kernel(x_ref, w1_ref, w2_ref, w3_ref, b3_ref,
               g1_ref, be1_ref, g2_ref, be2_ref,
               s1_ref, s1t_ref, s2_ref, s2t_ref,
               o_ref, a1_ref, a2_ref):
        # layer 1: conv1 + bn1 + relu   (conv1 bias cancelled by BN mean)
        y1 = conv_taps(x_ref, w1_ref, w_in * c, wo1 * c)
        y1 = bn_relu(y1, s1_ref, s1t_ref, g1_ref, be1_ref, wo1)
        stash_padded(a1_ref, y1, wo1 * c)

        # layer 2: conv2 + bn2 + relu   (conv2 bias cancelled by BN mean)
        y2 = conv_taps(a1_ref, w2_ref, wo1 * c, wo2 * c)
        y2 = bn_relu(y2, s2_ref, s2t_ref, g2_ref, be2_ref, wo2)
        stash_padded(a2_ref, y2, wo2 * c)

        # layer 3: conv3 + bias + abs
        y3 = conv_taps(a2_ref, w3_ref, wo2 * c, wo3 * c)
        o_ref[...] = jnp.abs(y3 + b3_ref[...])

    return kernel


# ---------------------------------------------------------------------------
# Parameter init / packing (banded weight matrices, one-hot selectors)
# ---------------------------------------------------------------------------
def init_params(key, nx):
    # Deterministic init mimicking torch Conv3d default (uniform +-1/sqrt(fan_in)).
    def conv(k, kw_sz):
        fan_in = nx * 3 * 3 * kw_sz
        bound = 1.0 / float(np.sqrt(fan_in))
        wk, bk = jax.random.split(k)
        wgt = jax.random.uniform(wk, (3, 3, kw_sz, nx, nx), jnp.float32,
                                 -bound, bound)
        b = jax.random.uniform(bk, (1, nx), jnp.float32, -bound, bound)
        return wgt, b

    k1, k2, k3 = jax.random.split(key, 3)
    w1, b1 = conv(k1, 16)
    w2, b2 = conv(k2, 4)
    w3, b3 = conv(k3, 2)
    # b1/b2 are kept for parity with torch but are NOT used by the kernel:
    # they are exactly cancelled by the BatchNorm mean subtraction.
    return dict(w1=w1, b1=b1, w2=w2, b2=b2, w3=w3, b3=b3,
                g1=jnp.ones((1, nx), jnp.float32),
                be1=jnp.zeros((1, nx), jnp.float32),
                g2=jnp.ones((1, nx), jnp.float32),
                be2=jnp.zeros((1, nx), jnp.float32))


def _band_weights(conv_w, w_in, stride, pad):
    """conv_w: (3, 3, KW, Cin, Cout) -> (9, W_in*Cin, Wo*Cout) banded matrices.

    band[t, wi*Cin+ci, wo*Cout+co] = conv_w[kd, kh, wi + pad - wo*stride, ci, co]
    (zero outside the kernel window); t enumerates the 3x3 (kd, kh) taps.
    """
    kw_sz, c_in, c_out = conv_w.shape[2], conv_w.shape[3], conv_w.shape[4]
    wo = (w_in + 2 * pad - kw_sz) // stride + 1
    w_np = np.asarray(conv_w, np.float32)
    band = np.zeros((9, w_in * c_in, wo * c_out), np.float32)
    for t, (kd, kh) in enumerate([(a, b) for a in range(3) for b in range(3)]):
        for wo_i in range(wo):
            for kw_i in range(kw_sz):
                wi = wo_i * stride + kw_i - pad
                if 0 <= wi < w_in:
                    band[t,
                         wi * c_in:(wi + 1) * c_in,
                         wo_i * c_out:(wo_i + 1) * c_out] = w_np[kd, kh, kw_i]
    return jnp.asarray(band, jnp.bfloat16), wo


def pack_params(params, w_in):
    nx = params["g1"].shape[1]
    w1b, wo1 = _band_weights(params["w1"], w_in, 3, 1)
    w2b, wo2 = _band_weights(params["w2"], wo1, 3, 0)
    w3b, wo3 = _band_weights(params["w3"], wo2, 1, 0)

    def selectors(wo):
        s = jnp.tile(jnp.eye(nx, dtype=jnp.float32), (wo, 1))   # (wo*nx, nx)
        return s, s.T                                           # and (nx, wo*nx)

    s1, s1t = selectors(wo1)
    s2, s2t = selectors(wo2)
    return dict(w1=w1b, w2=w2b, w3=w3b, b3=params["b3"],
                g1=params["g1"], be1=params["be1"],
                g2=params["g2"], be2=params["be2"],
                s1=s1, s1t=s1t, s2=s2, s2t=s2t,
                wo=(wo1, wo2, wo3))


# ---------------------------------------------------------------------------
# Forward pass (matches CNNs.forward, training-mode BN)
# ---------------------------------------------------------------------------
def cnns_forward(x_ncdhw, packed):
    n, c, d, h, w = x_ncdhw.shape
    wo1, wo2, wo3 = packed["wo"]

    # Layout glue (cheap, outside the kernel): NCDHW -> (N, D+2, H+2, W*C),
    # D/H zero-padded by 1 (all three convs use k=3, s=1, p=1 along D/H).
    x = jnp.transpose(x_ncdhw, (0, 2, 3, 4, 1)).astype(jnp.float32)
    x = x.reshape(n, d, h, w * c)
    x = jnp.pad(x, ((0, 0), (1, 1), (1, 1), (0, 0)))

    m = n * d * h
    kernel = _make_fused_kernel(n, d, h, c, w, wo1, wo2, wo3)
    args = (x, packed["w1"], packed["w2"], packed["w3"], packed["b3"],
            packed["g1"], packed["be1"], packed["g2"], packed["be2"],
            packed["s1"], packed["s1t"], packed["s2"], packed["s2t"])

    out = pl.pallas_call(
        kernel,
        out_shape=jax.ShapeDtypeStruct((m, wo3 * c), jnp.float32),
        in_specs=[_full_spec(a.shape) for a in args],
        out_specs=_full_spec((m, wo3 * c)),
        scratch_shapes=[
            pltpu.VMEM((n, d + 2, h + 2, wo1 * c), jnp.float32),  # padded act 1
            pltpu.VMEM((n, d + 2, h + 2, wo2 * c), jnp.float32),  # padded act 2
        ],
        # TODO(synk): for much larger N*D*H*W, add a grid over (N, D) with a
        # cross-step BN reduction so the work tiles through VMEM and can be
        # sharded across v7x's two TensorCores; at these shapes the whole
        # problem (<1 MiB) is VMEM-resident and one fused launch is fastest.
    )(*args)

    out = out.reshape(n, d, h, wo3, c)
    return jnp.transpose(out, (0, 4, 1, 2, 3))      # back to (N, C, D, H, Wo)


# ---------------------------------------------------------------------------
# Pure-JAX reference (plain XLA ops), training-mode BN — for validation only
# ---------------------------------------------------------------------------
def _reference_forward(x, params):
    def conv3d(y, wgt, b, stride, pad):
        wt = jnp.transpose(wgt, (4, 3, 0, 1, 2))                # (O, I, kd, kh, kw)
        out = jax.lax.conv_general_dilated(
            y, wt, window_strides=stride,
            padding=[(pad[0], pad[0]), (pad[1], pad[1]), (pad[2], pad[2])],
            dimension_numbers=("NCDHW", "OIDHW", "NCDHW"))
        return out + b.reshape(1, -1, 1, 1, 1)

    def bn(y, g, be):
        mean = jnp.mean(y, axis=(0, 2, 3, 4), keepdims=True)
        var = jnp.mean((y - mean) ** 2, axis=(0, 2, 3, 4), keepdims=True)
        return ((y - mean) * jax.lax.rsqrt(var + BN_EPS)
                * g.reshape(1, -1, 1, 1, 1) + be.reshape(1, -1, 1, 1, 1))

    y = jax.nn.relu(bn(conv3d(x, params["w1"], params["b1"], (1, 1, 3), (1, 1, 1)),
                       params["g1"], params["be1"]))
    y = jax.nn.relu(bn(conv3d(y, params["w2"], params["b2"], (1, 1, 3), (1, 1, 0)),
                       params["g2"], params["be2"]))
    return jnp.abs(conv3d(y, params["w3"], params["b3"], (1, 1, 1), (1, 1, 0)))


if __name__ == "__main__":
    nx = 4                        # channels
    N, D, H, W = 2, 8, 8, 32      # small shapes consistent with the conv stack
    key = jax.random.PRNGKey(0)
    pkey, xkey = jax.random.split(key)

    params = init_params(pkey, nx)
    packed = pack_params(params, W)
    x = jax.random.normal(xkey, (N, nx, D, H, W), jnp.float32)  # NCDHW like PyTorch

    fwd = jax.jit(lambda xx: cnns_forward(xx, packed))
    out = fwd(x)
    jax.block_until_ready(out)

    # conv1: W 32->7, conv2: 7->2, conv3: 2->1 ; D,H preserved (3x3, pad 1)
    assert out.shape == (N, nx, D, H, 1), out.shape
    assert bool(jnp.all(out >= 0.0))          # final torch.abs

    # Numerical check vs. plain-JAX reference (loose tol: bf16 MXU operands).
    ref = _reference_forward(x, params)
    max_err = float(jnp.max(jnp.abs(out - ref)))
    assert max_err < 1e-1, f"mismatch vs reference: max |err| = {max_err}"

    print("KERNEL_OK")
</pallas_src>

<mosaic_0001>
module attributes {stable_mosaic.version = 11 : i64} {
  func.func @kernel(%arg0: memref<2x10x10x128xf32, #tpu.memory_space<vmem>>, %arg1: memref<9x128x28xbf16, #tpu.memory_space<vmem>>, %arg2: memref<9x28x8xbf16, #tpu.memory_space<vmem>>, %arg3: memref<9x8x4xbf16, #tpu.memory_space<vmem>>, %arg4: memref<1x4xf32, #tpu.memory_space<vmem>>, %arg5: memref<1x4xf32, #tpu.memory_space<vmem>>, %arg6: memref<1x4xf32, #tpu.memory_space<vmem>>, %arg7: memref<1x4xf32, #tpu.memory_space<vmem>>, %arg8: memref<1x4xf32, #tpu.memory_space<vmem>>, %arg9: memref<28x4xf32, #tpu.memory_space<vmem>>, %arg10: memref<4x28xf32, #tpu.memory_space<vmem>>, %arg11: memref<8x4xf32, #tpu.memory_space<vmem>>, %arg12: memref<4x8xf32, #tpu.memory_space<vmem>>, %arg13: memref<128x4xf32, #tpu.memory_space<vmem>>, %arg14: memref<2x10x10x28xf32, #tpu.memory_space<vmem>>, %arg15: memref<2x10x10x8xf32, #tpu.memory_space<vmem>>) attributes {dimension_semantics = [], scalar_prefetch = 0 : i64, scratch_operands = 2 : i64, tpu.core_type = #tpu.core_type<tc>} {
    %cst = arith.constant 0.000000e+00 : f32
    %0 = vector.broadcast %cst : f32 to vector<128x28xf32>
    %c0 = arith.constant 0 : index
    %c0_0 = arith.constant 0 : index
    %c0_1 = arith.constant 0 : index
    %c0_2 = arith.constant 0 : index
    %1 = vector.load %arg0[%c0, %c0_0, %c0_1, %c0_2] : memref<2x10x10x128xf32, #tpu.memory_space<vmem>>, vector<2x8x8x128xf32>
    %2 = vector.shape_cast %1 : vector<2x8x8x128xf32> to vector<128x128xf32>
    %3 = arith.truncf %2 : vector<128x128xf32> to vector<128x128xbf16>
    %c0_3 = arith.constant 0 : index
    %c0_4 = arith.constant 0 : index
    %c0_5 = arith.constant 0 : index
    %4 = vector.load %arg1[%c0_3, %c0_4, %c0_5] : memref<9x128x28xbf16, #tpu.memory_space<vmem>>, vector<1x128x28xbf16>
    %5 = vector.shape_cast %4 : vector<1x128x28xbf16> to vector<128x28xbf16>
    %cst_6 = arith.constant dense<0.000000e+00> : vector<128x28xf32>
    %6 = tpu.matmul %3, %5, %cst_6 {dimension_numbers = #tpu.dot_dimension_numbers<[1], [0], [0], [1], [0, 0, 1, 1], [], []>} : vector<128x128xbf16>, vector<128x28xbf16>, vector<128x28xf32> -> vector<128x28xf32>
    %7 = arith.addf %0, %6 : vector<128x28xf32>
    %c0_7 = arith.constant 0 : index
    %c0_8 = arith.constant 0 : index
    %c1 = arith.constant 1 : index
    %c0_9 = arith.constant 0 : index
    %8 = vector.load %arg0[%c0_7, %c0_8, %c1, %c0_9] : memref<2x10x10x128xf32, #tpu.memory_space<vmem>>, vector<2x8x8x128xf32>
    %9 = vector.shape_cast %8 : vector<2x8x8x128xf32> to vector<128x128xf32>
    %10 = arith.truncf %9 : vector<128x128xf32> to vector<128x128xbf16>
    %c1_10 = arith.constant 1 : index
    %c0_11 = arith.constant 0 : index
    %c0_12 = arith.constant 0 : index
    %11 = vector.load %arg1[%c1_10, %c0_11, %c0_12] : memref<9x128x28xbf16, #tpu.memory_space<vmem>>, vector<1x128x28xbf16>
    %12 = vector.shape_cast %11 : vector<1x128x28xbf16> to vector<128x28xbf16>
    %cst_13 = arith.constant dense<0.000000e+00> : vector<128x28xf32>
    %13 = tpu.matmul %10, %12, %cst_13 {dimension_numbers = #tpu.dot_dimension_numbers<[1], [0], [0], [1], [0, 0, 1, 1], [], []>} : vector<128x128xbf16>, vector<128x28xbf16>, vector<128x28xf32> -> vector<128x28xf32>
    %14 = arith.addf %7, %13 : vector<128x28xf32>
    %c0_14 = arith.constant 0 : index
    %c0_15 = arith.constant 0 : index
    %c2 = arith.constant 2 : index
    %c0_16 = arith.constant 0 : index
    %15 = vector.load %arg0[%c0_14, %c0_15, %c2, %c0_16] : memref<2x10x10x128xf32, #tpu.memory_space<vmem>>, vector<2x8x8x128xf32>
    %16 = vector.shape_cast %15 : vector<2x8x8x128xf32> to vector<128x128xf32>
    %17 = arith.truncf %16 : vector<128x128xf32> to vector<128x128xbf16>
    %c2_17 = arith.constant 2 : index
    %c0_18 = arith.constant 0 : index
    %c0_19 = arith.constant 0 : index
    %18 = vector.load %arg1[%c2_17, %c0_18, %c0_19] : memref<9x128x28xbf16, #tpu.memory_space<vmem>>, vector<1x128x28xbf16>
    %19 = vector.shape_cast %18 : vector<1x128x28xbf16> to vector<128x28xbf16>
    %cst_20 = arith.constant dense<0.000000e+00> : vector<128x28xf32>
    %20 = tpu.matmul %17, %19, %cst_20 {dimension_numbers = #tpu.dot_dimension_numbers<[1], [0], [0], [1], [0, 0, 1, 1], [], []>} : vector<128x128xbf16>, vector<128x28xbf16>, vector<128x28xf32> -> vector<128x28xf32>
    %21 = arith.addf %14, %20 : vector<128x28xf32>
    %c0_21 = arith.constant 0 : index
    %c1_22 = arith.constant 1 : index
    %c0_23 = arith.constant 0 : index
    %c0_24 = arith.constant 0 : index
    %22 = vector.load %arg0[%c0_21, %c1_22, %c0_23, %c0_24] : memref<2x10x10x128xf32, #tpu.memory_space<vmem>>, vector<2x8x8x128xf32>
    %23 = vector.shape_cast %22 : vector<2x8x8x128xf32> to vector<128x128xf32>
    %24 = arith.truncf %23 : vector<128x128xf32> to vector<128x128xbf16>
    %c3 = arith.constant 3 : index
    %c0_25 = arith.constant 0 : index
    %c0_26 = arith.constant 0 : index
    %25 = vector.load %arg1[%c3, %c0_25, %c0_26] : memref<9x128x28xbf16, #tpu.memory_space<vmem>>, vector<1x128x28xbf16>
    %26 = vector.shape_cast %25 : vector<1x128x28xbf16> to vector<128x28xbf16>
    %cst_27 = arith.constant dense<0.000000e+00> : vector<128x28xf32>
    %27 = tpu.matmul %24, %26, %cst_27 {dimension_numbers = #tpu.dot_dimension_numbers<[1], [0], [0], [1], [0, 0, 1, 1], [], []>} : vector<128x128xbf16>, vector<128x28xbf16>, vector<128x28xf32> -> vector<128x28xf32>
    %28 = arith.addf %21, %27 : vector<128x28xf32>
    %c0_28 = arith.constant 0 : index
    %c1_29 = arith.constant 1 : index
    %c1_30 = arith.constant 1 : index
    %c0_31 = arith.constant 0 : index
    %29 = vector.load %arg0[%c0_28, %c1_29, %c1_30, %c0_31] : memref<2x10x10x128xf32, #tpu.memory_space<vmem>>, vector<2x8x8x128xf32>
    %30 = vector.shape_cast %29 : vector<2x8x8x128xf32> to vector<128x128xf32>
    %31 = arith.truncf %30 : vector<128x128xf32> to vector<128x128xbf16>
    %c4 = arith.constant 4 : index
    %c0_32 = arith.constant 0 : index
    %c0_33 = arith.constant 0 : index
    %32 = vector.load %arg1[%c4, %c0_32, %c0_33] : memref<9x128x28xbf16, #tpu.memory_space<vmem>>, vector<1x128x28xbf16>
    %33 = vector.shape_cast %32 : vector<1x128x28xbf16> to vector<128x28xbf16>
    %cst_34 = arith.constant dense<0.000000e+00> : vector<128x28xf32>
    %34 = tpu.matmul %31, %33, %cst_34 {dimension_numbers = #tpu.dot_dimension_numbers<[1], [0], [0], [1], [0, 0, 1, 1], [], []>} : vector<128x128xbf16>, vector<128x28xbf16>, vector<128x28xf32> -> vector<128x28xf32>
    %35 = arith.addf %28, %34 : vector<128x28xf32>
    %c0_35 = arith.constant 0 : index
    %c1_36 = arith.constant 1 : index
    %c2_37 = arith.constant 2 : index
    %c0_38 = arith.constant 0 : index
    %36 = vector.load %arg0[%c0_35, %c1_36, %c2_37, %c0_38] : memref<2x10x10x128xf32, #tpu.memory_space<vmem>>, vector<2x8x8x128xf32>
    %37 = vector.shape_cast %36 : vector<2x8x8x128xf32> to vector<128x128xf32>
    %38 = arith.truncf %37 : vector<128x128xf32> to vector<128x128xbf16>
    %c5 = arith.constant 5 : index
    %c0_39 = arith.constant 0 : index
    %c0_40 = arith.constant 0 : index
    %39 = vector.load %arg1[%c5, %c0_39, %c0_40] : memref<9x128x28xbf16, #tpu.memory_space<vmem>>, vector<1x128x28xbf16>
    %40 = vector.shape_cast %39 : vector<1x128x28xbf16> to vector<128x28xbf16>
    %cst_41 = arith.constant dense<0.000000e+00> : vector<128x28xf32>
    %41 = tpu.matmul %38, %40, %cst_41 {dimension_numbers = #tpu.dot_dimension_numbers<[1], [0], [0], [1], [0, 0, 1, 1], [], []>} : vector<128x128xbf16>, vector<128x28xbf16>, vector<128x28xf32> -> vector<128x28xf32>
    %42 = arith.addf %35, %41 : vector<128x28xf32>
    %c0_42 = arith.constant 0 : index
    %c2_43 = arith.constant 2 : index
    %c0_44 = arith.constant 0 : index
    %c0_45 = arith.constant 0 : index
    %43 = vector.load %arg0[%c0_42, %c2_43, %c0_44, %c0_45] : memref<2x10x10x128xf32, #tpu.memory_space<vmem>>, vector<2x8x8x128xf32>
    %44 = vector.shape_cast %43 : vector<2x8x8x128xf32> to vector<128x128xf32>
    %45 = arith.truncf %44 : vector<128x128xf32> to vector<128x128xbf16>
    %c6 = arith.constant 6 : index
    %c0_46 = arith.constant 0 : index
    %c0_47 = arith.constant 0 : index
    %46 = vector.load %arg1[%c6, %c0_46, %c0_47] : memref<9x128x28xbf16, #tpu.memory_space<vmem>>, vector<1x128x28xbf16>
    %47 = vector.shape_cast %46 : vector<1x128x28xbf16> to vector<128x28xbf16>
    %cst_48 = arith.constant dense<0.000000e+00> : vector<128x28xf32>
    %48 = tpu.matmul %45, %47, %cst_48 {dimension_numbers = #tpu.dot_dimension_numbers<[1], [0], [0], [1], [0, 0, 1, 1], [], []>} : vector<128x128xbf16>, vector<128x28xbf16>, vector<128x28xf32> -> vector<128x28xf32>
    %49 = arith.addf %42, %48 : vector<128x28xf32>
    %c0_49 = arith.constant 0 : index
    %c2_50 = arith.constant 2 : index
    %c1_51 = arith.constant 1 : index
    %c0_52 = arith.constant 0 : index
    %50 = vector.load %arg0[%c0_49, %c2_50, %c1_51, %c0_52] : memref<2x10x10x128xf32, #tpu.memory_space<vmem>>, vector<2x8x8x128xf32>
    %51 = vector.shape_cast %50 : vector<2x8x8x128xf32> to vector<128x128xf32>
    %52 = arith.truncf %51 : vector<128x128xf32> to vector<128x128xbf16>
    %c7 = arith.constant 7 : index
    %c0_53 = arith.constant 0 : index
    %c0_54 = arith.constant 0 : index
    %53 = vector.load %arg1[%c7, %c0_53, %c0_54] : memref<9x128x28xbf16, #tpu.memory_space<vmem>>, vector<1x128x28xbf16>
    %54 = vector.shape_cast %53 : vector<1x128x28xbf16> to vector<128x28xbf16>
    %cst_55 = arith.constant dense<0.000000e+00> : vector<128x28xf32>
    %55 = tpu.matmul %52, %54, %cst_55 {dimension_numbers = #tpu.dot_dimension_numbers<[1], [0], [0], [1], [0, 0, 1, 1], [], []>} : vector<128x128xbf16>, vector<128x28xbf16>, vector<128x28xf32> -> vector<128x28xf32>
    %56 = arith.addf %49, %55 : vector<128x28xf32>
    %c0_56 = arith.constant 0 : index
    %c2_57 = arith.constant 2 : index
    %c2_58 = arith.constant 2 : index
    %c0_59 = arith.constant 0 : index
    %57 = vector.load %arg0[%c0_56, %c2_57, %c2_58, %c0_59] : memref<2x10x10x128xf32, #tpu.memory_space<vmem>>, vector<2x8x8x128xf32>
    %58 = vector.shape_cast %57 : vector<2x8x8x128xf32> to vector<128x128xf32>
    %59 = arith.truncf %58 : vector<128x128xf32> to vector<128x128xbf16>
    %c8 = arith.constant 8 : index
    %c0_60 = arith.constant 0 : index
    %c0_61 = arith.constant 0 : index
    %60 = vector.load %arg1[%c8, %c0_60, %c0_61] : memref<9x128x28xbf16, #tpu.memory_space<vmem>>, vector<1x128x28xbf16>
    %61 = vector.shape_cast %60 : vector<1x128x28xbf16> to vector<128x28xbf16>
    %cst_62 = arith.constant dense<0.000000e+00> : vector<128x28xf32>
    %62 = tpu.matmul %59, %61, %cst_62 {dimension_numbers = #tpu.dot_dimension_numbers<[1], [0], [0], [1], [0, 0, 1, 1], [], []>} : vector<128x128xbf16>, vector<128x28xbf16>, vector<128x28xf32> -> vector<128x28xf32>
    %63 = arith.addf %56, %62 : vector<128x28xf32>
    %c0_63 = arith.constant 0 : index
    %c0_64 = arith.constant 0 : index
    %64 = vector.load %arg9[%c0_63, %c0_64] : memref<28x4xf32, #tpu.memory_space<vmem>>, vector<28x4xf32>
    %cst_65 = arith.constant dense<0.000000e+00> : vector<128x4xf32>
    %65 = tpu.matmul %63, %64, %cst_65 {dimension_numbers = #tpu.dot_dimension_numbers<[1], [0], [0], [1], [0, 0, 1, 1], [], []>} : vector<128x28xf32>, vector<28x4xf32>, vector<128x4xf32> -> vector<128x4xf32>
    %cst_66 = arith.constant dense<0.000000e+00> : vector<4xf32>
    %66 = vector.multi_reduction <add>, %65, %cst_66 [0] : vector<128x4xf32> to vector<4xf32>
    %67 = vector.shape_cast %66 : vector<4xf32> to vector<1x4xf32>
    %cst_67 = arith.constant 0.00111607148 : f32
    %68 = vector.broadcast %cst_67 : f32 to vector<1x4xf32>
    %69 = arith.mulf %67, %68 : vector<1x4xf32>
    %70 = arith.mulf %63, %63 : vector<128x28xf32>
    %cst_68 = arith.constant dense<0.000000e+00> : vector<128x4xf32>
    %71 = tpu.matmul %70, %64, %cst_68 {dimension_numbers = #tpu.dot_dimension_numbers<[1], [0], [0], [1], [0, 0, 1, 1], [], []>} : vector<128x28xf32>, vector<28x4xf32>, vector<128x4xf32> -> vector<128x4xf32>
    %cst_69 = arith.constant dense<0.000000e+00> : vector<4xf32>
    %72 = vector.multi_reduction <add>, %71, %cst_69 [0] : vector<128x4xf32> to vector<4xf32>
    %73 = vector.shape_cast %72 : vector<4xf32> to vector<1x4xf32>
    %cst_70 = arith.constant 0.00111607148 : f32
    %74 = vector.broadcast %cst_70 : f32 to vector<1x4xf32>
    %75 = arith.mulf %73, %74 : vector<1x4xf32>
    %76 = arith.mulf %69, %69 : vector<1x4xf32>
    %77 = arith.subf %75, %76 : vector<1x4xf32>
    %c0_71 = arith.constant 0 : index
    %c0_72 = arith.constant 0 : index
    %78 = vector.load %arg5[%c0_71, %c0_72] : memref<1x4xf32, #tpu.memory_space<vmem>>, vector<1x4xf32>
    %cst_73 = arith.constant 9.99999974E-6 : f32
    %79 = vector.broadcast %cst_73 : f32 to vector<1x4xf32>
    %80 = arith.addf %77, %79 : vector<1x4xf32>
    %81 = math.rsqrt %80 : vector<1x4xf32>
    %82 = arith.mulf %78, %81 : vector<1x4xf32>
    %c0_74 = arith.constant 0 : index
    %c0_75 = arith.constant 0 : index
    %83 = vector.load %arg6[%c0_74, %c0_75] : memref<1x4xf32, #tpu.memory_space<vmem>>, vector<1x4xf32>
    %84 = arith.mulf %69, %82 : vector<1x4xf32>
    %85 = arith.subf %83, %84 : vector<1x4xf32>
    %86 = vector.shape_cast %82 : vector<1x4xf32> to vector<1x4xf32>
    %87 = vector.broadcast %86 : vector<1x4xf32> to vector<128x4xf32>
    %c0_76 = arith.constant 0 : index
    %c0_77 = arith.constant 0 : index
    %88 = vector.load %arg10[%c0_76, %c0_77] : memref<4x28xf32, #tpu.memory_space<vmem>>, vector<4x28xf32>
    %cst_78 = arith.constant dense<0.000000e+00> : vector<128x28xf32>
    %89 = tpu.matmul %87, %88, %cst_78 {dimension_numbers = #tpu.dot_dimension_numbers<[1], [0], [0], [1], [0, 0, 1, 1], [], []>} : vector<128x4xf32>, vector<4x28xf32>, vector<128x28xf32> -> vector<128x28xf32>
    %90 = vector.shape_cast %85 : vector<1x4xf32> to vector<1x4xf32>
    %91 = vector.broadcast %90 : vector<1x4xf32> to vector<128x4xf32>
    %c0_79 = arith.constant 0 : index
    %c0_80 = arith.constant 0 : index
    %92 = vector.load %arg10[%c0_79, %c0_80] : memref<4x28xf32, #tpu.memory_space<vmem>>, vector<4x28xf32>
    %cst_81 = arith.constant dense<0.000000e+00> : vector<128x28xf32>
    %93 = tpu.matmul %91, %92, %cst_81 {dimension_numbers = #tpu.dot_dimension_numbers<[1], [0], [0], [1], [0, 0, 1, 1], [], []>} : vector<128x4xf32>, vector<4x28xf32>, vector<128x28xf32> -> vector<128x28xf32>
    %94 = arith.mulf %63, %89 : vector<128x28xf32>
    %95 = arith.addf %94, %93 : vector<128x28xf32>
    %cst_82 = arith.constant 0.000000e+00 : f32
    %96 = vector.broadcast %cst_82 : f32 to vector<128x28xf32>
    %97 = arith.maximumf %95, %96 : vector<128x28xf32>
    %cst_83 = arith.constant 0.000000e+00 : f32
    %98 = vector.broadcast %cst_83 : f32 to vector<2x10x10x28xf32>
    %c0_84 = arith.constant 0 : index
    %c0_85 = arith.constant 0 : index
    %c0_86 = arith.constant 0 : index
    %c0_87 = arith.constant 0 : index
    %99 = vector.load %arg14[%c0_84, %c0_85, %c0_86, %c0_87] : memref<2x10x10x28xf32, #tpu.memory_space<vmem>>, vector<2x10x10x28xf32>
    tpu.vector_store %arg14[%c0_84, %c0_85, %c0_86, %c0_87], %98 {strides = array<i32>} : memref<2x10x10x28xf32, #tpu.memory_space<vmem>>, vector<2x10x10x28xf32>,
    %100 = vector.shape_cast %97 : vector<128x28xf32> to vector<2x8x8x28xf32>
    %c0_88 = arith.constant 0 : index
    %c1_89 = arith.constant 1 : index
    %c1_90 = arith.constant 1 : index
    %c0_91 = arith.constant 0 : index
    %101 = vector.load %arg14[%c0_88, %c1_89, %c1_90, %c0_91] : memref<2x10x10x28xf32, #tpu.memory_space<vmem>>, vector<2x8x8x28xf32>
    tpu.vector_store %arg14[%c0_88, %c1_89, %c1_90, %c0_91], %100 {strides = array<i32>} : memref<2x10x10x28xf32, #tpu.memory_space<vmem>>, vector<2x8x8x28xf32>,
    %cst_92 = arith.constant 0.000000e+00 : f32
    %102 = vector.broadcast %cst_92 : f32 to vector<128x8xf32>
    %c0_93 = arith.constant 0 : index
    %c0_94 = arith.constant 0 : index
    %c0_95 = arith.constant 0 : index
    %c0_96 = arith.constant 0 : index
    %103 = vector.load %arg14[%c0_93, %c0_94, %c0_95, %c0_96] : memref<2x10x10x28xf32, #tpu.memory_space<vmem>>, vector<2x8x8x28xf32>
    %104 = vector.shape_cast %103 : vector<2x8x8x28xf32> to vector<128x28xf32>
    %105 = arith.truncf %104 : vector<128x28xf32> to vector<128x28xbf16>
    %c0_97 = arith.constant 0 : index
    %c0_98 = arith.constant 0 : index
    %c0_99 = arith.constant 0 : index
    %106 = vector.load %arg2[%c0_97, %c0_98, %c0_99] : memref<9x28x8xbf16, #tpu.memory_space<vmem>>, vector<1x28x8xbf16>
    %107 = vector.shape_cast %106 : vector<1x28x8xbf16> to vector<28x8xbf16>
    %cst_100 = arith.constant dense<0.000000e+00> : vector<128x8xf32>
    %108 = tpu.matmul %105, %107, %cst_100 {dimension_numbers = #tpu.dot_dimension_numbers<[1], [0], [0], [1], [0, 0, 1, 1], [], []>} : vector<128x28xbf16>, vector<28x8xbf16>, vector<128x8xf32> -> vector<128x8xf32>
    %109 = arith.addf %102, %108 : vector<128x8xf32>
    %c0_101 = arith.constant 0 : index
    %c0_102 = arith.constant 0 : index
    %c1_103 = arith.constant 1 : index
    %c0_104 = arith.constant 0 : index
    %110 = vector.load %arg14[%c0_101, %c0_102, %c1_103, %c0_104] : memref<2x10x10x28xf32, #tpu.memory_space<vmem>>, vector<2x8x8x28xf32>
    %111 = vector.shape_cast %110 : vector<2x8x8x28xf32> to vector<128x28xf32>
    %112 = arith.truncf %111 : vector<128x28xf32> to vector<128x28xbf16>
    %c1_105 = arith.constant 1 : index
    %c0_106 = arith.constant 0 : index
    %c0_107 = arith.constant 0 : index
    %113 = vector.load %arg2[%c1_105, %c0_106, %c0_107] : memref<9x28x8xbf16, #tpu.memory_space<vmem>>, vector<1x28x8xbf16>
    %114 = vector.shape_cast %113 : vector<1x28x8xbf16> to vector<28x8xbf16>
    %cst_108 = arith.constant dense<0.000000e+00> : vector<128x8xf32>
    %115 = tpu.matmul %112, %114, %cst_108 {dimension_numbers = #tpu.dot_dimension_numbers<[1], [0], [0], [1], [0, 0, 1, 1], [], []>} : vector<128x28xbf16>, vector<28x8xbf16>, vector<128x8xf32> -> vector<128x8xf32>
    %116 = arith.addf %109, %115 : vector<128x8xf32>
    %c0_109 = arith.constant 0 : index
    %c0_110 = arith.constant 0 : index
    %c2_111 = arith.constant 2 : index
    %c0_112 = arith.constant 0 : index
    %117 = vector.load %arg14[%c0_109, %c0_110, %c2_111, %c0_112] : memref<2x10x10x28xf32, #tpu.memory_space<vmem>>, vector<2x8x8x28xf32>
    %118 = vector.shape_cast %117 : vector<2x8x8x28xf32> to vector<128x28xf32>
    %119 = arith.truncf %118 : vector<128x28xf32> to vector<128x28xbf16>
    %c2_113 = arith.constant 2 : index
    %c0_114 = arith.constant 0 : index
    %c0_115 = arith.constant 0 : index
    %120 = vector.load %arg2[%c2_113, %c0_114, %c0_115] : memref<9x28x8xbf16, #tpu.memory_space<vmem>>, vector<1x28x8xbf16>
    %121 = vector.shape_cast %120 : vector<1x28x8xbf16> to vector<28x8xbf16>
    %cst_116 = arith.constant dense<0.000000e+00> : vector<128x8xf32>
    %122 = tpu.matmul %119, %121, %cst_116 {dimension_numbers = #tpu.dot_dimension_numbers<[1], [0], [0], [1], [0, 0, 1, 1], [], []>} : vector<128x28xbf16>, vector<28x8xbf16>, vector<128x8xf32> -> vector<128x8xf32>
    %123 = arith.addf %116, %122 : vector<128x8xf32>
    %c0_117 = arith.constant 0 : index
    %c1_118 = arith.constant 1 : index
    %c0_119 = arith.constant 0 : index
    %c0_120 = arith.constant 0 : index
    %124 = vector.load %arg14[%c0_117, %c1_118, %c0_119, %c0_120] : memref<2x10x10x28xf32, #tpu.memory_space<vmem>>, vector<2x8x8x28xf32>
    %125 = vector.shape_cast %124 : vector<2x8x8x28xf32> to vector<128x28xf32>
    %126 = arith.truncf %125 : vector<128x28xf32> to vector<128x28xbf16>
    %c3_121 = arith.constant 3 : index
    %c0_122 = arith.constant 0 : index
    %c0_123 = arith.constant 0 : index
    %127 = vector.load %arg2[%c3_121, %c0_122, %c0_123] : memref<9x28x8xbf16, #tpu.memory_space<vmem>>, vector<1x28x8xbf16>
    %128 = vector.shape_cast %127 : vector<1x28x8xbf16> to vector<28x8xbf16>
    %cst_124 = arith.constant dense<0.000000e+00> : vector<128x8xf32>
    %129 = tpu.matmul %126, %128, %cst_124 {dimension_numbers = #tpu.dot_dimension_numbers<[1], [0], [0], [1], [0, 0, 1, 1], [], []>} : vector<128x28xbf16>, vector<28x8xbf16>, vector<128x8xf32> -> vector<128x8xf32>
    %130 = arith.addf %123, %129 : vector<128x8xf32>
    %c0_125 = arith.constant 0 : index
    %c1_126 = arith.constant 1 : index
    %c1_127 = arith.constant 1 : index
    %c0_128 = arith.constant 0 : index
    %131 = vector.load %arg14[%c0_125, %c1_126, %c1_127, %c0_128] : memref<2x10x10x28xf32, #tpu.memory_space<vmem>>, vector<2x8x8x28xf32>
    %132 = vector.shape_cast %131 : vector<2x8x8x28xf32> to vector<128x28xf32>
    %133 = arith.truncf %132 : vector<128x28xf32> to vector<128x28xbf16>
    %c4_129 = arith.constant 4 : index
    %c0_130 = arith.constant 0 : index
    %c0_131 = arith.constant 0 : index
    %134 = vector.load %arg2[%c4_129, %c0_130, %c0_131] : memref<9x28x8xbf16, #tpu.memory_space<vmem>>, vector<1x28x8xbf16>
    %135 = vector.shape_cast %134 : vector<1x28x8xbf16> to vector<28x8xbf16>
    %cst_132 = arith.constant dense<0.000000e+00> : vector<128x8xf32>
    %136 = tpu.matmul %133, %135, %cst_132 {dimension_numbers = #tpu.dot_dimension_numbers<[1], [0], [0], [1], [0, 0, 1, 1], [], []>} : vector<128x28xbf16>, vector<28x8xbf16>, vector<128x8xf32> -> vector<128x8xf32>
    %137 = arith.addf %130, %136 : vector<128x8xf32>
    %c0_133 = arith.constant 0 : index
    %c1_134 = arith.constant 1 : index
    %c2_135 = arith.constant 2 : index
    %c0_136 = arith.constant 0 : index
    %138 = vector.load %arg14[%c0_133, %c1_134, %c2_135, %c0_136] : memref<2x10x10x28xf32, #tpu.memory_space<vmem>>, vector<2x8x8x28xf32>
    %139 = vector.shape_cast %138 : vector<2x8x8x28xf32> to vector<128x28xf32>
    %140 = arith.truncf %139 : vector<128x28xf32> to vector<128x28xbf16>
    %c5_137 = arith.constant 5 : index
    %c0_138 = arith.constant 0 : index
    %c0_139 = arith.constant 0 : index
    %141 = vector.load %arg2[%c5_137, %c0_138, %c0_139] : memref<9x28x8xbf16, #tpu.memory_space<vmem>>, vector<1x28x8xbf16>
    %142 = vector.shape_cast %141 : vector<1x28x8xbf16> to vector<28x8xbf16>
    %cst_140 = arith.constant dense<0.000000e+00> : vector<128x8xf32>
    %143 = tpu.matmul %140, %142, %cst_140 {dimension_numbers = #tpu.dot_dimension_numbers<[1], [0], [0], [1], [0, 0, 1, 1], [], []>} : vector<128x28xbf16>, vector<28x8xbf16>, vector<128x8xf32> -> vector<128x8xf32>
    %144 = arith.addf %137, %143 : vector<128x8xf32>
    %c0_141 = arith.constant 0 : index
    %c2_142 = arith.constant 2 : index
    %c0_143 = arith.constant 0 : index
    %c0_144 = arith.constant 0 : index
    %145 = vector.load %arg14[%c0_141, %c2_142, %c0_143, %c0_144] : memref<2x10x10x28xf32, #tpu.memory_space<vmem>>, vector<2x8x8x28xf32>
    %146 = vector.shape_cast %145 : vector<2x8x8x28xf32> to vector<128x28xf32>
    %147 = arith.truncf %146 : vector<128x28xf32> to vector<128x28xbf16>
    %c6_145 = arith.constant 6 : index
    %c0_146 = arith.constant 0 : index
    %c0_147 = arith.constant 0 : index
    %148 = vector.load %arg2[%c6_145, %c0_146, %c0_147] : memref<9x28x8xbf16, #tpu.memory_space<vmem>>, vector<1x28x8xbf16>
    %149 = vector.shape_cast %148 : vector<1x28x8xbf16> to vector<28x8xbf16>
    %cst_148 = arith.constant dense<0.000000e+00> : vector<128x8xf32>
    %150 = tpu.matmul %147, %149, %cst_148 {dimension_numbers = #tpu.dot_dimension_numbers<[1], [0], [0], [1], [0, 0, 1, 1], [], []>} : vector<128x28xbf16>, vector<28x8xbf16>, vector<128x8xf32> -> vector<128x8xf32>
    %151 = arith.addf %144, %150 : vector<128x8xf32>
    %c0_149 = arith.constant 0 : index
    %c2_150 = arith.constant 2 : index
    %c1_151 = arith.constant 1 : index
    %c0_152 = arith.constant 0 : index
    %152 = vector.load %arg14[%c0_149, %c2_150, %c1_151, %c0_152] : memref<2x10x10x28xf32, #tpu.memory_space<vmem>>, vector<2x8x8x28xf32>
    %153 = vector.shape_cast %152 : vector<2x8x8x28xf32> to vector<128x28xf32>
    %154 = arith.truncf %153 : vector<128x28xf32> to vector<128x28xbf16>
    %c7_153 = arith.constant 7 : index
    %c0_154 = arith.constant 0 : index
    %c0_155 = arith.constant 0 : index
    %155 = vector.load %arg2[%c7_153, %c0_154, %c0_155] : memref<9x28x8xbf16, #tpu.memory_space<vmem>>, vector<1x28x8xbf16>
    %156 = vector.shape_cast %155 : vector<1x28x8xbf16> to vector<28x8xbf16>
    %cst_156 = arith.constant dense<0.000000e+00> : vector<128x8xf32>
    %157 = tpu.matmul %154, %156, %cst_156 {dimension_numbers = #tpu.dot_dimension_numbers<[1], [0], [0], [1], [0, 0, 1, 1], [], []>} : vector<128x28xbf16>, vector<28x8xbf16>, vector<128x8xf32> -> vector<128x8xf32>
    %158 = arith.addf %151, %157 : vector<128x8xf32>
    %c0_157 = arith.constant 0 : index
    %c2_158 = arith.constant 2 : index
    %c2_159 = arith.constant 2 : index
    %c0_160 = arith.constant 0 : index
    %159 = vector.load %arg14[%c0_157, %c2_158, %c2_159, %c0_160] : memref<2x10x10x28xf32, #tpu.memory_space<vmem>>, vector<2x8x8x28xf32>
    %160 = vector.shape_cast %159 : vector<2x8x8x28xf32> to vector<128x28xf32>
    %161 = arith.truncf %160 : vector<128x28xf32> to vector<128x28xbf16>
    %c8_161 = arith.constant 8 : index
    %c0_162 = arith.constant 0 : index
    %c0_163 = arith.constant 0 : index
    %162 = vector.load %arg2[%c8_161, %c0_162, %c0_163] : memref<9x28x8xbf16, #tpu.memory_space<vmem>>, vector<1x28x8xbf16>
    %163 = vector.shape_cast %162 : vector<1x28x8xbf16> to vector<28x8xbf16>
    %cst_164 = arith.constant dense<0.000000e+00> : vector<128x8xf32>
    %164 = tpu.matmul %161, %163, %cst_164 {dimension_numbers = #tpu.dot_dimension_numbers<[1], [0], [0], [1], [0, 0, 1, 1], [], []>} : vector<128x28xbf16>, vector<28x8xbf16>, vector<128x8xf32> -> vector<128x8xf32>
    %165 = arith.addf %158, %164 : vector<128x8xf32>
    %c0_165 = arith.constant 0 : index
    %c0_166 = arith.constant 0 : index
    %166 = vector.load %arg11[%c0_165, %c0_166] : memref<8x4xf32, #tpu.memory_space<vmem>>, vector<8x4xf32>
    %cst_167 = arith.constant dense<0.000000e+00> : vector<128x4xf32>
    %167 = tpu.matmul %165, %166, %cst_167 {dimension_numbers = #tpu.dot_dimension_numbers<[1], [0], [0], [1], [0, 0, 1, 1], [], []>} : vector<128x8xf32>, vector<8x4xf32>, vector<128x4xf32> -> vector<128x4xf32>
    %cst_168 = arith.constant dense<0.000000e+00> : vector<4xf32>
    %168 = vector.multi_reduction <add>, %167, %cst_168 [0] : vector<128x4xf32> to vector<4xf32>
    %169 = vector.shape_cast %168 : vector<4xf32> to vector<1x4xf32>
    %cst_169 = arith.constant 3.906250e-03 : f32
    %170 = vector.broadcast %cst_169 : f32 to vector<1x4xf32>
    %171 = arith.mulf %169, %170 : vector<1x4xf32>
    %172 = arith.mulf %165, %165 : vector<128x8xf32>
    %cst_170 = arith.constant dense<0.000000e+00> : vector<128x4xf32>
    %173 = tpu.matmul %172, %166, %cst_170 {dimension_numbers = #tpu.dot_dimension_numbers<[1], [0], [0], [1], [0, 0, 1, 1], [], []>} : vector<128x8xf32>, vector<8x4xf32>, vector<128x4xf32> -> vector<128x4xf32>
    %cst_171 = arith.constant dense<0.000000e+00> : vector<4xf32>
    %174 = vector.multi_reduction <add>, %173, %cst_171 [0] : vector<128x4xf32> to vector<4xf32>
    %175 = vector.shape_cast %174 : vector<4xf32> to vector<1x4xf32>
    %cst_172 = arith.constant 3.906250e-03 : f32
    %176 = vector.broadcast %cst_172 : f32 to vector<1x4xf32>
    %177 = arith.mulf %175, %176 : vector<1x4xf32>
    %178 = arith.mulf %171, %171 : vector<1x4xf32>
    %179 = arith.subf %177, %178 : vector<1x4xf32>
    %c0_173 = arith.constant 0 : index
    %c0_174 = arith.constant 0 : index
    %180 = vector.load %arg7[%c0_173, %c0_174] : memref<1x4xf32, #tpu.memory_space<vmem>>, vector<1x4xf32>
    %cst_175 = arith.constant 9.99999974E-6 : f32
    %181 = vector.broadcast %cst_175 : f32 to vector<1x4xf32>
    %182 = arith.addf %179, %181 : vector<1x4xf32>
    %183 = math.rsqrt %182 : vector<1x4xf32>
    %184 = arith.mulf %180, %183 : vector<1x4xf32>
    %c0_176 = arith.constant 0 : index
    %c0_177 = arith.constant 0 : index
    %185 = vector.load %arg8[%c0_176, %c0_177] : memref<1x4xf32, #tpu.memory_space<vmem>>, vector<1x4xf32>
    %186 = arith.mulf %171, %184 : vector<1x4xf32>
    %187 = arith.subf %185, %186 : vector<1x4xf32>
    %188 = vector.shape_cast %184 : vector<1x4xf32> to vector<1x4xf32>
    %189 = vector.broadcast %188 : vector<1x4xf32> to vector<128x4xf32>
    %c0_178 = arith.constant 0 : index
    %c0_179 = arith.constant 0 : index
    %190 = vector.load %arg12[%c0_178, %c0_179] : memref<4x8xf32, #tpu.memory_space<vmem>>, vector<4x8xf32>
    %cst_180 = arith.constant dense<0.000000e+00> : vector<128x8xf32>
    %191 = tpu.matmul %189, %190, %cst_180 {dimension_numbers = #tpu.dot_dimension_numbers<[1], [0], [0], [1], [0, 0, 1, 1], [], []>} : vector<128x4xf32>, vector<4x8xf32>, vector<128x8xf32> -> vector<128x8xf32>
    %192 = vector.shape_cast %187 : vector<1x4xf32> to vector<1x4xf32>
    %193 = vector.broadcast %192 : vector<1x4xf32> to vector<128x4xf32>
    %c0_181 = arith.constant 0 : index
    %c0_182 = arith.constant 0 : index
    %194 = vector.load %arg12[%c0_181, %c0_182] : memref<4x8xf32, #tpu.memory_space<vmem>>, vector<4x8xf32>
    %cst_183 = arith.constant dense<0.000000e+00> : vector<128x8xf32>
    %195 = tpu.matmul %193, %194, %cst_183 {dimension_numbers = #tpu.dot_dimension_numbers<[1], [0], [0], [1], [0, 0, 1, 1], [], []>} : vector<128x4xf32>, vector<4x8xf32>, vector<128x8xf32> -> vector<128x8xf32>
    %196 = arith.mulf %165, %191 : vector<128x8xf32>
    %197 = arith.addf %196, %195 : vector<128x8xf32>
    %cst_184 = arith.constant 0.000000e+00 : f32
    %198 = vector.broadcast %cst_184 : f32 to vector<128x8xf32>
    %199 = arith.maximumf %197, %198 : vector<128x8xf32>
    %cst_185 = arith.constant 0.000000e+00 : f32
    %200 = vector.broadcast %cst_185 : f32 to vector<2x10x10x8xf32>
    %c0_186 = arith.constant 0 : index
    %c0_187 = arith.constant 0 : index
    %c0_188 = arith.constant 0 : index
    %c0_189 = arith.constant 0 : index
    %201 = vector.load %arg15[%c0_186, %c0_187, %c0_188, %c0_189] : memref<2x10x10x8xf32, #tpu.memory_space<vmem>>, vector<2x10x10x8xf32>
    tpu.vector_store %arg15[%c0_186, %c0_187, %c0_188, %c0_189], %200 {strides = array<i32>} : memref<2x10x10x8xf32, #tpu.memory_space<vmem>>, vector<2x10x10x8xf32>,
    %202 = vector.shape_cast %199 : vector<128x8xf32> to vector<2x8x8x8xf32>
    %c0_190 = arith.constant 0 : index
    %c1_191 = arith.constant 1 : index
    %c1_192 = arith.constant 1 : index
    %c0_193 = arith.constant 0 : index
    %203 = vector.load %arg15[%c0_190, %c1_191, %c1_192, %c0_193] : memref<2x10x10x8xf32, #tpu.memory_space<vmem>>, vector<2x8x8x8xf32>
    tpu.vector_store %arg15[%c0_190, %c1_191, %c1_192, %c0_193], %202 {strides = array<i32>} : memref<2x10x10x8xf32, #tpu.memory_space<vmem>>, vector<2x8x8x8xf32>,
    %cst_194 = arith.constant 0.000000e+00 : f32
    %204 = vector.broadcast %cst_194 : f32 to vector<128x4xf32>
    %c0_195 = arith.constant 0 : index
    %c0_196 = arith.constant 0 : index
    %c0_197 = arith.constant 0 : index
    %c0_198 = arith.constant 0 : index
    %205 = vector.load %arg15[%c0_195, %c0_196, %c0_197, %c0_198] : memref<2x10x10x8xf32, #tpu.memory_space<vmem>>, vector<2x8x8x8xf32>
    %206 = vector.shape_cast %205 : vector<2x8x8x8xf32> to vector<128x8xf32>
    %207 = arith.truncf %206 : vector<128x8xf32> to vector<128x8xbf16>
    %c0_199 = arith.constant 0 : index
    %c0_200 = arith.constant 0 : index
    %c0_201 = arith.constant 0 : index
    %208 = vector.load %arg3[%c0_199, %c0_200, %c0_201] : memref<9x8x4xbf16, #tpu.memory_space<vmem>>, vector<1x8x4xbf16>
    %209 = vector.shape_cast %208 : vector<1x8x4xbf16> to vector<8x4xbf16>
    %cst_202 = arith.constant dense<0.000000e+00> : vector<128x4xf32>
    %210 = tpu.matmul %207, %209, %cst_202 {dimension_numbers = #tpu.dot_dimension_numbers<[1], [0], [0], [1], [0, 0, 1, 1], [], []>} : vector<128x8xbf16>, vector<8x4xbf16>, vector<128x4xf32> -> vector<128x4xf32>
    %211 = arith.addf %204, %210 : vector<128x4xf32>
    %c0_203 = arith.constant 0 : index
    %c0_204 = arith.constant 0 : index
    %c1_205 = arith.constant 1 : index
    %c0_206 = arith.constant 0 : index
    %212 = vector.load %arg15[%c0_203, %c0_204, %c1_205, %c0_206] : memref<2x10x10x8xf32, #tpu.memory_space<vmem>>, vector<2x8x8x8xf32>
    %213 = vector.shape_cast %212 : vector<2x8x8x8xf32> to vector<128x8xf32>
    %214 = arith.truncf %213 : vector<128x8xf32> to vector<128x8xbf16>
    %c1_207 = arith.constant 1 : index
    %c0_208 = arith.constant 0 : index
    %c0_209 = arith.constant 0 : index
    %215 = vector.load %arg3[%c1_207, %c0_208, %c0_209] : memref<9x8x4xbf16, #tpu.memory_space<vmem>>, vector<1x8x4xbf16>
    %216 = vector.shape_cast %215 : vector<1x8x4xbf16> to vector<8x4xbf16>
    %cst_210 = arith.constant dense<0.000000e+00> : vector<128x4xf32>
    %217 = tpu.matmul %214, %216, %cst_210 {dimension_numbers = #tpu.dot_dimension_numbers<[1], [0], [0], [1], [0, 0, 1, 1], [], []>} : vector<128x8xbf16>, vector<8x4xbf16>, vector<128x4xf32> -> vector<128x4xf32>
    %218 = arith.addf %211, %217 : vector<128x4xf32>
    %c0_211 = arith.constant 0 : index
    %c0_212 = arith.constant 0 : index
    %c2_213 = arith.constant 2 : index
    %c0_214 = arith.constant 0 : index
    %219 = vector.load %arg15[%c0_211, %c0_212, %c2_213, %c0_214] : memref<2x10x10x8xf32, #tpu.memory_space<vmem>>, vector<2x8x8x8xf32>
    %220 = vector.shape_cast %219 : vector<2x8x8x8xf32> to vector<128x8xf32>
    %221 = arith.truncf %220 : vector<128x8xf32> to vector<128x8xbf16>
    %c2_215 = arith.constant 2 : index
    %c0_216 = arith.constant 0 : index
    %c0_217 = arith.constant 0 : index
    %222 = vector.load %arg3[%c2_215, %c0_216, %c0_217] : memref<9x8x4xbf16, #tpu.memory_space<vmem>>, vector<1x8x4xbf16>
    %223 = vector.shape_cast %222 : vector<1x8x4xbf16> to vector<8x4xbf16>
    %cst_218 = arith.constant dense<0.000000e+00> : vector<128x4xf32>
    %224 = tpu.matmul %221, %223, %cst_218 {dimension_numbers = #tpu.dot_dimension_numbers<[1], [0], [0], [1], [0, 0, 1, 1], [], []>} : vector<128x8xbf16>, vector<8x4xbf16>, vector<128x4xf32> -> vector<128x4xf32>
    %225 = arith.addf %218, %224 : vector<128x4xf32>
    %c0_219 = arith.constant 0 : index
    %c1_220 = arith.constant 1 : index
    %c0_221 = arith.constant 0 : index
    %c0_222 = arith.constant 0 : index
    %226 = vector.load %arg15[%c0_219, %c1_220, %c0_221, %c0_222] : memref<2x10x10x8xf32, #tpu.memory_space<vmem>>, vector<2x8x8x8xf32>
    %227 = vector.shape_cast %226 : vector<2x8x8x8xf32> to vector<128x8xf32>
    %228 = arith.truncf %227 : vector<128x8xf32> to vector<128x8xbf16>
    %c3_223 = arith.constant 3 : index
    %c0_224 = arith.constant 0 : index
    %c0_225 = arith.constant 0 : index
    %229 = vector.load %arg3[%c3_223, %c0_224, %c0_225] : memref<9x8x4xbf16, #tpu.memory_space<vmem>>, vector<1x8x4xbf16>
    %230 = vector.shape_cast %229 : vector<1x8x4xbf16> to vector<8x4xbf16>
    %cst_226 = arith.constant dense<0.000000e+00> : vector<128x4xf32>
    %231 = tpu.matmul %228, %230, %cst_226 {dimension_numbers = #tpu.dot_dimension_numbers<[1], [0], [0], [1], [0, 0, 1, 1], [], []>} : vector<128x8xbf16>, vector<8x4xbf16>, vector<128x4xf32> -> vector<128x4xf32>
    %232 = arith.addf %225, %231 : vector<128x4xf32>
    %c0_227 = arith.constant 0 : index
    %c1_228 = arith.constant 1 : index
    %c1_229 = arith.constant 1 : index
    %c0_230 = arith.constant 0 : index
    %233 = vector.load %arg15[%c0_227, %c1_228, %c1_229, %c0_230] : memref<2x10x10x8xf32, #tpu.memory_space<vmem>>, vector<2x8x8x8xf32>
    %234 = vector.shape_cast %233 : vector<2x8x8x8xf32> to vector<128x8xf32>
    %235 = arith.truncf %234 : vector<128x8xf32> to vector<128x8xbf16>
    %c4_231 = arith.constant 4 : index
    %c0_232 = arith.constant 0 : index
    %c0_233 = arith.constant 0 : index
    %236 = vector.load %arg3[%c4_231, %c0_232, %c0_233] : memref<9x8x4xbf16, #tpu.memory_space<vmem>>, vector<1x8x4xbf16>
    %237 = vector.shape_cast %236 : vector<1x8x4xbf16> to vector<8x4xbf16>
    %cst_234 = arith.constant dense<0.000000e+00> : vector<128x4xf32>
    %238 = tpu.matmul %235, %237, %cst_234 {dimension_numbers = #tpu.dot_dimension_numbers<[1], [0], [0], [1], [0, 0, 1, 1], [], []>} : vector<128x8xbf16>, vector<8x4xbf16>, vector<128x4xf32> -> vector<128x4xf32>
    %239 = arith.addf %232, %238 : vector<128x4xf32>
    %c0_235 = arith.constant 0 : index
    %c1_236 = arith.constant 1 : index
    %c2_237 = arith.constant 2 : index
    %c0_238 = arith.constant 0 : index
    %240 = vector.load %arg15[%c0_235, %c1_236, %c2_237, %c0_238] : memref<2x10x10x8xf32, #tpu.memory_space<vmem>>, vector<2x8x8x8xf32>
    %241 = vector.shape_cast %240 : vector<2x8x8x8xf32> to vector<128x8xf32>
    %242 = arith.truncf %241 : vector<128x8xf32> to vector<128x8xbf16>
    %c5_239 = arith.constant 5 : index
    %c0_240 = arith.constant 0 : index
    %c0_241 = arith.constant 0 : index
    %243 = vector.load %arg3[%c5_239, %c0_240, %c0_241] : memref<9x8x4xbf16, #tpu.memory_space<vmem>>, vector<1x8x4xbf16>
    %244 = vector.shape_cast %243 : vector<1x8x4xbf16> to vector<8x4xbf16>
    %cst_242 = arith.constant dense<0.000000e+00> : vector<128x4xf32>
    %245 = tpu.matmul %242, %244, %cst_242 {dimension_numbers = #tpu.dot_dimension_numbers<[1], [0], [0], [1], [0, 0, 1, 1], [], []>} : vector<128x8xbf16>, vector<8x4xbf16>, vector<128x4xf32> -> vector<128x4xf32>
    %246 = arith.addf %239, %245 : vector<128x4xf32>
    %c0_243 = arith.constant 0 : index
    %c2_244 = arith.constant 2 : index
    %c0_245 = arith.constant 0 : index
    %c0_246 = arith.constant 0 : index
    %247 = vector.load %arg15[%c0_243, %c2_244, %c0_245, %c0_246] : memref<2x10x10x8xf32, #tpu.memory_space<vmem>>, vector<2x8x8x8xf32>
    %248 = vector.shape_cast %247 : vector<2x8x8x8xf32> to vector<128x8xf32>
    %249 = arith.truncf %248 : vector<128x8xf32> to vector<128x8xbf16>
    %c6_247 = arith.constant 6 : index
    %c0_248 = arith.constant 0 : index
    %c0_249 = arith.constant 0 : index
    %250 = vector.load %arg3[%c6_247, %c0_248, %c0_249] : memref<9x8x4xbf16, #tpu.memory_space<vmem>>, vector<1x8x4xbf16>
    %251 = vector.shape_cast %250 : vector<1x8x4xbf16> to vector<8x4xbf16>
    %cst_250 = arith.constant dense<0.000000e+00> : vector<128x4xf32>
    %252 = tpu.matmul %249, %251, %cst_250 {dimension_numbers = #tpu.dot_dimension_numbers<[1], [0], [0], [1], [0, 0, 1, 1], [], []>} : vector<128x8xbf16>, vector<8x4xbf16>, vector<128x4xf32> -> vector<128x4xf32>
    %253 = arith.addf %246, %252 : vector<128x4xf32>
    %c0_251 = arith.constant 0 : index
    %c2_252 = arith.constant 2 : index
    %c1_253 = arith.constant 1 : index
    %c0_254 = arith.constant 0 : index
    %254 = vector.load %arg15[%c0_251, %c2_252, %c1_253, %c0_254] : memref<2x10x10x8xf32, #tpu.memory_space<vmem>>, vector<2x8x8x8xf32>
    %255 = vector.shape_cast %254 : vector<2x8x8x8xf32> to vector<128x8xf32>
    %256 = arith.truncf %255 : vector<128x8xf32> to vector<128x8xbf16>
    %c7_255 = arith.constant 7 : index
    %c0_256 = arith.constant 0 : index
    %c0_257 = arith.constant 0 : index
    %257 = vector.load %arg3[%c7_255, %c0_256, %c0_257] : memref<9x8x4xbf16, #tpu.memory_space<vmem>>, vector<1x8x4xbf16>
    %258 = vector.shape_cast %257 : vector<1x8x4xbf16> to vector<8x4xbf16>
    %cst_258 = arith.constant dense<0.000000e+00> : vector<128x4xf32>
    %259 = tpu.matmul %256, %258, %cst_258 {dimension_numbers = #tpu.dot_dimension_numbers<[1], [0], [0], [1], [0, 0, 1, 1], [], []>} : vector<128x8xbf16>, vector<8x4xbf16>, vector<128x4xf32> -> vector<128x4xf32>
    %260 = arith.addf %253, %259 : vector<128x4xf32>
    %c0_259 = arith.constant 0 : index
    %c2_260 = arith.constant 2 : index
    %c2_261 = arith.constant 2 : index
    %c0_262 = arith.constant 0 : index
    %261 = vector.load %arg15[%c0_259, %c2_260, %c2_261, %c0_262] : memref<2x10x10x8xf32, #tpu.memory_space<vmem>>, vector<2x8x8x8xf32>
    %262 = vector.shape_cast %261 : vector<2x8x8x8xf32> to vector<128x8xf32>
    %263 = arith.truncf %262 : vector<128x8xf32> to vector<128x8xbf16>
    %c8_263 = arith.constant 8 : index
    %c0_264 = arith.constant 0 : index
    %c0_265 = arith.constant 0 : index
    %264 = vector.load %arg3[%c8_263, %c0_264, %c0_265] : memref<9x8x4xbf16, #tpu.memory_space<vmem>>, vector<1x8x4xbf16>
    %265 = vector.shape_cast %264 : vector<1x8x4xbf16> to vector<8x4xbf16>
    %cst_266 = arith.constant dense<0.000000e+00> : vector<128x4xf32>
    %266 = tpu.matmul %263, %265, %cst_266 {dimension_numbers = #tpu.dot_dimension_numbers<[1], [0], [0], [1], [0, 0, 1, 1], [], []>} : vector<128x8xbf16>, vector<8x4xbf16>, vector<128x4xf32> -> vector<128x4xf32>
    %267 = arith.addf %260, %266 : vector<128x4xf32>
    %c0_267 = arith.constant 0 : index
    %c0_268 = arith.constant 0 : index
    %268 = vector.load %arg4[%c0_267, %c0_268] : memref<1x4xf32, #tpu.memory_space<vmem>>, vector<1x4xf32>
    %269 = vector.broadcast %268 : vector<1x4xf32> to vector<128x4xf32>
    %270 = arith.addf %267, %269 : vector<128x4xf32>
    %271 = math.absf %270 : vector<128x4xf32>
    %c0_269 = arith.constant 0 : index
    %c0_270 = arith.constant 0 : index
    %272 = vector.load %arg13[%c0_269, %c0_270] : memref<128x4xf32, #tpu.memory_space<vmem>>, vector<128x4xf32>
    tpu.vector_store %arg13[%c0_269, %c0_270], %271 {strides = array<i32>} : memref<128x4xf32, #tpu.memory_space<vmem>>, vector<128x4xf32>,
    return
  }
}

</mosaic_0001>

<llo_original>
// kernel: _lambda_.1
$region0: #{_lambda_.1}
  #allocation0 [shape = 'u32[]', space=smem, size = 0x4, offset = 0x4, fixed_abs, tag = 'smem constant byte address 0x4 - core index']
  #allocation1 [shape = 'u32[72,128]{1,0:T(1,128)}', space=vmem, size = 0x9000, scoped, tag = 'internal scratch']
  #allocation2 [shape = 'f32[2,10,10,28]{3,2,1,0:T(8,128)}', space=vmem, size = 0x28000, scoped, tag = 'scratch operand']
  #allocation3 [shape = 'f32[2,10,10,8]{3,2,1,0:T(8,128)}', space=vmem, size = 0x28000, scoped, tag = 'scratch operand']
  %s0 = inlined_call_operand.vmem [shape: f32[2,10,10,128], index: 0, kind: input, shape index: {}]
  %s1 = inlined_call_operand.vmem [shape: bf16[9,128,28], index: 1, kind: input, shape index: {}]
  %s2 = inlined_call_operand.vmem [shape: bf16[9,28,8], index: 2, kind: input, shape index: {}]
  %s3 = inlined_call_operand.vmem [shape: bf16[9,8,4], index: 3, kind: input, shape index: {}]
  %s4 = inlined_call_operand.vmem [shape: f32[1,4], index: 4, kind: input, shape index: {}]
  %s5 = inlined_call_operand.vmem [shape: f32[1,4], index: 5, kind: input, shape index: {}, may-alias: {5,7}]
  %s6 = inlined_call_operand.vmem [shape: f32[1,4], index: 6, kind: input, shape index: {}, may-alias: {6,8}]
  %s7 = inlined_call_operand.vmem [shape: f32[1,4], index: 7, kind: input, shape index: {}, may-alias: {5,7}]
  %s8 = inlined_call_operand.vmem [shape: f32[1,4], index: 8, kind: input, shape index: {}, may-alias: {6,8}]
  %s9 = inlined_call_operand.vmem [shape: f32[28,4], index: 9, kind: input, shape index: {}]
  %s10 = inlined_call_operand.vmem [shape: f32[4,28], index: 10, kind: input, shape index: {}]
  %s11 = inlined_call_operand.vmem [shape: f32[8,4], index: 11, kind: input, shape index: {}]
  %s12 = inlined_call_operand.vmem [shape: f32[4,8], index: 12, kind: input, shape index: {}]
  %s13 = inlined_call_operand.vmem [shape: f32[128,4], index: 13, kind: output, shape index: {}]
  %s14 = sld [smem:[#allocation0]]
  $region62: #{_lambda_.1} parent=0
    _
  %s16 = ssub.s32 1, %s14
  %s17 = scalar_select 0, %s16, %s14
  // Predicated region
  $region2: #{_lambda_.1} parent=0 // pred_check
    _
  $region3: #{_lambda_.1} parent=0 // pred_check_branch
    %19 = sbr.rel (0) target = $region5
  $region4: #{_lambda_.1} parent=0 // pred_region
    _
  $region5: #{_lambda_.1} parent=0 // pred_fallthru
    _
  // Predicated region
  $region6: #{_lambda_.1} parent=0 // pred_check
    _
  $region7: #{_lambda_.1} parent=0 // pred_check_branch
    %21 = sbr.rel (0) target = $region9
  $region8: #{_lambda_.1} parent=0 // pred_region
    _
  $region9: #{_lambda_.1} parent=0 // pred_fallthru
    _
  // Predicated region
  $region10: #{_lambda_.1} parent=0 // pred_check
    _
  $region11: #{_lambda_.1} parent=0 // pred_check_branch
    %23 = sbr.rel (0) target = $region13
  $region12: #{_lambda_.1} parent=0 // pred_region
    _
  $region13: #{_lambda_.1} parent=0 // pred_fallthru
    _
  // Predicated region
  $region14: #{_lambda_.1} parent=0 // pred_check
    _
  $region15: #{_lambda_.1} parent=0 // pred_check_branch
    %25 = sbr.rel (0) target = $region17
  $region16: #{_lambda_.1} parent=0 // pred_region
    _
  $region17: #{_lambda_.1} parent=0 // pred_fallthru
    _
  // Predicated region
  $region18: #{_lambda_.1} parent=0 // pred_check
    _
  $region19: #{_lambda_.1} parent=0 // pred_check_branch
    %27 = sbr.rel (0) target = $region21
  $region20: #{_lambda_.1} parent=0 // pred_region
    _
  $region21: #{_lambda_.1} parent=0 // pred_fallthru
    _
  // Predicated region
  $region22: #{_lambda_.1} parent=0 // pred_check
    _
  $region23: #{_lambda_.1} parent=0 // pred_check_branch
    %29 = sbr.rel (0) target = $region25
  $region24: #{_lambda_.1} parent=0 // pred_region
    _
  $region25: #{_lambda_.1} parent=0 // pred_fallthru
    _
  // Predicated region
  $region26: #{_lambda_.1} parent=0 // pred_check
    _
  $region27: #{_lambda_.1} parent=0 // pred_check_branch
    %31 = sbr.rel (0) target = $region29
  $region28: #{_lambda_.1} parent=0 // pred_region
    _
  $region29: #{_lambda_.1} parent=0 // pred_fallthru
    _
  // Predicated region
  $region30: #{_lambda_.1} parent=0 // pred_check
    _
  $region31: #{_lambda_.1} parent=0 // pred_check_branch
    %33 = sbr.rel (0) target = $region33
  $region32: #{_lambda_.1} parent=0 // pred_region
    _
  $region33: #{_lambda_.1} parent=0 // pred_fallthru
    _
  // Predicated region
  $region34: #{_lambda_.1} parent=0 // pred_check
    _
  $region35: #{_lambda_.1} parent=0 // pred_check_branch
    %35 = sbr.rel (0) target = $region37
  $region36: #{_lambda_.1} parent=0 // pred_region
    _
  $region37: #{_lambda_.1} parent=0 // pred_fallthru
    _
  // Predicated region
  $region38: #{_lambda_.1} parent=0 // pred_check
    _
  $region39: #{_lambda_.1} parent=0 // pred_check_branch
    %37 = sbr.rel (0) target = $region41
  $region40: #{_lambda_.1} parent=0 // pred_region
    _
  $region41: #{_lambda_.1} parent=0 // pred_fallthru
    _
  // Predicated region
  $region42: #{_lambda_.1} parent=0 // pred_check
    _
  $region43: #{_lambda_.1} parent=0 // pred_check_branch
    %39 = sbr.rel (0) target = $region45
  $region44: #{_lambda_.1} parent=0 // pred_region
    _
  $region45: #{_lambda_.1} parent=0 // pred_fallthru
    _
  // Predicated region
  $region46: #{_lambda_.1} parent=0 // pred_check
    _
  $region47: #{_lambda_.1} parent=0 // pred_check_branch
    %41 = sbr.rel (0) target = $region49
  $region48: #{_lambda_.1} parent=0 // pred_region
    _
  $region49: #{_lambda_.1} parent=0 // pred_fallthru
    _
  // Predicated region
  $region50: #{_lambda_.1} parent=0 // pred_check
    _
  $region51: #{_lambda_.1} parent=0 // pred_check_branch
    %43 = sbr.rel (0) target = $region53
  $region52: #{_lambda_.1} parent=0 // pred_region
    _
  $region53: #{_lambda_.1} parent=0 // pred_fallthru
    _
  %v45 = vld [vmem:[%s0] sm:$0xff]
  %v46 = vld [vmem:[%s0 + $0x10] sm:$0xff]
  %v47 = vld [vmem:[%s0 + $0x20] sm:$0xff]
  %v48 = vld [vmem:[%s0 + $0x30] sm:$0xff]
  %v49 = vld [vmem:[%s0 + $0x40] sm:$0xff]
  %v50 = vld [vmem:[%s0 + $0x50] sm:$0xff]
  %v51 = vld [vmem:[%s0 + $0x60] sm:$0xff]
  %v52 = vld [vmem:[%s0 + $0x70] sm:$0xff]
  %v53 = vld [vmem:[%s0 + $0xa0] sm:$0xff]
  %v54 = vld [vmem:[%s0 + $0xb0] sm:$0xff]
  %v55 = vld [vmem:[%s0 + $0xc0] sm:$0xff]
  %v56 = vld [vmem:[%s0 + $0xd0] sm:$0xff]
  %v57 = vld [vmem:[%s0 + $0xe0] sm:$0xff]
  %v58 = vld [vmem:[%s0 + $0xf0] sm:$0xff]
  %v59 = vld [vmem:[%s0 + $0x100] sm:$0xff]
  %v60 = vld [vmem:[%s0 + $0x110] sm:$0xff]
  %v61 = vpack.c.bf16 %v46, %v45
  %v62 = vpack.c.bf16 %v48, %v47
  %v63 = vpack.c.bf16 %v50, %v49
  %v64 = vpack.c.bf16 %v52, %v51
  %v65 = vpack.c.bf16 %v54, %v53
  %v66 = vpack.c.bf16 %v56, %v55
  %v67 = vpack.c.bf16 %v58, %v57
  %v68 = vpack.c.bf16 %v60, %v59
  %v69 = vld [vmem:[%s1] sm:$0xf]
  %v70 = vld [vmem:[%s1 + $0x4] sm:$0xf]
  %v71 = vld [vmem:[%s1 + $0x8] sm:$0xf]
  %v72 = vld [vmem:[%s1 + $0xc] sm:$0xf]
  %v73 = vld [vmem:[%s1 + $0x10] sm:$0xf]
  %v74 = vld [vmem:[%s1 + $0x14] sm:$0xf]
  %v75 = vld [vmem:[%s1 + $0x18] sm:$0xf]
  %v76 = vld [vmem:[%s1 + $0x1c] sm:$0xf]
  %v77 = vld [vmem:[%s1 + $0x20] sm:$0xf]
  %v78 = vld [vmem:[%s1 + $0x24] sm:$0xf]
  %v79 = vld [vmem:[%s1 + $0x28] sm:$0xf]
  %v80 = vld [vmem:[%s1 + $0x2c] sm:$0xf]
  %v81 = vld [vmem:[%s1 + $0x30] sm:$0xf]
  %v82 = vld [vmem:[%s1 + $0x34] sm:$0xf]
  %v83 = vld [vmem:[%s1 + $0x38] sm:$0xf]
  %v84 = vld [vmem:[%s1 + $0x3c] sm:$0xf]
  %v85 = vld [vmem:[%s0 + $0x1] sm:$0xff]
  %v86 = vld [vmem:[%s0 + $0x11] sm:$0xff]
  %v87 = vld [vmem:[%s0 + $0x21] sm:$0xff]
  %v88 = vld [vmem:[%s0 + $0x31] sm:$0xff]
  %v89 = vld [vmem:[%s0 + $0x41] sm:$0xff]
  %v90 = vld [vmem:[%s0 + $0x51] sm:$0xff]
  %v91 = vld [vmem:[%s0 + $0x61] sm:$0xff]
  %v92 = vld [vmem:[%s0 + $0x71] sm:$0xff]
  %v93 = vld [vmem:[%s0 + $0xa1] sm:$0xff]
  %v94 = vld [vmem:[%s0 + $0xb1] sm:$0xff]
  %v95 = vld [vmem:[%s0 + $0xc1] sm:$0xff]
  %v96 = vld [vmem:[%s0 + $0xd1] sm:$0xff]
  %v97 = vld [vmem:[%s0 + $0xe1] sm:$0xff]
  %v98 = vld [vmem:[%s0 + $0xf1] sm:$0xff]
  %v99 = vld [vmem:[%s0 + $0x101] sm:$0xff]
  %v100 = vld [vmem:[%s0 + $0x111] sm:$0xff]
  %v101 = vpack.c.bf16 %v86, %v85
  %v102 = vpack.c.bf16 %v88, %v87
  %v103 = vpack.c.bf16 %v90, %v89
  %v104 = vpack.c.bf16 %v92, %v91
  %v105 = vpack.c.bf16 %v94, %v93
  %v106 = vpack.c.bf16 %v96, %v95
  %v107 = vpack.c.bf16 %v98, %v97
  %v108 = vpack.c.bf16 %v100, %v99
  %s109 = scalar_lea.vmem %s1, 64
  %v110 = vld [vmem:[%s109] sm:$0xf]
  %v111 = vld [vmem:[%s109 + $0x4] sm:$0xf]
  %v112 = vld [vmem:[%s109 + $0x8] sm:$0xf]
  %v113 = vld [vmem:[%s109 + $0xc] sm:$0xf]
  %v114 = vld [vmem:[%s109 + $0x10] sm:$0xf]
  %v115 = vld [vmem:[%s109 + $0x14] sm:$0xf]
  %v116 = vld [vmem:[%s109 + $0x18] sm:$0xf]
  %v117 = vld [vmem:[%s109 + $0x1c] sm:$0xf]
  %v118 = vld [vmem:[%s109 + $0x20] sm:$0xf]
  %v119 = vld [vmem:[%s109 + $0x24] sm:$0xf]
  %v120 = vld [vmem:[%s109 + $0x28] sm:$0xf]
  %v121 = vld [vmem:[%s109 + $0x2c] sm:$0xf]
  %v122 = vld [vmem:[%s109 + $0x30] sm:$0xf]
  %v123 = vld [vmem:[%s109 + $0x34] sm:$0xf]
  %v124 = vld [vmem:[%s109 + $0x38] sm:$0xf]
  %v125 = vld [vmem:[%s109 + $0x3c] sm:$0xf]
  %v142 = vunpack.c.l.b16 %v110
  %v143 = vunpack.c.l.b16 %v111
  %v144 = vunpack.c.l.b16 %v112
  %v145 = vunpack.c.l.b16 %v113
  %v146 = vunpack.c.l.b16 %v114
  %v147 = vunpack.c.l.b16 %v115
  %v148 = vunpack.c.l.b16 %v116
  %v149 = vunpack.c.l.b16 %v117
  %v150 = vunpack.c.l.b16 %v118
  %v151 = vunpack.c.l.b16 %v119
  %v152 = vunpack.c.l.b16 %v120
  %v153 = vunpack.c.l.b16 %v121
  %v154 = vunpack.c.l.b16 %v122
  %v155 = vunpack.c.l.b16 %v123
  %v156 = vunpack.c.l.b16 %v124
  %v157 = vunpack.c.l.b16 %v125
  %v158 = vpack.c.b16 %v143, %v142
  %v159 = vpack.c.b16 %v145, %v144
  %v160 = vpack.c.b16 %v147, %v146
  %v161 = vpack.c.b16 %v149, %v148
  %v162 = vpack.c.b16 %v151, %v150
  %v163 = vpack.c.b16 %v153, %v152
  %v164 = vpack.c.b16 %v155, %v154
  %v165 = vpack.c.b16 %v157, %v156
  %174 = vmatpush.bf16.msra.mxu0 %v165
  %175 = vmatpush.bf16.msra.mxu0 %v164
  %176 = vmatpush.bf16.msra.mxu0 %v163
  %177 = vmatpush.bf16.msra.mxu0 %v162
  %178 = vmatpush.bf16.msra.mxu0 %v161
  %179 = vmatpush.bf16.msra.mxu0 %v160
  %180 = vmatpush.bf16.msra.mxu0 %v159
  %181 = vmatpush.bf16.msra.mxu0 %v158
  %182 = vmatmul.bf16.gmra.mxu0 %v101
  %v183 = vpop.f32.mrf.mxu0
  %v184 = vadd.f32 0.0, %v183
  %v185 = vpop.f32.mrf.mxu0
  %v186 = vadd.f32 0.0, %v185
  %187 = vmatmul.bf16.gmra.mxu0 %v102
  %v188 = vpop.f32.mrf.mxu0
  %v189 = vadd.f32 0.0, %v188
  %v190 = vpop.f32.mrf.mxu0
  %v191 = vadd.f32 0.0, %v190
  %192 = vmatmul.bf16.gmra.mxu0 %v103
  %v193 = vpop.f32.mrf.mxu0
  %v194 = vadd.f32 0.0, %v193
  %v195 = vpop.f32.mrf.mxu0
  %v196 = vadd.f32 0.0, %v195
  %197 = vmatmul.bf16.gmra.mxu0 %v104
  %v198 = vpop.f32.mrf.mxu0
  %v199 = vadd.f32 0.0, %v198
  %v200 = vpop.f32.mrf.mxu0
  %v201 = vadd.f32 0.0, %v200
  %202 = vmatmul.bf16.gmra.mxu0 %v105
  %v203 = vpop.f32.mrf.mxu0
  %v204 = vadd.f32 0.0, %v203
  %v205 = vpop.f32.mrf.mxu0
  %v206 = vadd.f32 0.0, %v205
  %207 = vmatmul.bf16.gmra.mxu0 %v106
  %v208 = vpop.f32.mrf.mxu0
  %v209 = vadd.f32 0.0, %v208
  %v210 = vpop.f32.mrf.mxu0
  %v211 = vadd.f32 0.0, %v210
  %212 = vmatmul.bf16.gmra.mxu0 %v107
  %v213 = vpop.f32.mrf.mxu0
  %v214 = vadd.f32 0.0, %v213
  %v215 = vpop.f32.mrf.mxu0
  %v216 = vadd.f32 0.0, %v215
  %217 = vmatmul.bf16.gmra.mxu0 %v108
  %v218 = vpop.f32.mrf.mxu0
  %v219 = vadd.f32 0.0, %v218
  %v220 = vpop.f32.mrf.mxu0
  %v221 = vadd.f32 0.0, %v220
  %222 = vdwg.mxu0
  %v239 = vunpack.c.l.b16 %v69
  %v240 = vunpack.c.l.b16 %v70
  %v241 = vunpack.c.l.b16 %v71
  %v242 = vunpack.c.l.b16 %v72
  %v243 = vunpack.c.l.b16 %v73
  %v244 = vunpack.c.l.b16 %v74
  %v245 = vunpack.c.l.b16 %v75
  %v246 = vunpack.c.l.b16 %v76
  %v247 = vunpack.c.l.b16 %v77
  %v248 = vunpack.c.l.b16 %v78
  %v249 = vunpack.c.l.b16 %v79
  %v250 = vunpack.c.l.b16 %v80
  %v251 = vunpack.c.l.b16 %v81
  %v252 = vunpack.c.l.b16 %v82
  %v253 = vunpack.c.l.b16 %v83
  %v254 = vunpack.c.l.b16 %v84
  %v255 = vpack.c.b16 %v240, %v239
  %v256 = vpack.c.b16 %v242, %v241
  %v257 = vpack.c.b16 %v244, %v243
  %v258 = vpack.c.b16 %v246, %v245
  %v259 = vpack.c.b16 %v248, %v247
  %v260 = vpack.c.b16 %v250, %v249
  %v261 = vpack.c.b16 %v252, %v251
  %v262 = vpack.c.b16 %v254, %v253
  %271 = vmatpush.bf16.msra.mxu0 %v262
  %272 = vmatpush.bf16.msra.mxu0 %v261
  %273 = vmatpush.bf16.msra.mxu0 %v260
  %274 = vmatpush.bf16.msra.mxu0 %v259
  %275 = vmatpush.bf16.msra.mxu0 %v258
  %276 = vmatpush.bf16.msra.mxu0 %v257
  %277 = vmatpush.bf16.msra.mxu0 %v256
  %278 = vmatpush.bf16.msra.mxu0 %v255
  %279 = vmatmul.bf16.gmra.mxu0 %v61
  %v280 = vpop.f32.mrf.mxu0
  %v281 = vadd.f32 %v184, %v280
  %v282 = vpop.f32.mrf.mxu0
  %v283 = vadd.f32 %v186, %v282
  %284 = vmatmul.bf16.gmra.mxu0 %v62
  %v285 = vpop.f32.mrf.mxu0
  %v286 = vadd.f32 %v189, %v285
  %v287 = vpop.f32.mrf.mxu0
  %v288 = vadd.f32 %v191, %v287
  %289 = vmatmul.bf16.gmra.mxu0 %v63
  %v290 = vpop.f32.mrf.mxu0
  %v291 = vadd.f32 %v194, %v290
  %v292 = vpop.f32.mrf.mxu0
  %v293 = vadd.f32 %v196, %v292
  %294 = vmatmul.bf16.gmra.mxu0 %v64
  %v295 = vpop.f32.mrf.mxu0
  %v296 = vadd.f32 %v199, %v295
  %v297 = vpop.f32.mrf.mxu0
  %v298 = vadd.f32 %v201, %v297
  %299 = vmatmul.bf16.gmra.mxu0 %v65
  %v300 = vpop.f32.mrf.mxu0
  %v301 = vadd.f32 %v204, %v300
  %v302 = vpop.f32.mrf.mxu0
  %v303 = vadd.f32 %v206, %v302
  %304 = vmatmul.bf16.gmra.mxu0 %v66
  %v305 = vpop.f32.mrf.mxu0
  %v306 = vadd.f32 %v209, %v305
  %v307 = vpop.f32.mrf.mxu0
  %v308 = vadd.f32 %v211, %v307
  %309 = vmatmul.bf16.gmra.mxu0 %v67
  %v310 = vpop.f32.mrf.mxu0
  %v311 = vadd.f32 %v214, %v310
  %v312 = vpop.f32.mrf.mxu0
  %v313 = vadd.f32 %v216, %v312
  %314 = vmatmul.bf16.gmra.mxu0 %v68
  %v315 = vpop.f32.mrf.mxu0
  %v316 = vadd.f32 %v219, %v315
  %v317 = vpop.f32.mrf.mxu0
  %v318 = vadd.f32 %v221, %v317
  %319 = vdwg.mxu0
  %v320 = vld [vmem:[%s0 + $0x2] sm:$0xff]
  %v321 = vld [vmem:[%s0 + $0x12] sm:$0xff]
  %v322 = vld [vmem:[%s0 + $0x22] sm:$0xff]
  %v323 = vld [vmem:[%s0 + $0x32] sm:$0xff]
  %v324 = vld [vmem:[%s0 + $0x42] sm:$0xff]
  %v325 = vld [vmem:[%s0 + $0x52] sm:$0xff]
  %v326 = vld [vmem:[%s0 + $0x62] sm:$0xff]
  %v327 = vld [vmem:[%s0 + $0x72] sm:$0xff]
  %v328 = vld [vmem:[%s0 + $0xa2] sm:$0xff]
  %v329 = vld [vmem:[%s0 + $0xb2] sm:$0xff]
  %v330 = vld [vmem:[%s0 + $0xc2] sm:$0xff]
  %v331 = vld [vmem:[%s0 + $0xd2] sm:$0xff]
  %v332 = vld [vmem:[%s0 + $0xe2] sm:$0xff]
  %v333 = vld [vmem:[%s0 + $0xf2] sm:$0xff]
  %v334 = vld [vmem:[%s0 + $0x102] sm:$0xff]
  %v335 = vld [vmem:[%s0 + $0x112] sm:$0xff]
  %v336 = vpack.c.bf16 %v321, %v320
  %v337 = vpack.c.bf16 %v323, %v322
  %v338 = vpack.c.bf16 %v325, %v324
  %v339 = vpack.c.bf16 %v327, %v326
  %v340 = vpack.c.bf16 %v329, %v328
  %v341 = vpack.c.bf16 %v331, %v330
  %v342 = vpack.c.bf16 %v333, %v332
  %v343 = vpack.c.bf16 %v335, %v334
  %s344 = scalar_lea.vmem %s1, 128
  %v345 = vld [vmem:[%s344] sm:$0xf]
  %v346 = vld [vmem:[%s344 + $0x4] sm:$0xf]
  %v347 = vld [vmem:[%s344 + $0x8] sm:$0xf]
  %v348 = vld [vmem:[%s344 + $0xc] sm:$0xf]
  %v349 = vld [vmem:[%s344 + $0x10] sm:$0xf]
  %v350 = vld [vmem:[%s344 + $0x14] sm:$0xf]
  %v351 = vld [vmem:[%s344 + $0x18] sm:$0xf]
  %v352 = vld [vmem:[%s344 + $0x1c] sm:$0xf]
  %v353 = vld [vmem:[%s344 + $0x20] sm:$0xf]
  %v354 = vld [vmem:[%s344 + $0x24] sm:$0xf]
  %v355 = vld [vmem:[%s344 + $0x28] sm:$0xf]
  %v356 = vld [vmem:[%s344 + $0x2c] sm:$0xf]
  %v357 = vld [vmem:[%s344 + $0x30] sm:$0xf]
  %v358 = vld [vmem:[%s344 + $0x34] sm:$0xf]
  %v359 = vld [vmem:[%s344 + $0x38] sm:$0xf]
  %v360 = vld [vmem:[%s344 + $0x3c] sm:$0xf]
  %v377 = vunpack.c.l.b16 %v345
  %v378 = vunpack.c.l.b16 %v346
  %v379 = vunpack.c.l.b16 %v347
  %v380 = vunpack.c.l.b16 %v348
  %v381 = vunpack.c.l.b16 %v349
  %v382 = vunpack.c.l.b16 %v350
  %v383 = vunpack.c.l.b16 %v351
  %v384 = vunpack.c.l.b16 %v352
  %v385 = vunpack.c.l.b16 %v353
  %v386 = vunpack.c.l.b16 %v354
  %v387 = vunpack.c.l.b16 %v355
  %v388 = vunpack.c.l.b16 %v356
  %v389 = vunpack.c.l.b16 %v357
  %v390 = vunpack.c.l.b16 %v358
  %v391 = vunpack.c.l.b16 %v359
  %v392 = vunpack.c.l.b16 %v360
  %v393 = vpack.c.b16 %v378, %v377
  %v394 = vpack.c.b16 %v380, %v379
  %v395 = vpack.c.b16 %v382, %v381
  %v396 = vpack.c.b16 %v384, %v383
  %v397 = vpack.c.b16 %v386, %v385
  %v398 = vpack.c.b16 %v388, %v387
  %v399 = vpack.c.b16 %v390, %v389
  %v400 = vpack.c.b16 %v392, %v391
  %409 = vmatpush.bf16.msra.mxu0 %v400
  %410 = vmatpush.bf16.msra.mxu0 %v399
  %411 = vmatpush.bf16.msra.mxu0 %v398
  %412 = vmatpush.bf16.msra.mxu0 %v397
  %413 = vmatpush.bf16.msra.mxu0 %v396
  %414 = vmatpush.bf16.msra.mxu0 %v395
  %415 = vmatpush.bf16.msra.mxu0 %v394
  %416 = vmatpush.bf16.msra.mxu0 %v393
  %417 = vmatmul.bf16.gmra.mxu0 %v336
  %v418 = vpop.f32.mrf.mxu0
  %v419 = vadd.f32 0.0, %v418
  %v420 = vpop.f32.mrf.mxu0
  %v421 = vadd.f32 0.0, %v420
  %422 = vmatmul.bf16.gmra.mxu0 %v337
  %v423 = vpop.f32.mrf.mxu0
  %v424 = vadd.f32 0.0, %v423
  %v425 = vpop.f32.mrf.mxu0
  %v426 = vadd.f32 0.0, %v425
  %427 = vmatmul.bf16.gmra.mxu0 %v338
  %v428 = vpop.f32.mrf.mxu0
  %v429 = vadd.f32 0.0, %v428
  %v430 = vpop.f32.mrf.mxu0
  %v431 = vadd.f32 0.0, %v430
  %432 = vmatmul.bf16.gmra.mxu0 %v339
  %v433 = vpop.f32.mrf.mxu0
  %v434 = vadd.f32 0.0, %v433
  %v435 = vpop.f32.mrf.mxu0
  %v436 = vadd.f32 0.0, %v435
  %437 = vmatmul.bf16.gmra.mxu0 %v340
  %v438 = vpop.f32.mrf.mxu0
  %v439 = vadd.f32 0.0, %v438
  %v440 = vpop.f32.mrf.mxu0
  %v441 = vadd.f32 0.0, %v440
  %442 = vmatmul.bf16.gmra.mxu0 %v341
  %v443 = vpop.f32.mrf.mxu0
  %v444 = vadd.f32 0.0, %v443
  %v445 = vpop.f32.mrf.mxu0
  %v446 = vadd.f32 0.0, %v445
  %447 = vmatmul.bf16.gmra.mxu0 %v342
  %v448 = vpop.f32.mrf.mxu0
  %v449 = vadd.f32 0.0, %v448
  %v450 = vpop.f32.mrf.mxu0
  %v451 = vadd.f32 0.0, %v450
  %452 = vmatmul.bf16.gmra.mxu0 %v343
  %v453 = vpop.f32.mrf.mxu0
  %v454 = vadd.f32 0.0, %v453
  %v455 = vpop.f32.mrf.mxu0
  %v456 = vadd.f32 0.0, %v455
  %457 = vdwg.mxu0
  %v458 = vadd.f32 %v281, %v419
  %v459 = vadd.f32 %v283, %v421
  %v460 = vadd.f32 %v286, %v424
  %v461 = vadd.f32 %v288, %v426
  %v462 = vadd.f32 %v291, %v429
  %v463 = vadd.f32 %v293, %v431
  %v464 = vadd.f32 %v296, %v434
  %v465 = vadd.f32 %v298, %v436
  %v466 = vadd.f32 %v301, %v439
  %v467 = vadd.f32 %v303, %v441
  %v468 = vadd.f32 %v306, %v444
  %v469 = vadd.f32 %v308, %v446
  %v470 = vadd.f32 %v311, %v449
  %v471 = vadd.f32 %v313, %v451
  %v472 = vadd.f32 %v316, %v454
  %v473 = vadd.f32 %v318, %v456
  %s474 = scalar_lea.vmem %s0, 16
  %v475 = vld [vmem:[%s474] sm:$0xff]
  %v476 = vld [vmem:[%s474 + $0x10] sm:$0xff]
  %v477 = vld [vmem:[%s474 + $0x20] sm:$0xff]
  %v478 = vld [vmem:[%s474 + $0x30] sm:$0xff]
  %v479 = vld [vmem:[%s474 + $0x40] sm:$0xff]
  %v480 = vld [vmem:[%s474 + $0x50] sm:$0xff]
  %v481 = vld [vmem:[%s474 + $0x60] sm:$0xff]
  %v482 = vld [vmem:[%s474 + $0x70] sm:$0xff]
  %v483 = vld [vmem:[%s474 + $0xa0] sm:$0xff]
  %v484 = vld [vmem:[%s474 + $0xb0] sm:$0xff]
  %v485 = vld [vmem:[%s474 + $0xc0] sm:$0xff]
  %v486 = vld [vmem:[%s474 + $0xd0] sm:$0xff]
  %v487 = vld [vmem:[%s474 + $0xe0] sm:$0xff]
  %v488 = vld [vmem:[%s474 + $0xf0] sm:$0xff]
  %v489 = vld [vmem:[%s474 + $0x100] sm:$0xff]
  %v490 = vld [vmem:[%s474 + $0x110] sm:$0xff]
  %v491 = vpack.c.bf16 %v476, %v475
  %v492 = vpack.c.bf16 %v478, %v477
  %v493 = vpack.c.bf16 %v480, %v479
  %v494 = vpack.c.bf16 %v482, %v481
  %v495 = vpack.c.bf16 %v484, %v483
  %v496 = vpack.c.bf16 %v486, %v485
  %v497 = vpack.c.bf16 %v488, %v487
  %v498 = vpack.c.bf16 %v490, %v489
  %s499 = scalar_lea.vmem %s1, 192
  %v500 = vld [vmem:[%s499] sm:$0xf]
  %v501 = vld [vmem:[%s499 + $0x4] sm:$0xf]
  %v502 = vld [vmem:[%s499 + $0x8] sm:$0xf]
  %v503 = vld [vmem:[%s499 + $0xc] sm:$0xf]
  %v504 = vld [vmem:[%s499 + $0x10] sm:$0xf]
  %v505 = vld [vmem:[%s499 + $0x14] sm:$0xf]
  %v506 = vld [vmem:[%s499 + $0x18] sm:$0xf]
  %v507 = vld [vmem:[%s499 + $0x1c] sm:$0xf]
  %v508 = vld [vmem:[%s499 + $0x20] sm:$0xf]
  %v509 = vld [vmem:[%s499 + $0x24] sm:$0xf]
  %v510 = vld [vmem:[%s499 + $0x28] sm:$0xf]
  %v511 = vld [vmem:[%s499 + $0x2c] sm:$0xf]
  %v512 = vld [vmem:[%s499 + $0x30] sm:$0xf]
  %v513 = vld [vmem:[%s499 + $0x34] sm:$0xf]
  %v514 = vld [vmem:[%s499 + $0x38] sm:$0xf]
  %v515 = vld [vmem:[%s499 + $0x3c] sm:$0xf]
  %v532 = vunpack.c.l.b16 %v500
  %v533 = vunpack.c.l.b16 %v501
  %v534 = vunpack.c.l.b16 %v502
  %v535 = vunpack.c.l.b16 %v503
  %v536 = vunpack.c.l.b16 %v504
  %v537 = vunpack.c.l.b16 %v505
  %v538 = vunpack.c.l.b16 %v506
  %v539 = vunpack.c.l.b16 %v507
  %v540 = vunpack.c.l.b16 %v508
  %v541 = vunpack.c.l.b16 %v509
  %v542 = vunpack.c.l.b16 %v510
  %v543 = vunpack.c.l.b16 %v511
  %v544 = vunpack.c.l.b16 %v512
  %v545 = vunpack.c.l.b16 %v513
  %v546 = vunpack.c.l.b16 %v514
  %v547 = vunpack.c.l.b16 %v515
  %v548 = vpack.c.b16 %v533, %v532
  %v549 = vpack.c.b16 %v535, %v534
  %v550 = vpack.c.b16 %v537, %v536
  %v551 = vpack.c.b16 %v539, %v538
  %v552 = vpack.c.b16 %v541, %v540
  %v553 = vpack.c.b16 %v543, %v542
  %v554 = vpack.c.b16 %v545, %v544
  %v555 = vpack.c.b16 %v547, %v546
  %564 = vmatpush.bf16.msra.mxu0 %v555
  %565 = vmatpush.bf16.msra.mxu0 %v554
  %566 = vmatpush.bf16.msra.mxu0 %v553
  %567 = vmatpush.bf16.msra.mxu0 %v552
  %568 = vmatpush.bf16.msra.mxu0 %v551
  %569 = vmatpush.bf16.msra.mxu0 %v550
  %570 = vmatpush.bf16.msra.mxu0 %v549
  %571 = vmatpush.bf16.msra.mxu0 %v548
  %572 = vmatmul.bf16.gmra.mxu0 %v491
  %v573 = vpop.f32.mrf.mxu0
  %v574 = vadd.f32 0.0, %v573
  %v575 = vpop.f32.mrf.mxu0
  %v576 = vadd.f32 0.0, %v575
  %577 = vmatmul.bf16.gmra.mxu0 %v492
  %v578 = vpop.f32.mrf.mxu0
  %v579 = vadd.f32 0.0, %v578
  %v580 = vpop.f32.mrf.mxu0
  %v581 = vadd.f32 0.0, %v580
  %582 = vmatmul.bf16.gmra.mxu0 %v493
  %v583 = vpop.f32.mrf.mxu0
  %v584 = vadd.f32 0.0, %v583
  %v585 = vpop.f32.mrf.mxu0
  %v586 = vadd.f32 0.0, %v585
  %587 = vmatmul.bf16.gmra.mxu0 %v494
  %v588 = vpop.f32.mrf.mxu0
  %v589 = vadd.f32 0.0, %v588
  %v590 = vpop.f32.mrf.mxu0
  %v591 = vadd.f32 0.0, %v590
  %592 = vmatmul.bf16.gmra.mxu0 %v495
  %v593 = vpop.f32.mrf.mxu0
  %v594 = vadd.f32 0.0, %v593
  %v595 = vpop.f32.mrf.mxu0
  %v596 = vadd.f32 0.0, %v595
  %597 = vmatmul.bf16.gmra.mxu0 %v496
  %v598 = vpop.f32.mrf.mxu0
  %v599 = vadd.f32 0.0, %v598
  %v600 = vpop.f32.mrf.mxu0
  %v601 = vadd.f32 0.0, %v600
  %602 = vmatmul.bf16.gmra.mxu0 %v497
  %v603 = vpop.f32.mrf.mxu0
  %v604 = vadd.f32 0.0, %v603
  %v605 = vpop.f32.mrf.mxu0
  %v606 = vadd.f32 0.0, %v605
  %607 = vmatmul.bf16.gmra.mxu0 %v498
  %v608 = vpop.f32.mrf.mxu0
  %v609 = vadd.f32 0.0, %v608
  %v610 = vpop.f32.mrf.mxu0
  %v611 = vadd.f32 0.0, %v610
  %612 = vdwg.mxu0
  %v613 = vadd.f32 %v458, %v574
  %v614 = vadd.f32 %v459, %v576
  %v615 = vadd.f32 %v460, %v579
  %v616 = vadd.f32 %v461, %v581
  %v617 = vadd.f32 %v462, %v584
  %v618 = vadd.f32 %v463, %v586
  %v619 = vadd.f32 %v464, %v589
  %v620 = vadd.f32 %v465, %v591
  %v621 = vadd.f32 %v466, %v594
  %v622 = vadd.f32 %v467, %v596
  %v623 = vadd.f32 %v468, %v599
  %v624 = vadd.f32 %v469, %v601
  %v625 = vadd.f32 %v470, %v604
  %v626 = vadd.f32 %v471, %v606
  %v627 = vadd.f32 %v472, %v609
  %v628 = vadd.f32 %v473, %v611
  %v629 = vld [vmem:[%s474 + $0x1] sm:$0xff]
  %v630 = vld [vmem:[%s474 + $0x11] sm:$0xff]
  %v631 = vld [vmem:[%s474 + $0x21] sm:$0xff]
  %v632 = vld [vmem:[%s474 + $0x31] sm:$0xff]
  %v633 = vld [vmem:[%s474 + $0x41] sm:$0xff]
  %v634 = vld [vmem:[%s474 + $0x51] sm:$0xff]
  %v635 = vld [vmem:[%s474 + $0x61] sm:$0xff]
  %v636 = vld [vmem:[%s474 + $0x71] sm:$0xff]
  %v637 = vld [vmem:[%s474 + $0xa1] sm:$0xff]
  %v638 = vld [vmem:[%s474 + $0xb1] sm:$0xff]
  %v639 = vld [vmem:[%s474 + $0xc1] sm:$0xff]
  %v640 = vld [vmem:[%s474 + $0xd1] sm:$0xff]
  %v641 = vld [vmem:[%s474 + $0xe1] sm:$0xff]
  %v642 = vld [vmem:[%s474 + $0xf1] sm:$0xff]
  %v643 = vld [vmem:[%s474 + $0x101] sm:$0xff]
  %v644 = vld [vmem:[%s474 + $0x111] sm:$0xff]
  %v645 = vpack.c.bf16 %v630, %v629
  %v646 = vpack.c.bf16 %v632, %v631
  %v647 = vpack.c.bf16 %v634, %v633
  %v648 = vpack.c.bf16 %v636, %v635
  %v649 = vpack.c.bf16 %v638, %v637
  %v650 = vpack.c.bf16 %v640, %v639
  %v651 = vpack.c.bf16 %v642, %v641
  %v652 = vpack.c.bf16 %v644, %v643
  %s653 = scalar_lea.vmem %s1, 256
  %v654 = vld [vmem:[%s653] sm:$0xf]
  %v655 = vld [vmem:[%s653 + $0x4] sm:$0xf]
  %v656 = vld [vmem:[%s653 + $0x8] sm:$0xf]
  %v657 = vld [vmem:[%s653 + $0xc] sm:$0xf]
  %v658 = vld [vmem:[%s653 + $0x10] sm:$0xf]
  %v659 = vld [vmem:[%s653 + $0x14] sm:$0xf]
  %v660 = vld [vmem:[%s653 + $0x18] sm:$0xf]
  %v661 = vld [vmem:[%s653 + $0x1c] sm:$0xf]
  %v662 = vld [vmem:[%s653 + $0x20] sm:$0xf]
  %v663 = vld [vmem:[%s653 + $0x24] sm:$0xf]
  %v664 = vld [vmem:[%s653 + $0x28] sm:$0xf]
  %v665 = vld [vmem:[%s653 + $0x2c] sm:$0xf]
  %v666 = vld [vmem:[%s653 + $0x30] sm:$0xf]
  %v667 = vld [vmem:[%s653 + $0x34] sm:$0xf]
  %v668 = vld [vmem:[%s653 + $0x38] sm:$0xf]
  %v669 = vld [vmem:[%s653 + $0x3c] sm:$0xf]
  %v686 = vunpack.c.l.b16 %v654
  %v687 = vunpack.c.l.b16 %v655
  %v688 = vunpack.c.l.b16 %v656
  %v689 = vunpack.c.l.b16 %v657
  %v690 = vunpack.c.l.b16 %v658
  %v691 = vunpack.c.l.b16 %v659
  %v692 = vunpack.c.l.b16 %v660
  %v693 = vunpack.c.l.b16 %v661
  %v694 = vunpack.c.l.b16 %v662
  %v695 = vunpack.c.l.b16 %v663
  %v696 = vunpack.c.l.b16 %v664
  %v697 = vunpack.c.l.b16 %v665
  %v698 = vunpack.c.l.b16 %v666
  %v699 = vunpack.c.l.b16 %v667
  %v700 = vunpack.c.l.b16 %v668
  %v701 = vunpack.c.l.b16 %v669
  %v702 = vpack.c.b16 %v687, %v686
  %v703 = vpack.c.b16 %v689, %v688
  %v704 = vpack.c.b16 %v691, %v690
  %v705 = vpack.c.b16 %v693, %v692
  %v706 = vpack.c.b16 %v695, %v694
  %v707 = vpack.c.b16 %v697, %v696
  %v708 = vpack.c.b16 %v699, %v698
  %v709 = vpack.c.b16 %v701, %v700
  %718 = vmatpush.bf16.msra.mxu0 %v709
  %719 = vmatpush.bf16.msra.mxu0 %v708
  %720 = vmatpush.bf16.msra.mxu0 %v707
  %721 = vmatpush.bf16.msra.mxu0 %v706
  %722 = vmatpush.bf16.msra.mxu0 %v705
  %723 = vmatpush.bf16.msra.mxu0 %v704
  %724 = vmatpush.bf16.msra.mxu0 %v703
  %725 = vmatpush.bf16.msra.mxu0 %v702
  %726 = vmatmul.bf16.gmra.mxu0 %v645
  %v727 = vpop.f32.mrf.mxu0
  %v728 = vadd.f32 0.0, %v727
  %v729 = vpop.f32.mrf.mxu0
  %v730 = vadd.f32 0.0, %v729
  %731 = vmatmul.bf16.gmra.mxu0 %v646
  %v732 = vpop.f32.mrf.mxu0
  %v733 = vadd.f32 0.0, %v732
  %v734 = vpop.f32.mrf.mxu0
  %v735 = vadd.f32 0.0, %v734
  %736 = vmatmul.bf16.gmra.mxu0 %v647
  %v737 = vpop.f32.mrf.mxu0
  %v738 = vadd.f32 0.0, %v737
  %v739 = vpop.f32.mrf.mxu0
  %v740 = vadd.f32 0.0, %v739
  %741 = vmatmul.bf16.gmra.mxu0 %v648
  %v742 = vpop.f32.mrf.mxu0
  %v743 = vadd.f32 0.0, %v742
  %v744 = vpop.f32.mrf.mxu0
  %v745 = vadd.f32 0.0, %v744
  %746 = vmatmul.bf16.gmra.mxu0 %v649
  %v747 = vpop.f32.mrf.mxu0
  %v748 = vadd.f32 0.0, %v747
  %v749 = vpop.f32.mrf.mxu0
  %v750 = vadd.f32 0.0, %v749
  %751 = vmatmul.bf16.gmra.mxu0 %v650
  %v752 = vpop.f32.mrf.mxu0
  %v753 = vadd.f32 0.0, %v752
  %v754 = vpop.f32.mrf.mxu0
  %v755 = vadd.f32 0.0, %v754
  %756 = vmatmul.bf16.gmra.mxu0 %v651
  %v757 = vpop.f32.mrf.mxu0
  %v758 = vadd.f32 0.0, %v757
  %v759 = vpop.f32.mrf.mxu0
  %v760 = vadd.f32 0.0, %v759
  %761 = vmatmul.bf16.gmra.mxu0 %v652
  %v762 = vpop.f32.mrf.mxu0
  %v763 = vadd.f32 0.0, %v762
  %v764 = vpop.f32.mrf.mxu0
  %v765 = vadd.f32 0.0, %v764
  %766 = vdwg.mxu0
  %v767 = vadd.f32 %v613, %v728
  %v768 = vadd.f32 %v614, %v730
  %v769 = vadd.f32 %v615, %v733
  %v770 = vadd.f32 %v616, %v735
  %v771 = vadd.f32 %v617, %v738
  %v772 = vadd.f32 %v618, %v740
  %v773 = vadd.f32 %v619, %v743
  %v774 = vadd.f32 %v620, %v745
  %v775 = vadd.f32 %v621, %v748
  %v776 = vadd.f32 %v622, %v750
  %v777 = vadd.f32 %v623, %v753
  %v778 = vadd.f32 %v624, %v755
  %v779 = vadd.f32 %v625, %v758
  %v780 = vadd.f32 %v626, %v760
  %v781 = vadd.f32 %v627, %v763
  %v782 = vadd.f32 %v628, %v765
  %v783 = vld [vmem:[%s474 + $0x2] sm:$0xff]
  %v784 = vld [vmem:[%s474 + $0x12] sm:$0xff]
  %v785 = vld [vmem:[%s474 + $0x22] sm:$0xff]
  %v786 = vld [vmem:[%s474 + $0x32] sm:$0xff]
  %v787 = vld [vmem:[%s474 + $0x42] sm:$0xff]
  %v788 = vld [vmem:[%s474 + $0x52] sm:$0xff]
  %v789 = vld [vmem:[%s474 + $0x62] sm:$0xff]
  %v790 = vld [vmem:[%s474 + $0x72] sm:$0xff]
  %v791 = vld [vmem:[%s474 + $0xa2] sm:$0xff]
  %v792 = vld [vmem:[%s474 + $0xb2] sm:$0xff]
  %v793 = vld [vmem:[%s474 + $0xc2] sm:$0xff]
  %v794 = vld [vmem:[%s474 + $0xd2] sm:$0xff]
  %v795 = vld [vmem:[%s474 + $0xe2] sm:$0xff]
  %v796 = vld [vmem:[%s474 + $0xf2] sm:$0xff]
  %v797 = vld [vmem:[%s474 + $0x102] sm:$0xff]
  %v798 = vld [vmem:[%s474 + $0x112] sm:$0xff]
  %v799 = vpack.c.bf16 %v784, %v783
  %v800 = vpack.c.bf16 %v786, %v785
  %v801 = vpack.c.bf16 %v788, %v787
  %v802 = vpack.c.bf16 %v790, %v789
  %v803 = vpack.c.bf16 %v792, %v791
  %v804 = vpack.c.bf16 %v794, %v793
  %v805 = vpack.c.bf16 %v796, %v795
  %v806 = vpack.c.bf16 %v798, %v797
  %s807 = scalar_lea.vmem %s1, 320
  %v808 = vld [vmem:[%s807] sm:$0xf]
  %v809 = vld [vmem:[%s807 + $0x4] sm:$0xf]
  %v810 = vld [vmem:[%s807 + $0x8] sm:$0xf]
  %v811 = vld [vmem:[%s807 + $0xc] sm:$0xf]
  %v812 = vld [vmem:[%s807 + $0x10] sm:$0xf]
  %v813 = vld [vmem:[%s807 + $0x14] sm:$0xf]
  %v814 = vld [vmem:[%s807 + $0x18] sm:$0xf]
  %v815 = vld [vmem:[%s807 + $0x1c] sm:$0xf]
  %v816 = vld [vmem:[%s807 + $0x20] sm:$0xf]
  %v817 = vld [vmem:[%s807 + $0x24] sm:$0xf]
  %v818 = vld [vmem:[%s807 + $0x28] sm:$0xf]
  %v819 = vld [vmem:[%s807 + $0x2c] sm:$0xf]
  %v820 = vld [vmem:[%s807 + $0x30] sm:$0xf]
  %v821 = vld [vmem:[%s807 + $0x34] sm:$0xf]
  %v822 = vld [vmem:[%s807 + $0x38] sm:$0xf]
  %v823 = vld [vmem:[%s807 + $0x3c] sm:$0xf]
  %v840 = vunpack.c.l.b16 %v808
  %v841 = vunpack.c.l.b16 %v809
  %v842 = vunpack.c.l.b16 %v810
  %v843 = vunpack.c.l.b16 %v811
  %v844 = vunpack.c.l.b16 %v812
  %v845 = vunpack.c.l.b16 %v813
  %v846 = vunpack.c.l.b16 %v814
  %v847 = vunpack.c.l.b16 %v815
  %v848 = vunpack.c.l.b16 %v816
  %v849 = vunpack.c.l.b16 %v817
  %v850 = vunpack.c.l.b16 %v818
  %v851 = vunpack.c.l.b16 %v819
  %v852 = vunpack.c.l.b16 %v820
  %v853 = vunpack.c.l.b16 %v821
  %v854 = vunpack.c.l.b16 %v822
  %v855 = vunpack.c.l.b16 %v823
  %v856 = vpack.c.b16 %v841, %v840
  %v857 = vpack.c.b16 %v843, %v842
  %v858 = vpack.c.b16 %v845, %v844
  %v859 = vpack.c.b16 %v847, %v846
  %v860 = vpack.c.b16 %v849, %v848
  %v861 = vpack.c.b16 %v851, %v850
  %v862 = vpack.c.b16 %v853, %v852
  %v863 = vpack.c.b16 %v855, %v854
  %872 = vmatpush.bf16.msra.mxu0 %v863
  %873 = vmatpush.bf16.msra.mxu0 %v862
  %874 = vmatpush.bf16.msra.mxu0 %v861
  %875 = vmatpush.bf16.msra.mxu0 %v860
  %876 = vmatpush.bf16.msra.mxu0 %v859
  %877 = vmatpush.bf16.msra.mxu0 %v858
  %878 = vmatpush.bf16.msra.mxu0 %v857
  %879 = vmatpush.bf16.msra.mxu0 %v856
  %880 = vmatmul.bf16.gmra.mxu0 %v799
  %v881 = vpop.f32.mrf.mxu0
  %v882 = vadd.f32 0.0, %v881
  %v883 = vpop.f32.mrf.mxu0
  %v884 = vadd.f32 0.0, %v883
  %885 = vmatmul.bf16.gmra.mxu0 %v800
  %v886 = vpop.f32.mrf.mxu0
  %v887 = vadd.f32 0.0, %v886
  %v888 = vpop.f32.mrf.mxu0
  %v889 = vadd.f32 0.0, %v888
  %890 = vmatmul.bf16.gmra.mxu0 %v801
  %v891 = vpop.f32.mrf.mxu0
  %v892 = vadd.f32 0.0, %v891
  %v893 = vpop.f32.mrf.mxu0
  %v894 = vadd.f32 0.0, %v893
  %895 = vmatmul.bf16.gmra.mxu0 %v802
  %v896 = vpop.f32.mrf.mxu0
  %v897 = vadd.f32 0.0, %v896
  %v898 = vpop.f32.mrf.mxu0
  %v899 = vadd.f32 0.0, %v898
  %900 = vmatmul.bf16.gmra.mxu0 %v803
  %v901 = vpop.f32.mrf.mxu0
  %v902 = vadd.f32 0.0, %v901
  %v903 = vpop.f32.mrf.mxu0
  %v904 = vadd.f32 0.0, %v903
  %905 = vmatmul.bf16.gmra.mxu0 %v804
  %v906 = vpop.f32.mrf.mxu0
  %v907 = vadd.f32 0.0, %v906
  %v908 = vpop.f32.mrf.mxu0
  %v909 = vadd.f32 0.0, %v908
  %910 = vmatmul.bf16.gmra.mxu0 %v805
  %v911 = vpop.f32.mrf.mxu0
  %v912 = vadd.f32 0.0, %v911
  %v913 = vpop.f32.mrf.mxu0
  %v914 = vadd.f32 0.0, %v913
  %915 = vmatmul.bf16.gmra.mxu0 %v806
  %v916 = vpop.f32.mrf.mxu0
  %v917 = vadd.f32 0.0, %v916
  %v918 = vpop.f32.mrf.mxu0
  %v919 = vadd.f32 0.0, %v918
  %920 = vdwg.mxu0
  %v921 = vadd.f32 %v767, %v882
  %v922 = vadd.f32 %v768, %v884
  %v923 = vadd.f32 %v769, %v887
  %v924 = vadd.f32 %v770, %v889
  %v925 = vadd.f32 %v771, %v892
  %v926 = vadd.f32 %v772, %v894
  %v927 = vadd.f32 %v773, %v897
  %v928 = vadd.f32 %v774, %v899
  %v929 = vadd.f32 %v775, %v902
  %v930 = vadd.f32 %v776, %v904
  %v931 = vadd.f32 %v777, %v907
  %v932 = vadd.f32 %v778, %v909
  %v933 = vadd.f32 %v779, %v912
  %v934 = vadd.f32 %v780, %v914
  %v935 = vadd.f32 %v781, %v917
  %v936 = vadd.f32 %v782, %v919
  %s937 = scalar_lea.vmem %s0, 32
  %v938 = vld [vmem:[%s937] sm:$0xff]
  %v939 = vld [vmem:[%s937 + $0x10] sm:$0xff]
  %v940 = vld [vmem:[%s937 + $0x20] sm:$0xff]
  %v941 = vld [vmem:[%s937 + $0x30] sm:$0xff]
  %v942 = vld [vmem:[%s937 + $0x40] sm:$0xff]
  %v943 = vld [vmem:[%s937 + $0x50] sm:$0xff]
  %v944 = vld [vmem:[%s937 + $0x60] sm:$0xff]
  %v945 = vld [vmem:[%s937 + $0x70] sm:$0xff]
  %v946 = vld [vmem:[%s937 + $0xa0] sm:$0xff]
  %v947 = vld [vmem:[%s937 + $0xb0] sm:$0xff]
  %v948 = vld [vmem:[%s937 + $0xc0] sm:$0xff]
  %v949 = vld [vmem:[%s937 + $0xd0] sm:$0xff]
  %v950 = vld [vmem:[%s937 + $0xe0] sm:$0xff]
  %v951 = vld [vmem:[%s937 + $0xf0] sm:$0xff]
  %v952 = vld [vmem:[%s937 + $0x100] sm:$0xff]
  %v953 = vld [vmem:[%s937 + $0x110] sm:$0xff]
  %v954 = vpack.c.bf16 %v939, %v938
  %v955 = vpack.c.bf16 %v941, %v940
  %v956 = vpack.c.bf16 %v943, %v942
  %v957 = vpack.c.bf16 %v945, %v944
  %v958 = vpack.c.bf16 %v947, %v946
  %v959 = vpack.c.bf16 %v949, %v948
  %v960 = vpack.c.bf16 %v951, %v950
  %v961 = vpack.c.bf16 %v953, %v952
  %s962 = scalar_lea.vmem %s1, 384
  %v963 = vld [vmem:[%s962] sm:$0xf]
  %v964 = vld [vmem:[%s962 + $0x4] sm:$0xf]
  %v965 = vld [vmem:[%s962 + $0x8] sm:$0xf]
  %v966 = vld [vmem:[%s962 + $0xc] sm:$0xf]
  %v967 = vld [vmem:[%s962 + $0x10] sm:$0xf]
  %v968 = vld [vmem:[%s962 + $0x14] sm:$0xf]
  %v969 = vld [vmem:[%s962 + $0x18] sm:$0xf]
  %v970 = vld [vmem:[%s962 + $0x1c] sm:$0xf]
  %v971 = vld [vmem:[%s962 + $0x20] sm:$0xf]
  %v972 = vld [vmem:[%s962 + $0x24] sm:$0xf]
  %v973 = vld [vmem:[%s962 + $0x28] sm:$0xf]
  %v974 = vld [vmem:[%s962 + $0x2c] sm:$0xf]
  %v975 = vld [vmem:[%s962 + $0x30] sm:$0xf]
  %v976 = vld [vmem:[%s962 + $0x34] sm:$0xf]
  %v977 = vld [vmem:[%s962 + $0x38] sm:$0xf]
  %v978 = vld [vmem:[%s962 + $0x3c] sm:$0xf]
  %v995 = vunpack.c.l.b16 %v963
  %v996 = vunpack.c.l.b16 %v964
  %v997 = vunpack.c.l.b16 %v965
  %v998 = vunpack.c.l.b16 %v966
  %v999 = vunpack.c.l.b16 %v967
  %v1000 = vunpack.c.l.b16 %v968
  %v1001 = vunpack.c.l.b16 %v969
  %v1002 = vunpack.c.l.b16 %v970
  %v1003 = vunpack.c.l.b16 %v971
  %v1004 = vunpack.c.l.b16 %v972
  %v1005 = vunpack.c.l.b16 %v973
  %v1006 = vunpack.c.l.b16 %v974
  %v1007 = vunpack.c.l.b16 %v975
  %v1008 = vunpack.c.l.b16 %v976
  %v1009 = vunpack.c.l.b16 %v977
  %v1010 = vunpack.c.l.b16 %v978
  %v1011 = vpack.c.b16 %v996, %v995
  %v1012 = vpack.c.b16 %v998, %v997
  %v1013 = vpack.c.b16 %v1000, %v999
  %v1014 = vpack.c.b16 %v1002, %v1001
  %v1015 = vpack.c.b16 %v1004, %v1003
  %v1016 = vpack.c.b16 %v1006, %v1005
  %v1017 = vpack.c.b16 %v1008, %v1007
  %v1018 = vpack.c.b16 %v1010, %v1009
  %1027 = vmatpush.bf16.msra.mxu0 %v1018
  %1028 = vmatpush.bf16.msra.mxu0 %v1017
  %1029 = vmatpush.bf16.msra.mxu0 %v1016
  %1030 = vmatpush.bf16.msra.mxu0 %v1015
  %1031 = vmatpush.bf16.msra.mxu0 %v1014
  %1032 = vmatpush.bf16.msra.mxu0 %v1013
  %1033 = vmatpush.bf16.msra.mxu0 %v1012
  %1034 = vmatpush.bf16.msra.mxu0 %v1011
  %1035 = vmatmul.bf16.gmra.mxu0 %v954
  %v1036 = vpop.f32.mrf.mxu0
  %v1037 = vadd.f32 0.0, %v1036
  %v1038 = vpop.f32.mrf.mxu0
  %v1039 = vadd.f32 0.0, %v1038
  %1040 = vmatmul.bf16.gmra.mxu0 %v955
  %v1041 = vpop.f32.mrf.mxu0
  %v1042 = vadd.f32 0.0, %v1041
  %v1043 = vpop.f32.mrf.mxu0
  %v1044 = vadd.f32 0.0, %v1043
  %1045 = vmatmul.bf16.gmra.mxu0 %v956
  %v1046 = vpop.f32.mrf.mxu0
  %v1047 = vadd.f32 0.0, %v1046
  %v1048 = vpop.f32.mrf.mxu0
  %v1049 = vadd.f32 0.0, %v1048
  %1050 = vmatmul.bf16.gmra.mxu0 %v957
  %v1051 = vpop.f32.mrf.mxu0
  %v1052 = vadd.f32 0.0, %v1051
  %v1053 = vpop.f32.mrf.mxu0
  %v1054 = vadd.f32 0.0, %v1053
  %1055 = vmatmul.bf16.gmra.mxu0 %v958
  %v1056 = vpop.f32.mrf.mxu0
  %v1057 = vadd.f32 0.0, %v1056
  %v1058 = vpop.f32.mrf.mxu0
  %v1059 = vadd.f32 0.0, %v1058
  %1060 = vmatmul.bf16.gmra.mxu0 %v959
  %v1061 = vpop.f32.mrf.mxu0
  %v1062 = vadd.f32 0.0, %v1061
  %v1063 = vpop.f32.mrf.mxu0
  %v1064 = vadd.f32 0.0, %v1063
  %1065 = vmatmul.bf16.gmra.mxu0 %v960
  %v1066 = vpop.f32.mrf.mxu0
  %v1067 = vadd.f32 0.0, %v1066
  %v1068 = vpop.f32.mrf.mxu0
  %v1069 = vadd.f32 0.0, %v1068
  %1070 = vmatmul.bf16.gmra.mxu0 %v961
  %v1071 = vpop.f32.mrf.mxu0
  %v1072 = vadd.f32 0.0, %v1071
  %v1073 = vpop.f32.mrf.mxu0
  %v1074 = vadd.f32 0.0, %v1073
  %1075 = vdwg.mxu0
  %v1076 = vadd.f32 %v921, %v1037
  %v1077 = vadd.f32 %v922, %v1039
  %v1078 = vadd.f32 %v923, %v1042
  %v1079 = vadd.f32 %v924, %v1044
  %v1080 = vadd.f32 %v925, %v1047
  %v1081 = vadd.f32 %v926, %v1049
  %v1082 = vadd.f32 %v927, %v1052
  %v1083 = vadd.f32 %v928, %v1054
  %v1084 = vadd.f32 %v929, %v1057
  %v1085 = vadd.f32 %v930, %v1059
  %v1086 = vadd.f32 %v931, %v1062
  %v1087 = vadd.f32 %v932, %v1064
  %v1088 = vadd.f32 %v933, %v1067
  %v1089 = vadd.f32 %v934, %v1069
  %v1090 = vadd.f32 %v935, %v1072
  %v1091 = vadd.f32 %v936, %v1074
  %v1092 = vld [vmem:[%s937 + $0x1] sm:$0xff]
  %v1093 = vld [vmem:[%s937 + $0x11] sm:$0xff]
  %v1094 = vld [vmem:[%s937 + $0x21] sm:$0xff]
  %v1095 = vld [vmem:[%s937 + $0x31] sm:$0xff]
  %v1096 = vld [vmem:[%s937 + $0x41] sm:$0xff]
  %v1097 = vld [vmem:[%s937 + $0x51] sm:$0xff]
  %v1098 = vld [vmem:[%s937 + $0x61] sm:$0xff]
  %v1099 = vld [vmem:[%s937 + $0x71] sm:$0xff]
  %v1100 = vld [vmem:[%s937 + $0xa1] sm:$0xff]
  %v1101 = vld [vmem:[%s937 + $0xb1] sm:$0xff]
  %v1102 = vld [vmem:[%s937 + $0xc1] sm:$0xff]
  %v1103 = vld [vmem:[%s937 + $0xd1] sm:$0xff]
  %v1104 = vld [vmem:[%s937 + $0xe1] sm:$0xff]
  %v1105 = vld [vmem:[%s937 + $0xf1] sm:$0xff]
  %v1106 = vld [vmem:[%s937 + $0x101] sm:$0xff]
  %v1107 = vld [vmem:[%s937 + $0x111] sm:$0xff]
  %v1108 = vpack.c.bf16 %v1093, %v1092
  %v1109 = vpack.c.bf16 %v1095, %v1094
  %v1110 = vpack.c.bf16 %v1097, %v1096
  %v1111 = vpack.c.bf16 %v1099, %v1098
  %v1112 = vpack.c.bf16 %v1101, %v1100
  %v1113 = vpack.c.bf16 %v1103, %v1102
  %v1114 = vpack.c.bf16 %v1105, %v1104
  %v1115 = vpack.c.bf16 %v1107, %v1106
  %s1116 = scalar_lea.vmem %s1, 448
  %v1117 = vld [vmem:[%s1116] sm:$0xf]
  %v1118 = vld [vmem:[%s1116 + $0x4] sm:$0xf]
  %v1119 = vld [vmem:[%s1116 + $0x8] sm:$0xf]
  %v1120 = vld [vmem:[%s1116 + $0xc] sm:$0xf]
  %v1121 = vld [vmem:[%s1116 + $0x10] sm:$0xf]
  %v1122 = vld [vmem:[%s1116 + $0x14] sm:$0xf]
  %v1123 = vld [vmem:[%s1116 + $0x18] sm:$0xf]
  %v1124 = vld [vmem:[%s1116 + $0x1c] sm:$0xf]
  %v1125 = vld [vmem:[%s1116 + $0x20] sm:$0xf]
  %v1126 = vld [vmem:[%s1116 + $0x24] sm:$0xf]
  %v1127 = vld [vmem:[%s1116 + $0x28] sm:$0xf]
  %v1128 = vld [vmem:[%s1116 + $0x2c] sm:$0xf]
  %v1129 = vld [vmem:[%s1116 + $0x30] sm:$0xf]
  %v1130 = vld [vmem:[%s1116 + $0x34] sm:$0xf]
  %v1131 = vld [vmem:[%s1116 + $0x38] sm:$0xf]
  %v1132 = vld [vmem:[%s1116 + $0x3c] sm:$0xf]
  %v1149 = vunpack.c.l.b16 %v1117
  %v1150 = vunpack.c.l.b16 %v1118
  %v1151 = vunpack.c.l.b16 %v1119
  %v1152 = vunpack.c.l.b16 %v1120
  %v1153 = vunpack.c.l.b16 %v1121
  %v1154 = vunpack.c.l.b16 %v1122
  %v1155 = vunpack.c.l.b16 %v1123
  %v1156 = vunpack.c.l.b16 %v1124
  %v1157 = vunpack.c.l.b16 %v1125
  %v1158 = vunpack.c.l.b16 %v1126
  %v1159 = vunpack.c.l.b16 %v1127
  %v1160 = vunpack.c.l.b16 %v1128
  %v1161 = vunpack.c.l.b16 %v1129
  %v1162 = vunpack.c.l.b16 %v1130
  %v1163 = vunpack.c.l.b16 %v1131
  %v1164 = vunpack.c.l.b16 %v1132
  %v1165 = vpack.c.b16 %v1150, %v1149
  %v1166 = vpack.c.b16 %v1152, %v1151
  %v1167 = vpack.c.b16 %v1154, %v1153
  %v1168 = vpack.c.b16 %v1156, %v1155
  %v1169 = vpack.c.b16 %v1158, %v1157
  %v1170 = vpack.c.b16 %v1160, %v1159
  %v1171 = vpack.c.b16 %v1162, %v1161
  %v1172 = vpack.c.b16 %v1164, %v1163
  %1181 = vmatpush.bf16.msra.mxu0 %v1172
  %1182 = vmatpush.bf16.msra.mxu0 %v1171
  %1183 = vmatpush.bf16.msra.mxu0 %v1170
  %1184 = vmatpush.bf16.msra.mxu0 %v1169
  %1185 = vmatpush.bf16.msra.mxu0 %v1168
  %1186 = vmatpush.bf16.msra.mxu0 %v1167
  %1187 = vmatpush.bf16.msra.mxu0 %v1166
  %1188 = vmatpush.bf16.msra.mxu0 %v1165
  %1189 = vmatmul.bf16.gmra.mxu0 %v1108
  %v1190 = vpop.f32.mrf.mxu0
  %v1191 = vadd.f32 0.0, %v1190
  %v1192 = vpop.f32.mrf.mxu0
  %v1193 = vadd.f32 0.0, %v1192
  %1194 = vmatmul.bf16.gmra.mxu0 %v1109
  %v1195 = vpop.f32.mrf.mxu0
  %v1196 = vadd.f32 0.0, %v1195
  %v1197 = vpop.f32.mrf.mxu0
  %v1198 = vadd.f32 0.0, %v1197
  %1199 = vmatmul.bf16.gmra.mxu0 %v1110
  %v1200 = vpop.f32.mrf.mxu0
  %v1201 = vadd.f32 0.0, %v1200
  %v1202 = vpop.f32.mrf.mxu0
  %v1203 = vadd.f32 0.0, %v1202
  %1204 = vmatmul.bf16.gmra.mxu0 %v1111
  %v1205 = vpop.f32.mrf.mxu0
  %v1206 = vadd.f32 0.0, %v1205
  %v1207 = vpop.f32.mrf.mxu0
  %v1208 = vadd.f32 0.0, %v1207
  %1209 = vmatmul.bf16.gmra.mxu0 %v1112
  %v1210 = vpop.f32.mrf.mxu0
  %v1211 = vadd.f32 0.0, %v1210
  %v1212 = vpop.f32.mrf.mxu0
  %v1213 = vadd.f32 0.0, %v1212
  %1214 = vmatmul.bf16.gmra.mxu0 %v1113
  %v1215 = vpop.f32.mrf.mxu0
  %v1216 = vadd.f32 0.0, %v1215
  %v1217 = vpop.f32.mrf.mxu0
  %v1218 = vadd.f32 0.0, %v1217
  %1219 = vmatmul.bf16.gmra.mxu0 %v1114
  %v1220 = vpop.f32.mrf.mxu0
  %v1221 = vadd.f32 0.0, %v1220
  %v1222 = vpop.f32.mrf.mxu0
  %v1223 = vadd.f32 0.0, %v1222
  %1224 = vmatmul.bf16.gmra.mxu0 %v1115
  %v1225 = vpop.f32.mrf.mxu0
  %v1226 = vadd.f32 0.0, %v1225
  %v1227 = vpop.f32.mrf.mxu0
  %v1228 = vadd.f32 0.0, %v1227
  %1229 = vdwg.mxu0
  %v1230 = vadd.f32 %v1076, %v1191
  %v1231 = vadd.f32 %v1077, %v1193
  %v1232 = vadd.f32 %v1078, %v1196
  %v1233 = vadd.f32 %v1079, %v1198
  %v1234 = vadd.f32 %v1080, %v1201
  %v1235 = vadd.f32 %v1081, %v1203
  %v1236 = vadd.f32 %v1082, %v1206
  %v1237 = vadd.f32 %v1083, %v1208
  %v1238 = vadd.f32 %v1084, %v1211
  %v1239 = vadd.f32 %v1085, %v1213
  %v1240 = vadd.f32 %v1086, %v1216
  %v1241 = vadd.f32 %v1087, %v1218
  %v1242 = vadd.f32 %v1088, %v1221
  %v1243 = vadd.f32 %v1089, %v1223
  %v1244 = vadd.f32 %v1090, %v1226
  %v1245 = vadd.f32 %v1091, %v1228
  %v1246 = vld [vmem:[%s937 + $0x2] sm:$0xff]
  %v1247 = vld [vmem:[%s937 + $0x12] sm:$0xff]
  %v1248 = vld [vmem:[%s937 + $0x22] sm:$0xff]
  %v1249 = vld [vmem:[%s937 + $0x32] sm:$0xff]
  %v1250 = vld [vmem:[%s937 + $0x42] sm:$0xff]
  %v1251 = vld [vmem:[%s937 + $0x52] sm:$0xff]
  %v1252 = vld [vmem:[%s937 + $0x62] sm:$0xff]
  %v1253 = vld [vmem:[%s937 + $0x72] sm:$0xff]
  %v1254 = vld [vmem:[%s937 + $0xa2] sm:$0xff]
  %v1255 = vld [vmem:[%s937 + $0xb2] sm:$0xff]
  %v1256 = vld [vmem:[%s937 + $0xc2] sm:$0xff]
  %v1257 = vld [vmem:[%s937 + $0xd2] sm:$0xff]
  %v1258 = vld [vmem:[%s937 + $0xe2] sm:$0xff]
  %v1259 = vld [vmem:[%s937 + $0xf2] sm:$0xff]
  %v1260 = vld [vmem:[%s937 + $0x102] sm:$0xff]
  %v1261 = vld [vmem:[%s937 + $0x112] sm:$0xff]
  %v1262 = vpack.c.bf16 %v1247, %v1246
  %v1263 = vpack.c.bf16 %v1249, %v1248
  %v1264 = vpack.c.bf16 %v1251, %v1250
  %v1265 = vpack.c.bf16 %v1253, %v1252
  %v1266 = vpack.c.bf16 %v1255, %v1254
  %v1267 = vpack.c.bf16 %v1257, %v1256
  %v1268 = vpack.c.bf16 %v1259, %v1258
  %v1269 = vpack.c.bf16 %v1261, %v1260
  %s1270 = scalar_lea.vmem %s1, 512
  %v1271 = vld [vmem:[%s1270] sm:$0xf]
  %v1272 = vld [vmem:[%s1270 + $0x4] sm:$0xf]
  %v1273 = vld [vmem:[%s1270 + $0x8] sm:$0xf]
  %v1274 = vld [vmem:[%s1270 + $0xc] sm:$0xf]
  %v1275 = vld [vmem:[%s1270 + $0x10] sm:$0xf]
  %v1276 = vld [vmem:[%s1270 + $0x14] sm:$0xf]
  %v1277 = vld [vmem:[%s1270 + $0x18] sm:$0xf]
  %v1278 = vld [vmem:[%s1270 + $0x1c] sm:$0xf]
  %v1279 = vld [vmem:[%s1270 + $0x20] sm:$0xf]
  %v1280 = vld [vmem:[%s1270 + $0x24] sm:$0xf]
  %v1281 = vld [vmem:[%s1270 + $0x28] sm:$0xf]
  %v1282 = vld [vmem:[%s1270 + $0x2c] sm:$0xf]
  %v1283 = vld [vmem:[%s1270 + $0x30] sm:$0xf]
  %v1284 = vld [vmem:[%s1270 + $0x34] sm:$0xf]
  %v1285 = vld [vmem:[%s1270 + $0x38] sm:$0xf]
  %v1286 = vld [vmem:[%s1270 + $0x3c] sm:$0xf]
  %v1303 = vunpack.c.l.b16 %v1271
  %v1304 = vunpack.c.l.b16 %v1272
  %v1305 = vunpack.c.l.b16 %v1273
  %v1306 = vunpack.c.l.b16 %v1274
  %v1307 = vunpack.c.l.b16 %v1275
  %v1308 = vunpack.c.l.b16 %v1276
  %v1309 = vunpack.c.l.b16 %v1277
  %v1310 = vunpack.c.l.b16 %v1278
  %v1311 = vunpack.c.l.b16 %v1279
  %v1312 = vunpack.c.l.b16 %v1280
  %v1313 = vunpack.c.l.b16 %v1281
  %v1314 = vunpack.c.l.b16 %v1282
  %v1315 = vunpack.c.l.b16 %v1283
  %v1316 = vunpack.c.l.b16 %v1284
  %v1317 = vunpack.c.l.b16 %v1285
  %v1318 = vunpack.c.l.b16 %v1286
  %v1319 = vpack.c.b16 %v1304, %v1303
  %v1320 = vpack.c.b16 %v1306, %v1305
  %v1321 = vpack.c.b16 %v1308, %v1307
  %v1322 = vpack.c.b16 %v1310, %v1309
  %v1323 = vpack.c.b16 %v1312, %v1311
  %v1324 = vpack.c.b16 %v1314, %v1313
  %v1325 = vpack.c.b16 %v1316, %v1315
  %v1326 = vpack.c.b16 %v1318, %v1317
  %1335 = vmatpush.bf16.msra.mxu0 %v1326
  %1336 = vmatpush.bf16.msra.mxu0 %v1325
  %1337 = vmatpush.bf16.msra.mxu0 %v1324
  %1338 = vmatpush.bf16.msra.mxu0 %v1323
  %1339 = vmatpush.bf16.msra.mxu0 %v1322
  %1340 = vmatpush.bf16.msra.mxu0 %v1321
  %1341 = vmatpush.bf16.msra.mxu0 %v1320
  %1342 = vmatpush.bf16.msra.mxu0 %v1319
  %1343 = vmatmul.bf16.gmra.mxu0 %v1262
  %v1344 = vpop.f32.mrf.mxu0
  %v1345 = vadd.f32 0.0, %v1344
  %v1346 = vpop.f32.mrf.mxu0
  %v1347 = vadd.f32 0.0, %v1346
  %1348 = vmatmul.bf16.gmra.mxu0 %v1263
  %v1349 = vpop.f32.mrf.mxu0
  %v1350 = vadd.f32 0.0, %v1349
  %v1351 = vpop.f32.mrf.mxu0
  %v1352 = vadd.f32 0.0, %v1351
  %1353 = vmatmul.bf16.gmra.mxu0 %v1264
  %v1354 = vpop.f32.mrf.mxu0
  %v1355 = vadd.f32 0.0, %v1354
  %v1356 = vpop.f32.mrf.mxu0
  %v1357 = vadd.f32 0.0, %v1356
  %1358 = vmatmul.bf16.gmra.mxu0 %v1265
  %v1359 = vpop.f32.mrf.mxu0
  %v1360 = vadd.f32 0.0, %v1359
  %v1361 = vpop.f32.mrf.mxu0
  %v1362 = vadd.f32 0.0, %v1361
  %1363 = vmatmul.bf16.gmra.mxu0 %v1266
  %v1364 = vpop.f32.mrf.mxu0
  %v1365 = vadd.f32 0.0, %v1364
  %v1366 = vpop.f32.mrf.mxu0
  %v1367 = vadd.f32 0.0, %v1366
  %1368 = vmatmul.bf16.gmra.mxu0 %v1267
  %v1369 = vpop.f32.mrf.mxu0
  %v1370 = vadd.f32 0.0, %v1369
  %v1371 = vpop.f32.mrf.mxu0
  %v1372 = vadd.f32 0.0, %v1371
  %1373 = vmatmul.bf16.gmra.mxu0 %v1268
  %v1374 = vpop.f32.mrf.mxu0
  %v1375 = vadd.f32 0.0, %v1374
  %v1376 = vpop.f32.mrf.mxu0
  %v1377 = vadd.f32 0.0, %v1376
  %1378 = vmatmul.bf16.gmra.mxu0 %v1269
  %v1379 = vpop.f32.mrf.mxu0
  %v1380 = vadd.f32 0.0, %v1379
  %v1381 = vpop.f32.mrf.mxu0
  %v1382 = vadd.f32 0.0, %v1381
  %1383 = vdwg.mxu0
  %v1384 = vadd.f32 %v1230, %v1345
  %v1385 = vadd.f32 %v1231, %v1347
  %v1386 = vadd.f32 %v1232, %v1350
  %v1387 = vadd.f32 %v1233, %v1352
  %v1388 = vadd.f32 %v1234, %v1355
  %v1389 = vadd.f32 %v1235, %v1357
  %v1390 = vadd.f32 %v1236, %v1360
  %v1391 = vadd.f32 %v1237, %v1362
  %v1392 = vadd.f32 %v1238, %v1365
  %v1393 = vadd.f32 %v1239, %v1367
  %v1394 = vadd.f32 %v1240, %v1370
  %v1395 = vadd.f32 %v1241, %v1372
  %v1396 = vadd.f32 %v1242, %v1375
  %v1397 = vadd.f32 %v1243, %v1377
  %v1398 = vadd.f32 %v1244, %v1380
  %v1399 = vadd.f32 %v1245, %v1382
  %v1400 = vld [vmem:[%s9] sm:$0xff]
  %v1401 = vld [vmem:[%s9 + $0x8] sm:$0xff]
  %v1402 = vld [vmem:[%s9 + $0x10] sm:$0xff]
  %v1403 = vld [vmem:[%s9 + $0x18] sm:$0xf]
  %vm1404 = vcmask 228352
  %v1406 = vsel %vm1404, %v1384, 0
  %v1409 = vsel %vm1404, %v1385, 0
  %v1412 = vsel %vm1404, %v1386, 0
  %v1415 = vsel %vm1404, %v1387, 0
  %v1418 = vsel %vm1404, %v1388, 0
  %v1421 = vsel %vm1404, %v1389, 0
  %v1424 = vsel %vm1404, %v1390, 0
  %v1427 = vsel %vm1404, %v1391, 0
  %v1430 = vsel %vm1404, %v1392, 0
  %v1433 = vsel %vm1404, %v1393, 0
  %v1436 = vsel %vm1404, %v1394, 0
  %v1439 = vsel %vm1404, %v1395, 0
  %v1442 = vsel %vm1404, %v1396, 0
  %v1445 = vsel %vm1404, %v1397, 0
  %v1448 = vsel %vm1404, %v1398, 0
  %v1451 = vsel %vm1404, %v1399, 0
  %vm1453 = vcmask 1043456
  %v1455 = vsel %vm1453, %v1403, 0
  %1457 = vmatpush.msra.mxu0 0.0
  %1458 = vmatpush.msra.mxu0 0.0
  %1459 = vmatpush.msra.mxu0 0.0
  %1460 = vmatpush.msra.mxu0 0.0
  %1461 = vmatpush.msra.mxu0 0.0
  %1462 = vmatpush.msra.mxu0 0.0
  %1463 = vmatpush.msra.mxu0 0.0
  %1464 = vmatpush.msra.mxu0 0.0
  %1465 = vmatpush.msra.mxu0 0.0
  %1466 = vmatpush.msra.mxu0 0.0
  %1467 = vmatpush.msra.mxu0 0.0
  %1468 = vmatpush.msra.mxu0 0.0
  %1469 = vmatpush.msra.mxu0 %v1455
  %1470 = vmatpush.msra.mxu0 %v1402
  %1471 = vmatpush.msra.mxu0 %v1401
  %1472 = vmatpush.msra.mxu0 %v1400
  %1473 = vmatmul.f32.gmra.mxu0 %v1406
  %v1474 = vpop.f32.mrf.mxu0
  %v1475 = vadd.f32 0.0, %v1474
  %1476 = vmatmul.f32.gmra.mxu0 %v1409
  %v1477 = vpop.f32.mrf.mxu0
  %v1478 = vadd.f32 0.0, %v1477
  %1479 = vmatmul.f32.gmra.mxu0 %v1412
  %v1480 = vpop.f32.mrf.mxu0
  %v1481 = vadd.f32 0.0, %v1480
  %1482 = vmatmul.f32.gmra.mxu0 %v1415
  %v1483 = vpop.f32.mrf.mxu0
  %v1484 = vadd.f32 0.0, %v1483
  %1485 = vmatmul.f32.gmra.mxu0 %v1418
  %v1486 = vpop.f32.mrf.mxu0
  %v1487 = vadd.f32 0.0, %v1486
  %1488 = vmatmul.f32.gmra.mxu0 %v1421
  %v1489 = vpop.f32.mrf.mxu0
  %v1490 = vadd.f32 0.0, %v1489
  %1491 = vmatmul.f32.gmra.mxu0 %v1424
  %v1492 = vpop.f32.mrf.mxu0
  %v1493 = vadd.f32 0.0, %v1492
  %1494 = vmatmul.f32.gmra.mxu0 %v1427
  %v1495 = vpop.f32.mrf.mxu0
  %v1496 = vadd.f32 0.0, %v1495
  %1497 = vmatmul.f32.gmra.mxu0 %v1430
  %v1498 = vpop.f32.mrf.mxu0
  %v1499 = vadd.f32 0.0, %v1498
  %1500 = vmatmul.f32.gmra.mxu0 %v1433
  %v1501 = vpop.f32.mrf.mxu0
  %v1502 = vadd.f32 0.0, %v1501
  %1503 = vmatmul.f32.gmra.mxu0 %v1436
  %v1504 = vpop.f32.mrf.mxu0
  %v1505 = vadd.f32 0.0, %v1504
  %1506 = vmatmul.f32.gmra.mxu0 %v1439
  %v1507 = vpop.f32.mrf.mxu0
  %v1508 = vadd.f32 0.0, %v1507
  %1509 = vmatmul.f32.gmra.mxu0 %v1442
  %v1510 = vpop.f32.mrf.mxu0
  %v1511 = vadd.f32 0.0, %v1510
  %1512 = vmatmul.f32.gmra.mxu0 %v1445
  %v1513 = vpop.f32.mrf.mxu0
  %v1514 = vadd.f32 0.0, %v1513
  %1515 = vmatmul.f32.gmra.mxu0 %v1448
  %v1516 = vpop.f32.mrf.mxu0
  %v1517 = vadd.f32 0.0, %v1516
  %1518 = vmatmul.f32.gmra.mxu0 %v1451
  %v1519 = vpop.f32.mrf.mxu0
  %v1520 = vadd.f32 0.0, %v1519
  %1521 = vdwg.mxu0
  %vm1522 = vcmask 31744
  %v1523 = vsel %vm1522, %v1475, 0.0
  %v1524 = vsel %vm1522, %v1478, 0.0
  %v1525 = vadd.f32 %v1523, %v1524
  %v1526 = vsel %vm1522, %v1481, 0.0
  %v1527 = vadd.f32 %v1525, %v1526
  %v1528 = vsel %vm1522, %v1484, 0.0
  %v1529 = vadd.f32 %v1527, %v1528
  %v1530 = vsel %vm1522, %v1487, 0.0
  %v1531 = vadd.f32 %v1529, %v1530
  %v1532 = vsel %vm1522, %v1490, 0.0
  %v1533 = vadd.f32 %v1531, %v1532
  %v1534 = vsel %vm1522, %v1493, 0.0
  %v1535 = vadd.f32 %v1533, %v1534
  %v1536 = vsel %vm1522, %v1496, 0.0
  %v1537 = vadd.f32 %v1535, %v1536
  %v1538 = vsel %vm1522, %v1499, 0.0
  %v1539 = vadd.f32 %v1537, %v1538
  %v1540 = vsel %vm1522, %v1502, 0.0
  %v1541 = vadd.f32 %v1539, %v1540
  %v1542 = vsel %vm1522, %v1505, 0.0
  %v1543 = vadd.f32 %v1541, %v1542
  %v1544 = vsel %vm1522, %v1508, 0.0
  %v1545 = vadd.f32 %v1543, %v1544
  %v1546 = vsel %vm1522, %v1511, 0.0
  %v1547 = vadd.f32 %v1545, %v1546
  %v1548 = vsel %vm1522, %v1514, 0.0
  %v1549 = vadd.f32 %v1547, %v1548
  %v1550 = vsel %vm1522, %v1517, 0.0
  %v1551 = vadd.f32 %v1549, %v1550
  %v1552 = vsel %vm1522, %v1520, 0.0
  %v1553 = vadd.f32 %v1551, %v1552
  %v1554 = vrot.slane %v1553, 4
  %v1555 = vadd.f32 %v1553, %v1554
  %v1556 = vrot.slane %v1555, 2
  %v1557 = vadd.f32 %v1555, %v1556
  %v1558 = vrot.slane %v1557, 1
  %v1559 = vadd.f32 %v1557, %v1558
  %v1560 = vmul.f32 %v1559, 0.0011160715
  %v1561 = vmul.f32 %v1384, %v1384
  %v1562 = vmul.f32 %v1385, %v1385
  %v1563 = vmul.f32 %v1386, %v1386
  %v1564 = vmul.f32 %v1387, %v1387
  %v1565 = vmul.f32 %v1388, %v1388
  %v1566 = vmul.f32 %v1389, %v1389
  %v1567 = vmul.f32 %v1390, %v1390
  %v1568 = vmul.f32 %v1391, %v1391
  %v1569 = vmul.f32 %v1392, %v1392
  %v1570 = vmul.f32 %v1393, %v1393
  %v1571 = vmul.f32 %v1394, %v1394
  %v1572 = vmul.f32 %v1395, %v1395
  %v1573 = vmul.f32 %v1396, %v1396
  %v1574 = vmul.f32 %v1397, %v1397
  %v1575 = vmul.f32 %v1398, %v1398
  %v1576 = vmul.f32 %v1399, %v1399
  %v1578 = vsel %vm1404, %v1561, 0
  %v1581 = vsel %vm1404, %v1562, 0
  %v1584 = vsel %vm1404, %v1563, 0
  %v1587 = vsel %vm1404, %v1564, 0
  %v1590 = vsel %vm1404, %v1565, 0
  %v1593 = vsel %vm1404, %v1566, 0
  %v1596 = vsel %vm1404, %v1567, 0
  %v1599 = vsel %vm1404, %v1568, 0
  %v1602 = vsel %vm1404, %v1569, 0
  %v1605 = vsel %vm1404, %v1570, 0
  %v1608 = vsel %vm1404, %v1571, 0
  %v1611 = vsel %vm1404, %v1572, 0
  %v1614 = vsel %vm1404, %v1573, 0
  %v1617 = vsel %vm1404, %v1574, 0
  %v1620 = vsel %vm1404, %v1575, 0
  %v1623 = vsel %vm1404, %v1576, 0
  %1625 = vmatpush.msra.mxu0 0.0
  %1626 = vmatpush.msra.mxu0 0.0
  %1627 = vmatpush.msra.mxu0 0.0
  %1628 = vmatpush.msra.mxu0 0.0
  %1629 = vmatpush.msra.mxu0 0.0
  %1630 = vmatpush.msra.mxu0 0.0
  %1631 = vmatpush.msra.mxu0 0.0
  %1632 = vmatpush.msra.mxu0 0.0
  %1633 = vmatpush.msra.mxu0 0.0
  %1634 = vmatpush.msra.mxu0 0.0
  %1635 = vmatpush.msra.mxu0 0.0
  %1636 = vmatpush.msra.mxu0 0.0
  %1637 = vmatpush.msra.mxu0 %v1455
  %1638 = vmatpush.msra.mxu0 %v1402
  %1639 = vmatpush.msra.mxu0 %v1401
  %1640 = vmatpush.msra.mxu0 %v1400
  %1641 = vmatmul.f32.gmra.mxu0 %v1578
  %v1642 = vpop.f32.mrf.mxu0
  %v1643 = vadd.f32 0.0, %v1642
  %1644 = vmatmul.f32.gmra.mxu0 %v1581
  %v1645 = vpop.f32.mrf.mxu0
  %v1646 = vadd.f32 0.0, %v1645
  %1647 = vmatmul.f32.gmra.mxu0 %v1584
  %v1648 = vpop.f32.mrf.mxu0
  %v1649 = vadd.f32 0.0, %v1648
  %1650 = vmatmul.f32.gmra.mxu0 %v1587
  %v1651 = vpop.f32.mrf.mxu0
  %v1652 = vadd.f32 0.0, %v1651
  %1653 = vmatmul.f32.gmra.mxu0 %v1590
  %v1654 = vpop.f32.mrf.mxu0
  %v1655 = vadd.f32 0.0, %v1654
  %1656 = vmatmul.f32.gmra.mxu0 %v1593
  %v1657 = vpop.f32.mrf.mxu0
  %v1658 = vadd.f32 0.0, %v1657
  %1659 = vmatmul.f32.gmra.mxu0 %v1596
  %v1660 = vpop.f32.mrf.mxu0
  %v1661 = vadd.f32 0.0, %v1660
  %1662 = vmatmul.f32.gmra.mxu0 %v1599
  %v1663 = vpop.f32.mrf.mxu0
  %v1664 = vadd.f32 0.0, %v1663
  %1665 = vmatmul.f32.gmra.mxu0 %v1602
  %v1666 = vpop.f32.mrf.mxu0
  %v1667 = vadd.f32 0.0, %v1666
  %1668 = vmatmul.f32.gmra.mxu0 %v1605
  %v1669 = vpop.f32.mrf.mxu0
  %v1670 = vadd.f32 0.0, %v1669
  %1671 = vmatmul.f32.gmra.mxu0 %v1608
  %v1672 = vpop.f32.mrf.mxu0
  %v1673 = vadd.f32 0.0, %v1672
  %1674 = vmatmul.f32.gmra.mxu0 %v1611
  %v1675 = vpop.f32.mrf.mxu0
  %v1676 = vadd.f32 0.0, %v1675
  %1677 = vmatmul.f32.gmra.mxu0 %v1614
  %v1678 = vpop.f32.mrf.mxu0
  %v1679 = vadd.f32 0.0, %v1678
  %1680 = vmatmul.f32.gmra.mxu0 %v1617
  %v1681 = vpop.f32.mrf.mxu0
  %v1682 = vadd.f32 0.0, %v1681
  %1683 = vmatmul.f32.gmra.mxu0 %v1620
  %v1684 = vpop.f32.mrf.mxu0
  %v1685 = vadd.f32 0.0, %v1684
  %1686 = vmatmul.f32.gmra.mxu0 %v1623
  %v1687 = vpop.f32.mrf.mxu0
  %v1688 = vadd.f32 0.0, %v1687
  %1689 = vdwg.mxu0
  %v1690 = vsel %vm1522, %v1643, 0.0
  %v1691 = vsel %vm1522, %v1646, 0.0
  %v1692 = vadd.f32 %v1690, %v1691
  %v1693 = vsel %vm1522, %v1649, 0.0
  %v1694 = vadd.f32 %v1692, %v1693
  %v1695 = vsel %vm1522, %v1652, 0.0
  %v1696 = vadd.f32 %v1694, %v1695
  %v1697 = vsel %vm1522, %v1655, 0.0
  %v1698 = vadd.f32 %v1696, %v1697
  %v1699 = vsel %vm1522, %v1658, 0.0
  %v1700 = vadd.f32 %v1698, %v1699
  %v1701 = vsel %vm1522, %v1661, 0.0
  %v1702 = vadd.f32 %v1700, %v1701
  %v1703 = vsel %vm1522, %v1664, 0.0
  %v1704 = vadd.f32 %v1702, %v1703
  %v1705 = vsel %vm1522, %v1667, 0.0
  %v1706 = vadd.f32 %v1704, %v1705
  %v1707 = vsel %vm1522, %v1670, 0.0
  %v1708 = vadd.f32 %v1706, %v1707
  %v1709 = vsel %vm1522, %v1673, 0.0
  %v1710 = vadd.f32 %v1708, %v1709
  %v1711 = vsel %vm1522, %v1676, 0.0
  %v1712 = vadd.f32 %v1710, %v1711
  %v1713 = vsel %vm1522, %v1679, 0.0
  %v1714 = vadd.f32 %v1712, %v1713
  %v1715 = vsel %vm1522, %v1682, 0.0
  %v1716 = vadd.f32 %v1714, %v1715
  %v1717 = vsel %vm1522, %v1685, 0.0
  %v1718 = vadd.f32 %v1716, %v1717
  %v1719 = vsel %vm1522, %v1688, 0.0
  %v1720 = vadd.f32 %v1718, %v1719
  %v1721 = vrot.slane %v1720, 4
  %v1722 = vadd.f32 %v1720, %v1721
  %v1723 = vrot.slane %v1722, 2
  %v1724 = vadd.f32 %v1722, %v1723
  %v1725 = vrot.slane %v1724, 1
  %v1726 = vadd.f32 %v1724, %v1725
  %v1727 = vmul.f32 %v1726, 0.0011160715
  %v1728 = vmul.f32 %v1560, %v1560
  %v1729 = vsub.f32 %v1727, %v1728
  %v1730 = vld [vmem:[%s5] sm:$0x1]
  %v1731 = vadd.f32 %v1729, 1e-05
  %v1732 = vrsqrt.pop %v1731
  %v1733 = vmul.f32 %v1732, %v1731
  %v1734 = vmul.f32 %v1733, %v1732
  %v1735 = vmul.f32 0.5, %v1734
  %v1736 = vsub.f32 1.5, %v1735
  %v1737 = vmul.f32 %v1732, %v1736
  %vm1738 = vweird.f32 %v1731
  %vm1739 = vweird.f32 %v1732
  %vm1740 = vmor %vm1738, %vm1739
  %v1741 = vsel %vm1740, %v1732, %v1737
  %v1742 = vmul.f32 %v1730, %v1741
  %v1743 = vld [vmem:[%s6] sm:$0x1]
  %v1744 = vmul.f32 %v1560, %v1742
  %v1745 = vsub.f32 %v1743, %v1744
  %v1747 = vperm.slane %v1742, 0
  %v1748 = vld [vmem:[%s10] sm:$0xf]
  %v1749 = vsel %vm1522, %v1747, 0
  %v1752 = vsel %vm1453, %v1748, 0
  %1754 = vmatpush.msra.mxu0 0.0
  %1755 = vmatpush.msra.mxu0 0.0
  %1756 = vmatpush.msra.mxu0 0.0
  %1757 = vmatpush.msra.mxu0 0.0
  %1758 = vmatpush.msra.mxu0 0.0
  %1759 = vmatpush.msra.mxu0 0.0
  %1760 = vmatpush.msra.mxu0 0.0
  %1761 = vmatpush.msra.mxu0 0.0
  %1762 = vmatpush.msra.mxu0 0.0
  %1763 = vmatpush.msra.mxu0 0.0
  %1764 = vmatpush.msra.mxu0 0.0
  %1765 = vmatpush.msra.mxu0 0.0
  %1766 = vmatpush.msra.mxu0 0.0
  %1767 = vmatpush.msra.mxu0 0.0
  %1768 = vmatpush.msra.mxu0 0.0
  %1769 = vmatpush.msra.mxu0 %v1752
  %1770 = vmatmul.f32.gmra.mxu0 %v1749
  %v1771 = vpop.f32.mrf.mxu0
  %v1772 = vadd.f32 0.0, %v1771
  %1773 = vmatmul.f32.gmra.mxu0 %v1749
  %v1774 = vpop.f32.mrf.mxu0
  %v1775 = vadd.f32 0.0, %v1774
  %1776 = vmatmul.f32.gmra.mxu0 %v1749
  %v1777 = vpop.f32.mrf.mxu0
  %v1778 = vadd.f32 0.0, %v1777
  %1779 = vmatmul.f32.gmra.mxu0 %v1749
  %v1780 = vpop.f32.mrf.mxu0
  %v1781 = vadd.f32 0.0, %v1780
  %1782 = vmatmul.f32.gmra.mxu0 %v1749
  %v1783 = vpop.f32.mrf.mxu0
  %v1784 = vadd.f32 0.0, %v1783
  %1785 = vmatmul.f32.gmra.mxu0 %v1749
  %v1786 = vpop.f32.mrf.mxu0
  %v1787 = vadd.f32 0.0, %v1786
  %1788 = vmatmul.f32.gmra.mxu0 %v1749
  %v1789 = vpop.f32.mrf.mxu0
  %v1790 = vadd.f32 0.0, %v1789
  %1791 = vmatmul.f32.gmra.mxu0 %v1749
  %v1792 = vpop.f32.mrf.mxu0
  %v1793 = vadd.f32 0.0, %v1792
  %1794 = vmatmul.f32.gmra.mxu0 %v1749
  %v1795 = vpop.f32.mrf.mxu0
  %v1796 = vadd.f32 0.0, %v1795
  %1797 = vmatmul.f32.gmra.mxu0 %v1749
  %v1798 = vpop.f32.mrf.mxu0
  %v1799 = vadd.f32 0.0, %v1798
  %1800 = vmatmul.f32.gmra.mxu0 %v1749
  %v1801 = vpop.f32.mrf.mxu0
  %v1802 = vadd.f32 0.0, %v1801
  %1803 = vmatmul.f32.gmra.mxu0 %v1749
  %v1804 = vpop.f32.mrf.mxu0
  %v1805 = vadd.f32 0.0, %v1804
  %1806 = vmatmul.f32.gmra.mxu0 %v1749
  %v1807 = vpop.f32.mrf.mxu0
  %v1808 = vadd.f32 0.0, %v1807
  %1809 = vmatmul.f32.gmra.mxu0 %v1749
  %v1810 = vpop.f32.mrf.mxu0
  %v1811 = vadd.f32 0.0, %v1810
  %1812 = vmatmul.f32.gmra.mxu0 %v1749
  %v1813 = vpop.f32.mrf.mxu0
  %v1814 = vadd.f32 0.0, %v1813
  %1815 = vmatmul.f32.gmra.mxu0 %v1749
  %v1816 = vpop.f32.mrf.mxu0
  %v1817 = vadd.f32 0.0, %v1816
  %1818 = vdwg.mxu0
  %v1820 = vperm.slane %v1745, 0
  %v1821 = vsel %vm1522, %v1820, 0
  %1823 = vmatpush.msra.mxu0 0.0
  %1824 = vmatpush.msra.mxu0 0.0
  %1825 = vmatpush.msra.mxu0 0.0
  %1826 = vmatpush.msra.mxu0 0.0
  %1827 = vmatpush.msra.mxu0 0.0
  %1828 = vmatpush.msra.mxu0 0.0
  %1829 = vmatpush.msra.mxu0 0.0
  %1830 = vmatpush.msra.mxu0 0.0
  %1831 = vmatpush.msra.mxu0 0.0
  %1832 = vmatpush.msra.mxu0 0.0
  %1833 = vmatpush.msra.mxu0 0.0
  %1834 = vmatpush.msra.mxu0 0.0
  %1835 = vmatpush.msra.mxu0 0.0
  %1836 = vmatpush.msra.mxu0 0.0
  %1837 = vmatpush.msra.mxu0 0.0
  %1838 = vmatpush.msra.mxu0 %v1752
  %1839 = vmatmul.f32.gmra.mxu0 %v1821
  %v1840 = vpop.f32.mrf.mxu0
  %v1841 = vadd.f32 0.0, %v1840
  %1842 = vmatmul.f32.gmra.mxu0 %v1821
  %v1843 = vpop.f32.mrf.mxu0
  %v1844 = vadd.f32 0.0, %v1843
  %1845 = vmatmul.f32.gmra.mxu0 %v1821
  %v1846 = vpop.f32.mrf.mxu0
  %v1847 = vadd.f32 0.0, %v1846
  %1848 = vmatmul.f32.gmra.mxu0 %v1821
  %v1849 = vpop.f32.mrf.mxu0
  %v1850 = vadd.f32 0.0, %v1849
  %1851 = vmatmul.f32.gmra.mxu0 %v1821
  %v1852 = vpop.f32.mrf.mxu0
  %v1853 = vadd.f32 0.0, %v1852
  %1854 = vmatmul.f32.gmra.mxu0 %v1821
  %v1855 = vpop.f32.mrf.mxu0
  %v1856 = vadd.f32 0.0, %v1855
  %1857 = vmatmul.f32.gmra.mxu0 %v1821
  %v1858 = vpop.f32.mrf.mxu0
  %v1859 = vadd.f32 0.0, %v1858
  %1860 = vmatmul.f32.gmra.mxu0 %v1821
  %v1861 = vpop.f32.mrf.mxu0
  %v1862 = vadd.f32 0.0, %v1861
  %1863 = vmatmul.f32.gmra.mxu0 %v1821
  %v1864 = vpop.f32.mrf.mxu0
  %v1865 = vadd.f32 0.0, %v1864
  %1866 = vmatmul.f32.gmra.mxu0 %v1821
  %v1867 = vpop.f32.mrf.mxu0
  %v1868 = vadd.f32 0.0, %v1867
  %1869 = vmatmul.f32.gmra.mxu0 %v1821
  %v1870 = vpop.f32.mrf.mxu0
  %v1871 = vadd.f32 0.0, %v1870
  %1872 = vmatmul.f32.gmra.mxu0 %v1821
  %v1873 = vpop.f32.mrf.mxu0
  %v1874 = vadd.f32 0.0, %v1873
  %1875 = vmatmul.f32.gmra.mxu0 %v1821
  %v1876 = vpop.f32.mrf.mxu0
  %v1877 = vadd.f32 0.0, %v1876
  %1878 = vmatmul.f32.gmra.mxu0 %v1821
  %v1879 = vpop.f32.mrf.mxu0
  %v1880 = vadd.f32 0.0, %v1879
  %1881 = vmatmul.f32.gmra.mxu0 %v1821
  %v1882 = vpop.f32.mrf.mxu0
  %v1883 = vadd.f32 0.0, %v1882
  %1884 = vmatmul.f32.gmra.mxu0 %v1821
  %v1885 = vpop.f32.mrf.mxu0
  %v1886 = vadd.f32 0.0, %v1885
  %1887 = vdwg.mxu0
  %v1888 = vmul.f32 %v1384, %v1772
  %v1889 = vmul.f32 %v1385, %v1775
  %v1890 = vmul.f32 %v1386, %v1778
  %v1891 = vmul.f32 %v1387, %v1781
  %v1892 = vmul.f32 %v1388, %v1784
  %v1893 = vmul.f32 %v1389, %v1787
  %v1894 = vmul.f32 %v1390, %v1790
  %v1895 = vmul.f32 %v1391, %v1793
  %v1896 = vmul.f32 %v1392, %v1796
  %v1897 = vmul.f32 %v1393, %v1799
  %v1898 = vmul.f32 %v1394, %v1802
  %v1899 = vmul.f32 %v1395, %v1805
  %v1900 = vmul.f32 %v1396, %v1808
  %v1901 = vmul.f32 %v1397, %v1811
  %v1902 = vmul.f32 %v1398, %v1814
  %v1903 = vmul.f32 %v1399, %v1817
  %v1904 = vadd.f32 %v1888, %v1841
  %v1905 = vadd.f32 %v1889, %v1844
  %v1906 = vadd.f32 %v1890, %v1847
  %v1907 = vadd.f32 %v1891, %v1850
  %v1908 = vadd.f32 %v1892, %v1853
  %v1909 = vadd.f32 %v1893, %v1856
  %v1910 = vadd.f32 %v1894, %v1859
  %v1911 = vadd.f32 %v1895, %v1862
  %v1912 = vadd.f32 %v1896, %v1865
  %v1913 = vadd.f32 %v1897, %v1868
  %v1914 = vadd.f32 %v1898, %v1871
  %v1915 = vadd.f32 %v1899, %v1874
  %v1916 = vadd.f32 %v1900, %v1877
  %v1917 = vadd.f32 %v1901, %v1880
  %v1918 = vadd.f32 %v1902, %v1883
  %v1919 = vadd.f32 %v1903, %v1886
  %v1920 = vmax.f32 %v1904, 0.0
  %v1921 = vmax.f32 %v1905, 0.0
  %v1922 = vmax.f32 %v1906, 0.0
  %v1923 = vmax.f32 %v1907, 0.0
  %v1924 = vmax.f32 %v1908, 0.0
  %v1925 = vmax.f32 %v1909, 0.0
  %v1926 = vmax.f32 %v1910, 0.0
  %v1927 = vmax.f32 %v1911, 0.0
  %v1928 = vmax.f32 %v1912, 0.0
  %v1929 = vmax.f32 %v1913, 0.0
  %v1930 = vmax.f32 %v1914, 0.0
  %v1931 = vmax.f32 %v1915, 0.0
  %v1932 = vmax.f32 %v1916, 0.0
  %v1933 = vmax.f32 %v1917, 0.0
  %v1934 = vmax.f32 %v1918, 0.0
  %v1935 = vmax.f32 %v1919, 0.0
  %1936 = vst.msk [vmem:[#allocation2] sm:$0xff] %vm1404, 0.0
  %vm1937 = vcmask 222208
  %1938 = vst.msk [vmem:[#allocation2 + $0x8] sm:$0x3] %vm1937, 0.0
  %1939 = vst.msk [vmem:[#allocation2 + $0x10] sm:$0xff] %vm1404, 0.0
  %1940 = vst.msk [vmem:[#allocation2 + $0x18] sm:$0x3] %vm1937, 0.0
  %1941 = vst.msk [vmem:[#allocation2 + $0x20] sm:$0xff] %vm1404, 0.0
  %1942 = vst.msk [vmem:[#allocation2 + $0x28] sm:$0x3] %vm1937, 0.0
  %1943 = vst.msk [vmem:[#allocation2 + $0x30] sm:$0xff] %vm1404, 0.0
  %1944 = vst.msk [vmem:[#allocation2 + $0x38] sm:$0x3] %vm1937, 0.0
  %1945 = vst.msk [vmem:[#allocation2 + $0x40] sm:$0xff] %vm1404, 0.0
  %1946 = vst.msk [vmem:[#allocation2 + $0x48] sm:$0x3] %vm1937, 0.0
  %1947 = vst.msk [vmem:[#allocation2 + $0x50] sm:$0xff] %vm1404, 0.0
  %1948 = vst.msk [vmem:[#allocation2 + $0x58] sm:$0x3] %vm1937, 0.0
  %1949 = vst.msk [vmem:[#allocation2 + $0x60] sm:$0xff] %vm1404, 0.0
  %1950 = vst.msk [vmem:[#allocation2 + $0x68] sm:$0x3] %vm1937, 0.0
  %1951 = vst.msk [vmem:[#allocation2 + $0x70] sm:$0xff] %vm1404, 0.0
  %1952 = vst.msk [vmem:[#allocation2 + $0x78] sm:$0x3] %vm1937, 0.0
  %1953 = vst.msk [vmem:[#allocation2 + $0x80] sm:$0xff] %vm1404, 0.0
  %1954 = vst.msk [vmem:[#allocation2 + $0x88] sm:$0x3] %vm1937, 0.0
  %1955 = vst.msk [vmem:[#allocation2 + $0x90] sm:$0xff] %vm1404, 0.0
  %1956 = vst.msk [vmem:[#allocation2 + $0x98] sm:$0x3] %vm1937, 0.0
  %1957 = vst.msk [vmem:[#allocation2 + $0xa0] sm:$0xff] %vm1404, 0.0
  %1958 = vst.msk [vmem:[#allocation2 + $0xa8] sm:$0x3] %vm1937, 0.0
  %1959 = vst.msk [vmem:[#allocation2 + $0xb0] sm:$0xff] %vm1404, 0.0
  %1960 = vst.msk [vmem:[#allocation2 + $0xb8] sm:$0x3] %vm1937, 0.0
  %1961 = vst.msk [vmem:[#allocation2 + $0xc0] sm:$0xff] %vm1404, 0.0
  %1962 = vst.msk [vmem:[#allocation2 + $0xc8] sm:$0x3] %vm1937, 0.0
  %1963 = vst.msk [vmem:[#allocation2 + $0xd0] sm:$0xff] %vm1404, 0.0
  %1964 = vst.msk [vmem:[#allocation2 + $0xd8] sm:$0x3] %vm1937, 0.0
  %1965 = vst.msk [vmem:[#allocation2 + $0xe0] sm:$0xff] %vm1404, 0.0
  %1966 = vst.msk [vmem:[#allocation2 + $0xe8] sm:$0x3] %vm1937, 0.0
  %1967 = vst.msk [vmem:[#allocation2 + $0xf0] sm:$0xff] %vm1404, 0.0
  %1968 = vst.msk [vmem:[#allocation2 + $0xf8] sm:$0x3] %vm1937, 0.0
  %1969 = vst.msk [vmem:[#allocation2 + $0x100] sm:$0xff] %vm1404, 0.0
  %1970 = vst.msk [vmem:[#allocation2 + $0x108] sm:$0x3] %vm1937, 0.0
  %1971 = vst.msk [vmem:[#allocation2 + $0x110] sm:$0xff] %vm1404, 0.0
  %1972 = vst.msk [vmem:[#allocation2 + $0x118] sm:$0x3] %vm1937, 0.0
  %1973 = vst.msk [vmem:[#allocation2 + $0x120] sm:$0xff] %vm1404, 0.0
  %1974 = vst.msk [vmem:[#allocation2 + $0x128] sm:$0x3] %vm1937, 0.0
  %1975 = vst.msk [vmem:[#allocation2 + $0x130] sm:$0xff] %vm1404, 0.0
  %1976 = vst.msk [vmem:[#allocation2 + $0x138] sm:$0x3] %vm1937, 0.0
  %s1977 = scalar_lea.vmem [#allocation2], 16
  %1978 = vst.msk [vmem:[%s1977 + $0x1] sm:$0xff] %vm1404, %v1920
  %1979 = vst.msk [vmem:[%s1977 + $0x11] sm:$0xff] %vm1404, %v1921
  %1980 = vst.msk [vmem:[%s1977 + $0x21] sm:$0xff] %vm1404, %v1922
  %1981 = vst.msk [vmem:[%s1977 + $0x31] sm:$0xff] %vm1404, %v1923
  %1982 = vst.msk [vmem:[%s1977 + $0x41] sm:$0xff] %vm1404, %v1924
  %1983 = vst.msk [vmem:[%s1977 + $0x51] sm:$0xff] %vm1404, %v1925
  %1984 = vst.msk [vmem:[%s1977 + $0x61] sm:$0xff] %vm1404, %v1926
  %1985 = vst.msk [vmem:[%s1977 + $0x71] sm:$0xff] %vm1404, %v1927
  %1986 = vst.msk [vmem:[%s1977 + $0xa1] sm:$0xff] %vm1404, %v1928
  %1987 = vst.msk [vmem:[%s1977 + $0xb1] sm:$0xff] %vm1404, %v1929
  %1988 = vst.msk [vmem:[%s1977 + $0xc1] sm:$0xff] %vm1404, %v1930
  %1989 = vst.msk [vmem:[%s1977 + $0xd1] sm:$0xff] %vm1404, %v1931
  %1990 = vst.msk [vmem:[%s1977 + $0xe1] sm:$0xff] %vm1404, %v1932
  %1991 = vst.msk [vmem:[%s1977 + $0xf1] sm:$0xff] %vm1404, %v1933
  %1992 = vst.msk [vmem:[%s1977 + $0x101] sm:$0xff] %vm1404, %v1934
  %1993 = vst.msk [vmem:[%s1977 + $0x111] sm:$0xff] %vm1404, %v1935
  %v1994 = vld [vmem:[#allocation2] sm:$0xff]
  %v1995 = vld [vmem:[#allocation2 + $0x10] sm:$0xff]
  %v1996 = vld [vmem:[#allocation2 + $0x20] sm:$0xff]
  %v1997 = vld [vmem:[#allocation2 + $0x30] sm:$0xff]
  %v1998 = vld [vmem:[#allocation2 + $0x40] sm:$0xff]
  %v1999 = vld [vmem:[#allocation2 + $0x50] sm:$0xff]
  %v2000 = vld [vmem:[#allocation2 + $0x60] sm:$0xff]
  %v2001 = vld [vmem:[#allocation2 + $0x70] sm:$0xff]
  %v2002 = vld [vmem:[#allocation2 + $0xa0] sm:$0xff]
  %v2003 = vld [vmem:[#allocation2 + $0xb0] sm:$0xff]
  %v2004 = vld [vmem:[#allocation2 + $0xc0] sm:$0xff]
  %v2005 = vld [vmem:[#allocation2 + $0xd0] sm:$0xff]
  %v2006 = vld [vmem:[#allocation2 + $0xe0] sm:$0xff]
  %v2007 = vld [vmem:[#allocation2 + $0xf0] sm:$0xff]
  %v2008 = vld [vmem:[#allocation2 + $0x100] sm:$0xff]
  %v2009 = vld [vmem:[#allocation2 + $0x110] sm:$0xff]
  %v2010 = vpack.c.bf16 %v1995, %v1994
  %v2011 = vpack.c.bf16 %v1997, %v1996
  %v2012 = vpack.c.bf16 %v1999, %v1998
  %v2013 = vpack.c.bf16 %v2001, %v2000
  %v2014 = vpack.c.bf16 %v2003, %v2002
  %v2015 = vpack.c.bf16 %v2005, %v2004
  %v2016 = vpack.c.bf16 %v2007, %v2006
  %v2017 = vpack.c.bf16 %v2009, %v2008
  %v2018 = vld [vmem:[%s2] sm:$0xf]
  %v2019 = vld [vmem:[%s2 + $0x4] sm:$0xf]
  %v2020 = vld [vmem:[%s2 + $0x8] sm:$0xf]
  %v2021 = vld [vmem:[%s2 + $0xc] sm:$0x3]
  %v2022 = vld [vmem:[#allocation2 + $0x1] sm:$0xff]
  %v2023 = vld [vmem:[#allocation2 + $0x11] sm:$0xff]
  %v2024 = vld [vmem:[#allocation2 + $0x21] sm:$0xff]
  %v2025 = vld [vmem:[#allocation2 + $0x31] sm:$0xff]
  %v2026 = vld [vmem:[#allocation2 + $0x41] sm:$0xff]
  %v2027 = vld [vmem:[#allocation2 + $0x51] sm:$0xff]
  %v2028 = vld [vmem:[#allocation2 + $0x61] sm:$0xff]
  %v2029 = vld [vmem:[#allocation2 + $0x71] sm:$0xff]
  %v2030 = vld [vmem:[#allocation2 + $0xa1] sm:$0xff]
  %v2031 = vld [vmem:[#allocation2 + $0xb1] sm:$0xff]
  %v2032 = vld [vmem:[#allocation2 + $0xc1] sm:$0xff]
  %v2033 = vld [vmem:[#allocation2 + $0xd1] sm:$0xff]
  %v2034 = vld [vmem:[#allocation2 + $0xe1] sm:$0xff]
  %v2035 = vld [vmem:[#allocation2 + $0xf1] sm:$0xff]
  %v2036 = vld [vmem:[#allocation2 + $0x101] sm:$0xff]
  %v2037 = vld [vmem:[#allocation2 + $0x111] sm:$0xff]
  %v2038 = vpack.c.bf16 %v2023, %v2022
  %v2039 = vpack.c.bf16 %v2025, %v2024
  %v2040 = vpack.c.bf16 %v2027, %v2026
  %v2041 = vpack.c.bf16 %v2029, %v2028
  %v2042 = vpack.c.bf16 %v2031, %v2030
  %v2043 = vpack.c.bf16 %v2033, %v2032
  %v2044 = vpack.c.bf16 %v2035, %v2034
  %v2045 = vpack.c.bf16 %v2037, %v2036
  %s2046 = scalar_lea.vmem %s2, 16
  %v2047 = vld [vmem:[%s2046] sm:$0xf]
  %v2048 = vld [vmem:[%s2046 + $0x4] sm:$0xf]
  %v2049 = vld [vmem:[%s2046 + $0x8] sm:$0xf]
  %v2050 = vld [vmem:[%s2046 + $0xc] sm:$0x3]
  %v2055 = vunpack.c.l.b16 %v2047
  %v2056 = vunpack.c.l.b16 %v2048
  %v2057 = vunpack.c.l.b16 %v2049
  %v2058 = vunpack.c.l.b16 %v2050
  %v2059 = vpack.c.b16 %v2056, %v2055
  %v2060 = vpack.c.b16 %v2058, %v2057
  %v2063 = vsel %vm1404, %v2038, 0
  %v2066 = vsel %vm1404, %v2039, 0
  %v2069 = vsel %vm1404, %v2040, 0
  %v2072 = vsel %vm1404, %v2041, 0
  %v2075 = vsel %vm1404, %v2042, 0
  %v2078 = vsel %vm1404, %v2043, 0
  %v2081 = vsel %vm1404, %v2044, 0
  %v2084 = vsel %vm1404, %v2045, 0
  %vm2086 = vcmask 1045504
  %v2088 = vsel %vm2086, %v2060, 0
  %2090 = vmatpush.bf16.msra.mxu0 0
  %2091 = vmatpush.bf16.msra.mxu0 0
  %2092 = vmatpush.bf16.msra.mxu0 0
  %2093 = vmatpush.bf16.msra.mxu0 0
  %2094 = vmatpush.bf16.msra.mxu0 0
  %2095 = vmatpush.bf16.msra.mxu0 0
  %2096 = vmatpush.bf16.msra.mxu0 %v2088
  %2097 = vmatpush.bf16.msra.mxu0 %v2059
  %2098 = vmatmul.bf16.gmra.mxu0 %v2063
  %v2099 = vpop.f32.mrf.mxu0
  %v2100 = vadd.f32 0.0, %v2099
  %v2101 = vpop.f32.mrf.mxu0
  %v2102 = vadd.f32 0.0, %v2101
  %2103 = vmatmul.bf16.gmra.mxu0 %v2066
  %v2104 = vpop.f32.mrf.mxu0
  %v2105 = vadd.f32 0.0, %v2104
  %v2106 = vpop.f32.mrf.mxu0
  %v2107 = vadd.f32 0.0, %v2106
  %2108 = vmatmul.bf16.gmra.mxu0 %v2069
  %v2109 = vpop.f32.mrf.mxu0
  %v2110 = vadd.f32 0.0, %v2109
  %v2111 = vpop.f32.mrf.mxu0
  %v2112 = vadd.f32 0.0, %v2111
  %2113 = vmatmul.bf16.gmra.mxu0 %v2072
  %v2114 = vpop.f32.mrf.mxu0
  %v2115 = vadd.f32 0.0, %v2114
  %v2116 = vpop.f32.mrf.mxu0
  %v2117 = vadd.f32 0.0, %v2116
  %2118 = vmatmul.bf16.gmra.mxu0 %v2075
  %v2119 = vpop.f32.mrf.mxu0
  %v2120 = vadd.f32 0.0, %v2119
  %v2121 = vpop.f32.mrf.mxu0
  %v2122 = vadd.f32 0.0, %v2121
  %2123 = vmatmul.bf16.gmra.mxu0 %v2078
  %v2124 = vpop.f32.mrf.mxu0
  %v2125 = vadd.f32 0.0, %v2124
  %v2126 = vpop.f32.mrf.mxu0
  %v2127 = vadd.f32 0.0, %v2126
  %2128 = vmatmul.bf16.gmra.mxu0 %v2081
  %v2129 = vpop.f32.mrf.mxu0
  %v2130 = vadd.f32 0.0, %v2129
  %v2131 = vpop.f32.mrf.mxu0
  %v2132 = vadd.f32 0.0, %v2131
  %2133 = vmatmul.bf16.gmra.mxu0 %v2084
  %v2134 = vpop.f32.mrf.mxu0
  %v2135 = vadd.f32 0.0, %v2134
  %v2136 = vpop.f32.mrf.mxu0
  %v2137 = vadd.f32 0.0, %v2136
  %2138 = vdwg.mxu0
  %v2143 = vunpack.c.l.b16 %v2018
  %v2144 = vunpack.c.l.b16 %v2019
  %v2145 = vunpack.c.l.b16 %v2020
  %v2146 = vunpack.c.l.b16 %v2021
  %v2147 = vpack.c.b16 %v2144, %v2143
  %v2148 = vpack.c.b16 %v2146, %v2145
  %v2151 = vsel %vm1404, %v2010, 0
  %v2154 = vsel %vm1404, %v2011, 0
  %v2157 = vsel %vm1404, %v2012, 0
  %v2160 = vsel %vm1404, %v2013, 0
  %v2163 = vsel %vm1404, %v2014, 0
  %v2166 = vsel %vm1404, %v2015, 0
  %v2169 = vsel %vm1404, %v2016, 0
  %v2172 = vsel %vm1404, %v2017, 0
  %v2175 = vsel %vm2086, %v2148, 0
  %2177 = vmatpush.bf16.msra.mxu0 0
  %2178 = vmatpush.bf16.msra.mxu0 0
  %2179 = vmatpush.bf16.msra.mxu0 0
  %2180 = vmatpush.bf16.msra.mxu0 0
  %2181 = vmatpush.bf16.msra.mxu0 0
  %2182 = vmatpush.bf16.msra.mxu0 0
  %2183 = vmatpush.bf16.msra.mxu0 %v2175
  %2184 = vmatpush.bf16.msra.mxu0 %v2147
  %2185 = vmatmul.bf16.gmra.mxu0 %v2151
  %v2186 = vpop.f32.mrf.mxu0
  %v2187 = vadd.f32 %v2100, %v2186
  %v2188 = vpop.f32.mrf.mxu0
  %v2189 = vadd.f32 %v2102, %v2188
  %2190 = vmatmul.bf16.gmra.mxu0 %v2154
  %v2191 = vpop.f32.mrf.mxu0
  %v2192 = vadd.f32 %v2105, %v2191
  %v2193 = vpop.f32.mrf.mxu0
  %v2194 = vadd.f32 %v2107, %v2193
  %2195 = vmatmul.bf16.gmra.mxu0 %v2157
  %v2196 = vpop.f32.mrf.mxu0
  %v2197 = vadd.f32 %v2110, %v2196
  %v2198 = vpop.f32.mrf.mxu0
  %v2199 = vadd.f32 %v2112, %v2198
  %2200 = vmatmul.bf16.gmra.mxu0 %v2160
  %v2201 = vpop.f32.mrf.mxu0
  %v2202 = vadd.f32 %v2115, %v2201
  %v2203 = vpop.f32.mrf.mxu0
  %v2204 = vadd.f32 %v2117, %v2203
  %2205 = vmatmul.bf16.gmra.mxu0 %v2163
  %v2206 = vpop.f32.mrf.mxu0
  %v2207 = vadd.f32 %v2120, %v2206
  %v2208 = vpop.f32.mrf.mxu0
  %v2209 = vadd.f32 %v2122, %v2208
  %2210 = vmatmul.bf16.gmra.mxu0 %v2166
  %v2211 = vpop.f32.mrf.mxu0
  %v2212 = vadd.f32 %v2125, %v2211
  %v2213 = vpop.f32.mrf.mxu0
  %v2214 = vadd.f32 %v2127, %v2213
  %2215 = vmatmul.bf16.gmra.mxu0 %v2169
  %v2216 = vpop.f32.mrf.mxu0
  %v2217 = vadd.f32 %v2130, %v2216
  %v2218 = vpop.f32.mrf.mxu0
  %v2219 = vadd.f32 %v2132, %v2218
  %2220 = vmatmul.bf16.gmra.mxu0 %v2172
  %v2221 = vpop.f32.mrf.mxu0
  %v2222 = vadd.f32 %v2135, %v2221
  %v2223 = vpop.f32.mrf.mxu0
  %v2224 = vadd.f32 %v2137, %v2223
  %2225 = vdwg.mxu0
  %v2226 = vld [vmem:[#allocation2 + $0x2] sm:$0xff]
  %v2227 = vld [vmem:[#allocation2 + $0x12] sm:$0xff]
  %v2228 = vld [vmem:[#allocation2 + $0x22] sm:$0xff]
  %v2229 = vld [vmem:[#allocation2 + $0x32] sm:$0xff]
  %v2230 = vld [vmem:[#allocation2 + $0x42] sm:$0xff]
  %v2231 = vld [vmem:[#allocation2 + $0x52] sm:$0xff]
  %v2232 = vld [vmem:[#allocation2 + $0x62] sm:$0xff]
  %v2233 = vld [vmem:[#allocation2 + $0x72] sm:$0xff]
  %v2234 = vld [vmem:[#allocation2 + $0xa2] sm:$0xff]
  %v2235 = vld [vmem:[#allocation2 + $0xb2] sm:$0xff]
  %v2236 = vld [vmem:[#allocation2 + $0xc2] sm:$0xff]
  %v2237 = vld [vmem:[#allocation2 + $0xd2] sm:$0xff]
  %v2238 = vld [vmem:[#allocation2 + $0xe2] sm:$0xff]
  %v2239 = vld [vmem:[#allocation2 + $0xf2] sm:$0xff]
  %v2240 = vld [vmem:[#allocation2 + $0x102] sm:$0xff]
  %v2241 = vld [vmem:[#allocation2 + $0x112] sm:$0xff]
  %v2242 = vpack.c.bf16 %v2227, %v2226
  %v2243 = vpack.c.bf16 %v2229, %v2228
  %v2244 = vpack.c.bf16 %v2231, %v2230
  %v2245 = vpack.c.bf16 %v2233, %v2232
  %v2246 = vpack.c.bf16 %v2235, %v2234
  %v2247 = vpack.c.bf16 %v2237, %v2236
  %v2248 = vpack.c.bf16 %v2239, %v2238
  %v2249 = vpack.c.bf16 %v2241, %v2240
  %s2250 = scalar_lea.vmem %s2, 32
  %v2251 = vld [vmem:[%s2250] sm:$0xf]
  %v2252 = vld [vmem:[%s2250 + $0x4] sm:$0xf]
  %v2253 = vld [vmem:[%s2250 + $0x8] sm:$0xf]
  %v2254 = vld [vmem:[%s2250 + $0xc] sm:$0x3]
  %v2259 = vunpack.c.l.b16 %v2251
  %v2260 = vunpack.c.l.b16 %v2252
  %v2261 = vunpack.c.l.b16 %v2253
  %v2262 = vunpack.c.l.b16 %v2254
  %v2263 = vpack.c.b16 %v2260, %v2259
  %v2264 = vpack.c.b16 %v2262, %v2261
  %v2267 = vsel %vm1404, %v2242, 0
  %v2270 = vsel %vm1404, %v2243, 0
  %v2273 = vsel %vm1404, %v2244, 0
  %v2276 = vsel %vm1404, %v2245, 0
  %v2279 = vsel %vm1404, %v2246, 0
  %v2282 = vsel %vm1404, %v2247, 0
  %v2285 = vsel %vm1404, %v2248, 0
  %v2288 = vsel %vm1404, %v2249, 0
  %v2291 = vsel %vm2086, %v2264, 0
  %2293 = vmatpush.bf16.msra.mxu0 0
  %2294 = vmatpush.bf16.msra.mxu0 0
  %2295 = vmatpush.bf16.msra.mxu0 0
  %2296 = vmatpush.bf16.msra.mxu0 0
  %2297 = vmatpush.bf16.msra.mxu0 0
  %2298 = vmatpush.bf16.msra.mxu0 0
  %2299 = vmatpush.bf16.msra.mxu0 %v2291
  %2300 = vmatpush.bf16.msra.mxu0 %v2263
  %2301 = vmatmul.bf16.gmra.mxu0 %v2267
  %v2302 = vpop.f32.mrf.mxu0
  %v2303 = vadd.f32 0.0, %v2302
  %v2304 = vpop.f32.mrf.mxu0
  %v2305 = vadd.f32 0.0, %v2304
  %2306 = vmatmul.bf16.gmra.mxu0 %v2270
  %v2307 = vpop.f32.mrf.mxu0
  %v2308 = vadd.f32 0.0, %v2307
  %v2309 = vpop.f32.mrf.mxu0
  %v2310 = vadd.f32 0.0, %v2309
  %2311 = vmatmul.bf16.gmra.mxu0 %v2273
  %v2312 = vpop.f32.mrf.mxu0
  %v2313 = vadd.f32 0.0, %v2312
  %v2314 = vpop.f32.mrf.mxu0
  %v2315 = vadd.f32 0.0, %v2314
  %2316 = vmatmul.bf16.gmra.mxu0 %v2276
  %v2317 = vpop.f32.mrf.mxu0
  %v2318 = vadd.f32 0.0, %v2317
  %v2319 = vpop.f32.mrf.mxu0
  %v2320 = vadd.f32 0.0, %v2319
  %2321 = vmatmul.bf16.gmra.mxu0 %v2279
  %v2322 = vpop.f32.mrf.mxu0
  %v2323 = vadd.f32 0.0, %v2322
  %v2324 = vpop.f32.mrf.mxu0
  %v2325 = vadd.f32 0.0, %v2324
  %2326 = vmatmul.bf16.gmra.mxu0 %v2282
  %v2327 = vpop.f32.mrf.mxu0
  %v2328 = vadd.f32 0.0, %v2327
  %v2329 = vpop.f32.mrf.mxu0
  %v2330 = vadd.f32 0.0, %v2329
  %2331 = vmatmul.bf16.gmra.mxu0 %v2285
  %v2332 = vpop.f32.mrf.mxu0
  %v2333 = vadd.f32 0.0, %v2332
  %v2334 = vpop.f32.mrf.mxu0
  %v2335 = vadd.f32 0.0, %v2334
  %2336 = vmatmul.bf16.gmra.mxu0 %v2288
  %v2337 = vpop.f32.mrf.mxu0
  %v2338 = vadd.f32 0.0, %v2337
  %v2339 = vpop.f32.mrf.mxu0
  %v2340 = vadd.f32 0.0, %v2339
  %2341 = vdwg.mxu0
  %v2342 = vadd.f32 %v2187, %v2303
  %v2343 = vadd.f32 %v2189, %v2305
  %v2344 = vadd.f32 %v2192, %v2308
  %v2345 = vadd.f32 %v2194, %v2310
  %v2346 = vadd.f32 %v2197, %v2313
  %v2347 = vadd.f32 %v2199, %v2315
  %v2348 = vadd.f32 %v2202, %v2318
  %v2349 = vadd.f32 %v2204, %v2320
  %v2350 = vadd.f32 %v2207, %v2323
  %v2351 = vadd.f32 %v2209, %v2325
  %v2352 = vadd.f32 %v2212, %v2328
  %v2353 = vadd.f32 %v2214, %v2330
  %v2354 = vadd.f32 %v2217, %v2333
  %v2355 = vadd.f32 %v2219, %v2335
  %v2356 = vadd.f32 %v2222, %v2338
  %v2357 = vadd.f32 %v2224, %v2340
  %v2358 = vld [vmem:[%s1977] sm:$0xff]
  %v2359 = vld [vmem:[%s1977 + $0x10] sm:$0xff]
  %v2360 = vld [vmem:[%s1977 + $0x20] sm:$0xff]
  %v2361 = vld [vmem:[%s1977 + $0x30] sm:$0xff]
  %v2362 = vld [vmem:[%s1977 + $0x40] sm:$0xff]
  %v2363 = vld [vmem:[%s1977 + $0x50] sm:$0xff]
  %v2364 = vld [vmem:[%s1977 + $0x60] sm:$0xff]
  %v2365 = vld [vmem:[%s1977 + $0x70] sm:$0xff]
  %v2366 = vld [vmem:[%s1977 + $0xa0] sm:$0xff]
  %v2367 = vld [vmem:[%s1977 + $0xb0] sm:$0xff]
  %v2368 = vld [vmem:[%s1977 + $0xc0] sm:$0xff]
  %v2369 = vld [vmem:[%s1977 + $0xd0] sm:$0xff]
  %v2370 = vld [vmem:[%s1977 + $0xe0] sm:$0xff]
  %v2371 = vld [vmem:[%s1977 + $0xf0] sm:$0xff]
  %v2372 = vld [vmem:[%s1977 + $0x100] sm:$0xff]
  %v2373 = vld [vmem:[%s1977 + $0x110] sm:$0xff]
  %v2374 = vpack.c.bf16 %v2359, %v2358
  %v2375 = vpack.c.bf16 %v2361, %v2360
  %v2376 = vpack.c.bf16 %v2363, %v2362
  %v2377 = vpack.c.bf16 %v2365, %v2364
  %v2378 = vpack.c.bf16 %v2367, %v2366
  %v2379 = vpack.c.bf16 %v2369, %v2368
  %v2380 = vpack.c.bf16 %v2371, %v2370
  %v2381 = vpack.c.bf16 %v2373, %v2372
  %s2382 = scalar_lea.vmem %s2, 48
  %v2383 = vld [vmem:[%s2382] sm:$0xf]
  %v2384 = vld [vmem:[%s2382 + $0x4] sm:$0xf]
  %v2385 = vld [vmem:[%s2382 + $0x8] sm:$0xf]
  %v2386 = vld [vmem:[%s2382 + $0xc] sm:$0x3]
  %v2391 = vunpack.c.l.b16 %v2383
  %v2392 = vunpack.c.l.b16 %v2384
  %v2393 = vunpack.c.l.b16 %v2385
  %v2394 = vunpack.c.l.b16 %v2386
  %v2395 = vpack.c.b16 %v2392, %v2391
  %v2396 = vpack.c.b16 %v2394, %v2393
  %v2399 = vsel %vm1404, %v2374, 0
  %v2402 = vsel %vm1404, %v2375, 0
  %v2405 = vsel %vm1404, %v2376, 0
  %v2408 = vsel %vm1404, %v2377, 0
  %v2411 = vsel %vm1404, %v2378, 0
  %v2414 = vsel %vm1404, %v2379, 0
  %v2417 = vsel %vm1404, %v2380, 0
  %v2420 = vsel %vm1404, %v2381, 0
  %v2423 = vsel %vm2086, %v2396, 0
  %2425 = vmatpush.bf16.msra.mxu0 0
  %2426 = vmatpush.bf16.msra.mxu0 0
  %2427 = vmatpush.bf16.msra.mxu0 0
  %2428 = vmatpush.bf16.msra.mxu0 0
  %2429 = vmatpush.bf16.msra.mxu0 0
  %2430 = vmatpush.bf16.msra.mxu0 0
  %2431 = vmatpush.bf16.msra.mxu0 %v2423
  %2432 = vmatpush.bf16.msra.mxu0 %v2395
  %2433 = vmatmul.bf16.gmra.mxu0 %v2399
  %v2434 = vpop.f32.mrf.mxu0
  %v2435 = vadd.f32 0.0, %v2434
  %v2436 = vpop.f32.mrf.mxu0
  %v2437 = vadd.f32 0.0, %v2436
  %2438 = vmatmul.bf16.gmra.mxu0 %v2402
  %v2439 = vpop.f32.mrf.mxu0
  %v2440 = vadd.f32 0.0, %v2439
  %v2441 = vpop.f32.mrf.mxu0
  %v2442 = vadd.f32 0.0, %v2441
  %2443 = vmatmul.bf16.gmra.mxu0 %v2405
  %v2444 = vpop.f32.mrf.mxu0
  %v2445 = vadd.f32 0.0, %v2444
  %v2446 = vpop.f32.mrf.mxu0
  %v2447 = vadd.f32 0.0, %v2446
  %2448 = vmatmul.bf16.gmra.mxu0 %v2408
  %v2449 = vpop.f32.mrf.mxu0
  %v2450 = vadd.f32 0.0, %v2449
  %v2451 = vpop.f32.mrf.mxu0
  %v2452 = vadd.f32 0.0, %v2451
  %2453 = vmatmul.bf16.gmra.mxu0 %v2411
  %v2454 = vpop.f32.mrf.mxu0
  %v2455 = vadd.f32 0.0, %v2454
  %v2456 = vpop.f32.mrf.mxu0
  %v2457 = vadd.f32 0.0, %v2456
  %2458 = vmatmul.bf16.gmra.mxu0 %v2414
  %v2459 = vpop.f32.mrf.mxu0
  %v2460 = vadd.f32 0.0, %v2459
  %v2461 = vpop.f32.mrf.mxu0
  %v2462 = vadd.f32 0.0, %v2461
  %2463 = vmatmul.bf16.gmra.mxu0 %v2417
  %v2464 = vpop.f32.mrf.mxu0
  %v2465 = vadd.f32 0.0, %v2464
  %v2466 = vpop.f32.mrf.mxu0
  %v2467 = vadd.f32 0.0, %v2466
  %2468 = vmatmul.bf16.gmra.mxu0 %v2420
  %v2469 = vpop.f32.mrf.mxu0
  %v2470 = vadd.f32 0.0, %v2469
  %v2471 = vpop.f32.mrf.mxu0
  %v2472 = vadd.f32 0.0, %v2471
  %2473 = vdwg.mxu0
  %v2474 = vadd.f32 %v2342, %v2435
  %v2475 = vadd.f32 %v2343, %v2437
  %v2476 = vadd.f32 %v2344, %v2440
  %v2477 = vadd.f32 %v2345, %v2442
  %v2478 = vadd.f32 %v2346, %v2445
  %v2479 = vadd.f32 %v2347, %v2447
  %v2480 = vadd.f32 %v2348, %v2450
  %v2481 = vadd.f32 %v2349, %v2452
  %v2482 = vadd.f32 %v2350, %v2455
  %v2483 = vadd.f32 %v2351, %v2457
  %v2484 = vadd.f32 %v2352, %v2460
  %v2485 = vadd.f32 %v2353, %v2462
  %v2486 = vadd.f32 %v2354, %v2465
  %v2487 = vadd.f32 %v2355, %v2467
  %v2488 = vadd.f32 %v2356, %v2470
  %v2489 = vadd.f32 %v2357, %v2472
  %v2490 = vld [vmem:[%s1977 + $0x1] sm:$0xff]
  %v2491 = vld [vmem:[%s1977 + $0x11] sm:$0xff]
  %v2492 = vld [vmem:[%s1977 + $0x21] sm:$0xff]
  %v2493 = vld [vmem:[%s1977 + $0x31] sm:$0xff]
  %v2494 = vld [vmem:[%s1977 + $0x41] sm:$0xff]
  %v2495 = vld [vmem:[%s1977 + $0x51] sm:$0xff]
  %v2496 = vld [vmem:[%s1977 + $0x61] sm:$0xff]
  %v2497 = vld [vmem:[%s1977 + $0x71] sm:$0xff]
  %v2498 = vld [vmem:[%s1977 + $0xa1] sm:$0xff]
  %v2499 = vld [vmem:[%s1977 + $0xb1] sm:$0xff]
  %v2500 = vld [vmem:[%s1977 + $0xc1] sm:$0xff]
  %v2501 = vld [vmem:[%s1977 + $0xd1] sm:$0xff]
  %v2502 = vld [vmem:[%s1977 + $0xe1] sm:$0xff]
  %v2503 = vld [vmem:[%s1977 + $0xf1] sm:$0xff]
  %v2504 = vld [vmem:[%s1977 + $0x101] sm:$0xff]
  %v2505 = vld [vmem:[%s1977 + $0x111] sm:$0xff]
  %v2506 = vpack.c.bf16 %v2491, %v2490
  %v2507 = vpack.c.bf16 %v2493, %v2492
  %v2508 = vpack.c.bf16 %v2495, %v2494
  %v2509 = vpack.c.bf16 %v2497, %v2496
  %v2510 = vpack.c.bf16 %v2499, %v2498
  %v2511 = vpack.c.bf16 %v2501, %v2500
  %v2512 = vpack.c.bf16 %v2503, %v2502
  %v2513 = vpack.c.bf16 %v2505, %v2504
  %s2514 = scalar_lea.vmem %s2, 64
  %v2515 = vld [vmem:[%s2514] sm:$0xf]
  %v2516 = vld [vmem:[%s2514 + $0x4] sm:$0xf]
  %v2517 = vld [vmem:[%s2514 + $0x8] sm:$0xf]
  %v2518 = vld [vmem:[%s2514 + $0xc] sm:$0x3]
  %v2523 = vunpack.c.l.b16 %v2515
  %v2524 = vunpack.c.l.b16 %v2516
  %v2525 = vunpack.c.l.b16 %v2517
  %v2526 = vunpack.c.l.b16 %v2518
  %v2527 = vpack.c.b16 %v2524, %v2523
  %v2528 = vpack.c.b16 %v2526, %v2525
  %v2531 = vsel %vm1404, %v2506, 0
  %v2534 = vsel %vm1404, %v2507, 0
  %v2537 = vsel %vm1404, %v2508, 0
  %v2540 = vsel %vm1404, %v2509, 0
  %v2543 = vsel %vm1404, %v2510, 0
  %v2546 = vsel %vm1404, %v2511, 0
  %v2549 = vsel %vm1404, %v2512, 0
  %v2552 = vsel %vm1404, %v2513, 0
  %v2555 = vsel %vm2086, %v2528, 0
  %2557 = vmatpush.bf16.msra.mxu0 0
  %2558 = vmatpush.bf16.msra.mxu0 0
  %2559 = vmatpush.bf16.msra.mxu0 0
  %2560 = vmatpush.bf16.msra.mxu0 0
  %2561 = vmatpush.bf16.msra.mxu0 0
  %2562 = vmatpush.bf16.msra.mxu0 0
  %2563 = vmatpush.bf16.msra.mxu0 %v2555
  %2564 = vmatpush.bf16.msra.mxu0 %v2527
  %2565 = vmatmul.bf16.gmra.mxu0 %v2531
  %v2566 = vpop.f32.mrf.mxu0
  %v2567 = vadd.f32 0.0, %v2566
  %v2568 = vpop.f32.mrf.mxu0
  %v2569 = vadd.f32 0.0, %v2568
  %2570 = vmatmul.bf16.gmra.mxu0 %v2534
  %v2571 = vpop.f32.mrf.mxu0
  %v2572 = vadd.f32 0.0, %v2571
  %v2573 = vpop.f32.mrf.mxu0
  %v2574 = vadd.f32 0.0, %v2573
  %2575 = vmatmul.bf16.gmra.mxu0 %v2537
  %v2576 = vpop.f32.mrf.mxu0
  %v2577 = vadd.f32 0.0, %v2576
  %v2578 = vpop.f32.mrf.mxu0
  %v2579 = vadd.f32 0.0, %v2578
  %2580 = vmatmul.bf16.gmra.mxu0 %v2540
  %v2581 = vpop.f32.mrf.mxu0
  %v2582 = vadd.f32 0.0, %v2581
  %v2583 = vpop.f32.mrf.mxu0
  %v2584 = vadd.f32 0.0, %v2583
  %2585 = vmatmul.bf16.gmra.mxu0 %v2543
  %v2586 = vpop.f32.mrf.mxu0
  %v2587 = vadd.f32 0.0, %v2586
  %v2588 = vpop.f32.mrf.mxu0
  %v2589 = vadd.f32 0.0, %v2588
  %2590 = vmatmul.bf16.gmra.mxu0 %v2546
  %v2591 = vpop.f32.mrf.mxu0
  %v2592 = vadd.f32 0.0, %v2591
  %v2593 = vpop.f32.mrf.mxu0
  %v2594 = vadd.f32 0.0, %v2593
  %2595 = vmatmul.bf16.gmra.mxu0 %v2549
  %v2596 = vpop.f32.mrf.mxu0
  %v2597 = vadd.f32 0.0, %v2596
  %v2598 = vpop.f32.mrf.mxu0
  %v2599 = vadd.f32 0.0, %v2598
  %2600 = vmatmul.bf16.gmra.mxu0 %v2552
  %v2601 = vpop.f32.mrf.mxu0
  %v2602 = vadd.f32 0.0, %v2601
  %v2603 = vpop.f32.mrf.mxu0
  %v2604 = vadd.f32 0.0, %v2603
  %2605 = vdwg.mxu0
  %v2606 = vadd.f32 %v2474, %v2567
  %v2607 = vadd.f32 %v2475, %v2569
  %v2608 = vadd.f32 %v2476, %v2572
  %v2609 = vadd.f32 %v2477, %v2574
  %v2610 = vadd.f32 %v2478, %v2577
  %v2611 = vadd.f32 %v2479, %v2579
  %v2612 = vadd.f32 %v2480, %v2582
  %v2613 = vadd.f32 %v2481, %v2584
  %v2614 = vadd.f32 %v2482, %v2587
  %v2615 = vadd.f32 %v2483, %v2589
  %v2616 = vadd.f32 %v2484, %v2592
  %v2617 = vadd.f32 %v2485, %v2594
  %v2618 = vadd.f32 %v2486, %v2597
  %v2619 = vadd.f32 %v2487, %v2599
  %v2620 = vadd.f32 %v2488, %v2602
  %v2621 = vadd.f32 %v2489, %v2604
  %v2622 = vld [vmem:[%s1977 + $0x2] sm:$0xff]
  %v2623 = vld [vmem:[%s1977 + $0x12] sm:$0xff]
  %v2624 = vld [vmem:[%s1977 + $0x22] sm:$0xff]
  %v2625 = vld [vmem:[%s1977 + $0x32] sm:$0xff]
  %v2626 = vld [vmem:[%s1977 + $0x42] sm:$0xff]
  %v2627 = vld [vmem:[%s1977 + $0x52] sm:$0xff]
  %v2628 = vld [vmem:[%s1977 + $0x62] sm:$0xff]
  %v2629 = vld [vmem:[%s1977 + $0x72] sm:$0xff]
  %v2630 = vld [vmem:[%s1977 + $0xa2] sm:$0xff]
  %v2631 = vld [vmem:[%s1977 + $0xb2] sm:$0xff]
  %v2632 = vld [vmem:[%s1977 + $0xc2] sm:$0xff]
  %v2633 = vld [vmem:[%s1977 + $0xd2] sm:$0xff]
  %v2634 = vld [vmem:[%s1977 + $0xe2] sm:$0xff]
  %v2635 = vld [vmem:[%s1977 + $0xf2] sm:$0xff]
  %v2636 = vld [vmem:[%s1977 + $0x102] sm:$0xff]
  %v2637 = vld [vmem:[%s1977 + $0x112] sm:$0xff]
  %v2638 = vpack.c.bf16 %v2623, %v2622
  %v2639 = vpack.c.bf16 %v2625, %v2624
  %v2640 = vpack.c.bf16 %v2627, %v2626
  %v2641 = vpack.c.bf16 %v2629, %v2628
  %v2642 = vpack.c.bf16 %v2631, %v2630
  %v2643 = vpack.c.bf16 %v2633, %v2632
  %v2644 = vpack.c.bf16 %v2635, %v2634
  %v2645 = vpack.c.bf16 %v2637, %v2636
  %s2646 = scalar_lea.vmem %s2, 80
  %v2647 = vld [vmem:[%s2646] sm:$0xf]
  %v2648 = vld [vmem:[%s2646 + $0x4] sm:$0xf]
  %v2649 = vld [vmem:[%s2646 + $0x8] sm:$0xf]
  %v2650 = vld [vmem:[%s2646 + $0xc] sm:$0x3]
  %v2655 = vunpack.c.l.b16 %v2647
  %v2656 = vunpack.c.l.b16 %v2648
  %v2657 = vunpack.c.l.b16 %v2649
  %v2658 = vunpack.c.l.b16 %v2650
  %v2659 = vpack.c.b16 %v2656, %v2655
  %v2660 = vpack.c.b16 %v2658, %v2657
  %v2663 = vsel %vm1404, %v2638, 0
  %v2666 = vsel %vm1404, %v2639, 0
  %v2669 = vsel %vm1404, %v2640, 0
  %v2672 = vsel %vm1404, %v2641, 0
  %v2675 = vsel %vm1404, %v2642, 0
  %v2678 = vsel %vm1404, %v2643, 0
  %v2681 = vsel %vm1404, %v2644, 0
  %v2684 = vsel %vm1404, %v2645, 0
  %v2687 = vsel %vm2086, %v2660, 0
  %2689 = vmatpush.bf16.msra.mxu0 0
  %2690 = vmatpush.bf16.msra.mxu0 0
  %2691 = vmatpush.bf16.msra.mxu0 0
  %2692 = vmatpush.bf16.msra.mxu0 0
  %2693 = vmatpush.bf16.msra.mxu0 0
  %2694 = vmatpush.bf16.msra.mxu0 0
  %2695 = vmatpush.bf16.msra.mxu0 %v2687
  %2696 = vmatpush.bf16.msra.mxu0 %v2659
  %2697 = vmatmul.bf16.gmra.mxu0 %v2663
  %v2698 = vpop.f32.mrf.mxu0
  %v2699 = vadd.f32 0.0, %v2698
  %v2700 = vpop.f32.mrf.mxu0
  %v2701 = vadd.f32 0.0, %v2700
  %2702 = vmatmul.bf16.gmra.mxu0 %v2666
  %v2703 = vpop.f32.mrf.mxu0
  %v2704 = vadd.f32 0.0, %v2703
  %v2705 = vpop.f32.mrf.mxu0
  %v2706 = vadd.f32 0.0, %v2705
  %2707 = vmatmul.bf16.gmra.mxu0 %v2669
  %v2708 = vpop.f32.mrf.mxu0
  %v2709 = vadd.f32 0.0, %v2708
  %v2710 = vpop.f32.mrf.mxu0
  %v2711 = vadd.f32 0.0, %v2710
  %2712 = vmatmul.bf16.gmra.mxu0 %v2672
  %v2713 = vpop.f32.mrf.mxu0
  %v2714 = vadd.f32 0.0, %v2713
  %v2715 = vpop.f32.mrf.mxu0
  %v2716 = vadd.f32 0.0, %v2715
  %2717 = vmatmul.bf16.gmra.mxu0 %v2675
  %v2718 = vpop.f32.mrf.mxu0
  %v2719 = vadd.f32 0.0, %v2718
  %v2720 = vpop.f32.mrf.mxu0
  %v2721 = vadd.f32 0.0, %v2720
  %2722 = vmatmul.bf16.gmra.mxu0 %v2678
  %v2723 = vpop.f32.mrf.mxu0
  %v2724 = vadd.f32 0.0, %v2723
  %v2725 = vpop.f32.mrf.mxu0
  %v2726 = vadd.f32 0.0, %v2725
  %2727 = vmatmul.bf16.gmra.mxu0 %v2681
  %v2728 = vpop.f32.mrf.mxu0
  %v2729 = vadd.f32 0.0, %v2728
  %v2730 = vpop.f32.mrf.mxu0
  %v2731 = vadd.f32 0.0, %v2730
  %2732 = vmatmul.bf16.gmra.mxu0 %v2684
  %v2733 = vpop.f32.mrf.mxu0
  %v2734 = vadd.f32 0.0, %v2733
  %v2735 = vpop.f32.mrf.mxu0
  %v2736 = vadd.f32 0.0, %v2735
  %2737 = vdwg.mxu0
  %v2738 = vadd.f32 %v2606, %v2699
  %v2739 = vadd.f32 %v2607, %v2701
  %v2740 = vadd.f32 %v2608, %v2704
  %v2741 = vadd.f32 %v2609, %v2706
  %v2742 = vadd.f32 %v2610, %v2709
  %v2743 = vadd.f32 %v2611, %v2711
  %v2744 = vadd.f32 %v2612, %v2714
  %v2745 = vadd.f32 %v2613, %v2716
  %v2746 = vadd.f32 %v2614, %v2719
  %v2747 = vadd.f32 %v2615, %v2721
  %v2748 = vadd.f32 %v2616, %v2724
  %v2749 = vadd.f32 %v2617, %v2726
  %v2750 = vadd.f32 %v2618, %v2729
  %v2751 = vadd.f32 %v2619, %v2731
  %v2752 = vadd.f32 %v2620, %v2734
  %v2753 = vadd.f32 %v2621, %v2736
  %s2754 = scalar_lea.vmem [#allocation2], 32
  %v2755 = vld [vmem:[%s2754] sm:$0xff]
  %v2756 = vld [vmem:[%s2754 + $0x10] sm:$0xff]
  %v2757 = vld [vmem:[%s2754 + $0x20] sm:$0xff]
  %v2758 = vld [vmem:[%s2754 + $0x30] sm:$0xff]
  %v2759 = vld [vmem:[%s2754 + $0x40] sm:$0xff]
  %v2760 = vld [vmem:[%s2754 + $0x50] sm:$0xff]
  %v2761 = vld [vmem:[%s2754 + $0x60] sm:$0xff]
  %v2762 = vld [vmem:[%s2754 + $0x70] sm:$0xff]
  %v2763 = vld [vmem:[%s2754 + $0xa0] sm:$0xff]
  %v2764 = vld [vmem:[%s2754 + $0xb0] sm:$0xff]
  %v2765 = vld [vmem:[%s2754 + $0xc0] sm:$0xff]
  %v2766 = vld [vmem:[%s2754 + $0xd0] sm:$0xff]
  %v2767 = vld [vmem:[%s2754 + $0xe0] sm:$0xff]
  %v2768 = vld [vmem:[%s2754 + $0xf0] sm:$0xff]
  %v2769 = vld [vmem:[%s2754 + $0x100] sm:$0xff]
  %v2770 = vld [vmem:[%s2754 + $0x110] sm:$0xff]
  %v2771 = vpack.c.bf16 %v2756, %v2755
  %v2772 = vpack.c.bf16 %v2758, %v2757
  %v2773 = vpack.c.bf16 %v2760, %v2759
  %v2774 = vpack.c.bf16 %v2762, %v2761
  %v2775 = vpack.c.bf16 %v2764, %v2763
  %v2776 = vpack.c.bf16 %v2766, %v2765
  %v2777 = vpack.c.bf16 %v2768, %v2767
  %v2778 = vpack.c.bf16 %v2770, %v2769
  %s2779 = scalar_lea.vmem %s2, 96
  %v2780 = vld [vmem:[%s2779] sm:$0xf]
  %v2781 = vld [vmem:[%s2779 + $0x4] sm:$0xf]
  %v2782 = vld [vmem:[%s2779 + $0x8] sm:$0xf]
  %v2783 = vld [vmem:[%s2779 + $0xc] sm:$0x3]
  %v2788 = vunpack.c.l.b16 %v2780
  %v2789 = vunpack.c.l.b16 %v2781
  %v2790 = vunpack.c.l.b16 %v2782
  %v2791 = vunpack.c.l.b16 %v2783
  %v2792 = vpack.c.b16 %v2789, %v2788
  %v2793 = vpack.c.b16 %v2791, %v2790
  %v2796 = vsel %vm1404, %v2771, 0
  %v2799 = vsel %vm1404, %v2772, 0
  %v2802 = vsel %vm1404, %v2773, 0
  %v2805 = vsel %vm1404, %v2774, 0
  %v2808 = vsel %vm1404, %v2775, 0
  %v2811 = vsel %vm1404, %v2776, 0
  %v2814 = vsel %vm1404, %v2777, 0
  %v2817 = vsel %vm1404, %v2778, 0
  %v2820 = vsel %vm2086, %v2793, 0
  %2822 = vmatpush.bf16.msra.mxu0 0
  %2823 = vmatpush.bf16.msra.mxu0 0
  %2824 = vmatpush.bf16.msra.mxu0 0
  %2825 = vmatpush.bf16.msra.mxu0 0
  %2826 = vmatpush.bf16.msra.mxu0 0
  %2827 = vmatpush.bf16.msra.mxu0 0
  %2828 = vmatpush.bf16.msra.mxu0 %v2820
  %2829 = vmatpush.bf16.msra.mxu0 %v2792
  %2830 = vmatmul.bf16.gmra.mxu0 %v2796
  %v2831 = vpop.f32.mrf.mxu0
  %v2832 = vadd.f32 0.0, %v2831
  %v2833 = vpop.f32.mrf.mxu0
  %v2834 = vadd.f32 0.0, %v2833
  %2835 = vmatmul.bf16.gmra.mxu0 %v2799
  %v2836 = vpop.f32.mrf.mxu0
  %v2837 = vadd.f32 0.0, %v2836
  %v2838 = vpop.f32.mrf.mxu0
  %v2839 = vadd.f32 0.0, %v2838
  %2840 = vmatmul.bf16.gmra.mxu0 %v2802
  %v2841 = vpop.f32.mrf.mxu0
  %v2842 = vadd.f32 0.0, %v2841
  %v2843 = vpop.f32.mrf.mxu0
  %v2844 = vadd.f32 0.0, %v2843
  %2845 = vmatmul.bf16.gmra.mxu0 %v2805
  %v2846 = vpop.f32.mrf.mxu0
  %v2847 = vadd.f32 0.0, %v2846
  %v2848 = vpop.f32.mrf.mxu0
  %v2849 = vadd.f32 0.0, %v2848
  %2850 = vmatmul.bf16.gmra.mxu0 %v2808
  %v2851 = vpop.f32.mrf.mxu0
  %v2852 = vadd.f32 0.0, %v2851
  %v2853 = vpop.f32.mrf.mxu0
  %v2854 = vadd.f32 0.0, %v2853
  %2855 = vmatmul.bf16.gmra.mxu0 %v2811
  %v2856 = vpop.f32.mrf.mxu0
  %v2857 = vadd.f32 0.0, %v2856
  %v2858 = vpop.f32.mrf.mxu0
  %v2859 = vadd.f32 0.0, %v2858
  %2860 = vmatmul.bf16.gmra.mxu0 %v2814
  %v2861 = vpop.f32.mrf.mxu0
  %v2862 = vadd.f32 0.0, %v2861
  %v2863 = vpop.f32.mrf.mxu0
  %v2864 = vadd.f32 0.0, %v2863
  %2865 = vmatmul.bf16.gmra.mxu0 %v2817
  %v2866 = vpop.f32.mrf.mxu0
  %v2867 = vadd.f32 0.0, %v2866
  %v2868 = vpop.f32.mrf.mxu0
  %v2869 = vadd.f32 0.0, %v2868
  %2870 = vdwg.mxu0
  %v2871 = vadd.f32 %v2738, %v2832
  %v2872 = vadd.f32 %v2739, %v2834
  %v2873 = vadd.f32 %v2740, %v2837
  %v2874 = vadd.f32 %v2741, %v2839
  %v2875 = vadd.f32 %v2742, %v2842
  %v2876 = vadd.f32 %v2743, %v2844
  %v2877 = vadd.f32 %v2744, %v2847
  %v2878 = vadd.f32 %v2745, %v2849
  %v2879 = vadd.f32 %v2746, %v2852
  %v2880 = vadd.f32 %v2747, %v2854
  %v2881 = vadd.f32 %v2748, %v2857
  %v2882 = vadd.f32 %v2749, %v2859
  %v2883 = vadd.f32 %v2750, %v2862
  %v2884 = vadd.f32 %v2751, %v2864
  %v2885 = vadd.f32 %v2752, %v2867
  %v2886 = vadd.f32 %v2753, %v2869
  %v2887 = vld [vmem:[%s2754 + $0x1] sm:$0xff]
  %v2888 = vld [vmem:[%s2754 + $0x11] sm:$0xff]
  %v2889 = vld [vmem:[%s2754 + $0x21] sm:$0xff]
  %v2890 = vld [vmem:[%s2754 + $0x31] sm:$0xff]
  %v2891 = vld [vmem:[%s2754 + $0x41] sm:$0xff]
  %v2892 = vld [vmem:[%s2754 + $0x51] sm:$0xff]
  %v2893 = vld [vmem:[%s2754 + $0x61] sm:$0xff]
  %v2894 = vld [vmem:[%s2754 + $0x71] sm:$0xff]
  %v2895 = vld [vmem:[%s2754 + $0xa1] sm:$0xff]
  %v2896 = vld [vmem:[%s2754 + $0xb1] sm:$0xff]
  %v2897 = vld [vmem:[%s2754 + $0xc1] sm:$0xff]
  %v2898 = vld [vmem:[%s2754 + $0xd1] sm:$0xff]
  %v2899 = vld [vmem:[%s2754 + $0xe1] sm:$0xff]
  %v2900 = vld [vmem:[%s2754 + $0xf1] sm:$0xff]
  %v2901 = vld [vmem:[%s2754 + $0x101] sm:$0xff]
  %v2902 = vld [vmem:[%s2754 + $0x111] sm:$0xff]
  %v2903 = vpack.c.bf16 %v2888, %v2887
  %v2904 = vpack.c.bf16 %v2890, %v2889
  %v2905 = vpack.c.bf16 %v2892, %v2891
  %v2906 = vpack.c.bf16 %v2894, %v2893
  %v2907 = vpack.c.bf16 %v2896, %v2895
  %v2908 = vpack.c.bf16 %v2898, %v2897
  %v2909 = vpack.c.bf16 %v2900, %v2899
  %v2910 = vpack.c.bf16 %v2902, %v2901
  %s2911 = scalar_lea.vmem %s2, 112
  %v2912 = vld [vmem:[%s2911] sm:$0xf]
  %v2913 = vld [vmem:[%s2911 + $0x4] sm:$0xf]
  %v2914 = vld [vmem:[%s2911 + $0x8] sm:$0xf]
  %v2915 = vld [vmem:[%s2911 + $0xc] sm:$0x3]
  %v2920 = vunpack.c.l.b16 %v2912
  %v2921 = vunpack.c.l.b16 %v2913
  %v2922 = vunpack.c.l.b16 %v2914
  %v2923 = vunpack.c.l.b16 %v2915
  %v2924 = vpack.c.b16 %v2921, %v2920
  %v2925 = vpack.c.b16 %v2923, %v2922
  %v2928 = vsel %vm1404, %v2903, 0
  %v2931 = vsel %vm1404, %v2904, 0
  %v2934 = vsel %vm1404, %v2905, 0
  %v2937 = vsel %vm1404, %v2906, 0
  %v2940 = vsel %vm1404, %v2907, 0
  %v2943 = vsel %vm1404, %v2908, 0
  %v2946 = vsel %vm1404, %v2909, 0
  %v2949 = vsel %vm1404, %v2910, 0
  %v2952 = vsel %vm2086, %v2925, 0
  %2954 = vmatpush.bf16.msra.mxu0 0
  %2955 = vmatpush.bf16.msra.mxu0 0
  %2956 = vmatpush.bf16.msra.mxu0 0
  %2957 = vmatpush.bf16.msra.mxu0 0
  %2958 = vmatpush.bf16.msra.mxu0 0
  %2959 = vmatpush.bf16.msra.mxu0 0
  %2960 = vmatpush.bf16.msra.mxu0 %v2952
  %2961 = vmatpush.bf16.msra.mxu0 %v2924
  %2962 = vmatmul.bf16.gmra.mxu0 %v2928
  %v2963 = vpop.f32.mrf.mxu0
  %v2964 = vadd.f32 0.0, %v2963
  %v2965 = vpop.f32.mrf.mxu0
  %v2966 = vadd.f32 0.0, %v2965
  %2967 = vmatmul.bf16.gmra.mxu0 %v2931
  %v2968 = vpop.f32.mrf.mxu0
  %v2969 = vadd.f32 0.0, %v2968
  %v2970 = vpop.f32.mrf.mxu0
  %v2971 = vadd.f32 0.0, %v2970
  %2972 = vmatmul.bf16.gmra.mxu0 %v2934
  %v2973 = vpop.f32.mrf.mxu0
  %v2974 = vadd.f32 0.0, %v2973
  %v2975 = vpop.f32.mrf.mxu0
  %v2976 = vadd.f32 0.0, %v2975
  %2977 = vmatmul.bf16.gmra.mxu0 %v2937
  %v2978 = vpop.f32.mrf.mxu0
  %v2979 = vadd.f32 0.0, %v2978
  %v2980 = vpop.f32.mrf.mxu0
  %v2981 = vadd.f32 0.0, %v2980
  %2982 = vmatmul.bf16.gmra.mxu0 %v2940
  %v2983 = vpop.f32.mrf.mxu0
  %v2984 = vadd.f32 0.0, %v2983
  %v2985 = vpop.f32.mrf.mxu0
  %v2986 = vadd.f32 0.0, %v2985
  %2987 = vmatmul.bf16.gmra.mxu0 %v2943
  %v2988 = vpop.f32.mrf.mxu0
  %v2989 = vadd.f32 0.0, %v2988
  %v2990 = vpop.f32.mrf.mxu0
  %v2991 = vadd.f32 0.0, %v2990
  %2992 = vmatmul.bf16.gmra.mxu0 %v2946
  %v2993 = vpop.f32.mrf.mxu0
  %v2994 = vadd.f32 0.0, %v2993
  %v2995 = vpop.f32.mrf.mxu0
  %v2996 = vadd.f32 0.0, %v2995
  %2997 = vmatmul.bf16.gmra.mxu0 %v2949
  %v2998 = vpop.f32.mrf.mxu0
  %v2999 = vadd.f32 0.0, %v2998
  %v3000 = vpop.f32.mrf.mxu0
  %v3001 = vadd.f32 0.0, %v3000
  %3002 = vdwg.mxu0
  %v3003 = vadd.f32 %v2871, %v2964
  %v3004 = vadd.f32 %v2872, %v2966
  %v3005 = vadd.f32 %v2873, %v2969
  %v3006 = vadd.f32 %v2874, %v2971
  %v3007 = vadd.f32 %v2875, %v2974
  %v3008 = vadd.f32 %v2876, %v2976
  %v3009 = vadd.f32 %v2877, %v2979
  %v3010 = vadd.f32 %v2878, %v2981
  %v3011 = vadd.f32 %v2879, %v2984
  %v3012 = vadd.f32 %v2880, %v2986
  %v3013 = vadd.f32 %v2881, %v2989
  %v3014 = vadd.f32 %v2882, %v2991
  %v3015 = vadd.f32 %v2883, %v2994
  %v3016 = vadd.f32 %v2884, %v2996
  %v3017 = vadd.f32 %v2885, %v2999
  %v3018 = vadd.f32 %v2886, %v3001
  %v3019 = vld [vmem:[%s2754 + $0x2] sm:$0xff]
  %v3020 = vld [vmem:[%s2754 + $0x12] sm:$0xff]
  %v3021 = vld [vmem:[%s2754 + $0x22] sm:$0xff]
  %v3022 = vld [vmem:[%s2754 + $0x32] sm:$0xff]
  %v3023 = vld [vmem:[%s2754 + $0x42] sm:$0xff]
  %v3024 = vld [vmem:[%s2754 + $0x52] sm:$0xff]
  %v3025 = vld [vmem:[%s2754 + $0x62] sm:$0xff]
  %v3026 = vld [vmem:[%s2754 + $0x72] sm:$0xff]
  %v3027 = vld [vmem:[%s2754 + $0xa2] sm:$0xff]
  %v3028 = vld [vmem:[%s2754 + $0xb2] sm:$0xff]
  %v3029 = vld [vmem:[%s2754 + $0xc2] sm:$0xff]
  %v3030 = vld [vmem:[%s2754 + $0xd2] sm:$0xff]
  %v3031 = vld [vmem:[%s2754 + $0xe2] sm:$0xff]
  %v3032 = vld [vmem:[%s2754 + $0xf2] sm:$0xff]
  %v3033 = vld [vmem:[%s2754 + $0x102] sm:$0xff]
  %v3034 = vld [vmem:[%s2754 + $0x112] sm:$0xff]
  %v3035 = vpack.c.bf16 %v3020, %v3019
  %v3036 = vpack.c.bf16 %v3022, %v3021
  %v3037 = vpack.c.bf16 %v3024, %v3023
  %v3038 = vpack.c.bf16 %v3026, %v3025
  %v3039 = vpack.c.bf16 %v3028, %v3027
  %v3040 = vpack.c.bf16 %v3030, %v3029
  %v3041 = vpack.c.bf16 %v3032, %v3031
  %v3042 = vpack.c.bf16 %v3034, %v3033
  %s3043 = scalar_lea.vmem %s2, 128
  %v3044 = vld [vmem:[%s3043] sm:$0xf]
  %v3045 = vld [vmem:[%s3043 + $0x4] sm:$0xf]
  %v3046 = vld [vmem:[%s3043 + $0x8] sm:$0xf]
  %v3047 = vld [vmem:[%s3043 + $0xc] sm:$0x3]
  %v3052 = vunpack.c.l.b16 %v3044
  %v3053 = vunpack.c.l.b16 %v3045
  %v3054 = vunpack.c.l.b16 %v3046
  %v3055 = vunpack.c.l.b16 %v3047
  %v3056 = vpack.c.b16 %v3053, %v3052
  %v3057 = vpack.c.b16 %v3055, %v3054
  %v3060 = vsel %vm1404, %v3035, 0
  %v3063 = vsel %vm1404, %v3036, 0
  %v3066 = vsel %vm1404, %v3037, 0
  %v3069 = vsel %vm1404, %v3038, 0
  %v3072 = vsel %vm1404, %v3039, 0
  %v3075 = vsel %vm1404, %v3040, 0
  %v3078 = vsel %vm1404, %v3041, 0
  %v3081 = vsel %vm1404, %v3042, 0
  %v3084 = vsel %vm2086, %v3057, 0
  %3086 = vmatpush.bf16.msra.mxu0 0
  %3087 = vmatpush.bf16.msra.mxu0 0
  %3088 = vmatpush.bf16.msra.mxu0 0
  %3089 = vmatpush.bf16.msra.mxu0 0
  %3090 = vmatpush.bf16.msra.mxu0 0
  %3091 = vmatpush.bf16.msra.mxu0 0
  %3092 = vmatpush.bf16.msra.mxu0 %v3084
  %3093 = vmatpush.bf16.msra.mxu0 %v3056
  %3094 = vmatmul.bf16.gmra.mxu0 %v3060
  %v3095 = vpop.f32.mrf.mxu0
  %v3096 = vadd.f32 0.0, %v3095
  %v3097 = vpop.f32.mrf.mxu0
  %v3098 = vadd.f32 0.0, %v3097
  %3099 = vmatmul.bf16.gmra.mxu0 %v3063
  %v3100 = vpop.f32.mrf.mxu0
  %v3101 = vadd.f32 0.0, %v3100
  %v3102 = vpop.f32.mrf.mxu0
  %v3103 = vadd.f32 0.0, %v3102
  %3104 = vmatmul.bf16.gmra.mxu0 %v3066
  %v3105 = vpop.f32.mrf.mxu0
  %v3106 = vadd.f32 0.0, %v3105
  %v3107 = vpop.f32.mrf.mxu0
  %v3108 = vadd.f32 0.0, %v3107
  %3109 = vmatmul.bf16.gmra.mxu0 %v3069
  %v3110 = vpop.f32.mrf.mxu0
  %v3111 = vadd.f32 0.0, %v3110
  %v3112 = vpop.f32.mrf.mxu0
  %v3113 = vadd.f32 0.0, %v3112
  %3114 = vmatmul.bf16.gmra.mxu0 %v3072
  %v3115 = vpop.f32.mrf.mxu0
  %v3116 = vadd.f32 0.0, %v3115
  %v3117 = vpop.f32.mrf.mxu0
  %v3118 = vadd.f32 0.0, %v3117
  %3119 = vmatmul.bf16.gmra.mxu0 %v3075
  %v3120 = vpop.f32.mrf.mxu0
  %v3121 = vadd.f32 0.0, %v3120
  %v3122 = vpop.f32.mrf.mxu0
  %v3123 = vadd.f32 0.0, %v3122
  %3124 = vmatmul.bf16.gmra.mxu0 %v3078
  %v3125 = vpop.f32.mrf.mxu0
  %v3126 = vadd.f32 0.0, %v3125
  %v3127 = vpop.f32.mrf.mxu0
  %v3128 = vadd.f32 0.0, %v3127
  %3129 = vmatmul.bf16.gmra.mxu0 %v3081
  %v3130 = vpop.f32.mrf.mxu0
  %v3131 = vadd.f32 0.0, %v3130
  %v3132 = vpop.f32.mrf.mxu0
  %v3133 = vadd.f32 0.0, %v3132
  %3134 = vdwg.mxu0
  %v3135 = vadd.f32 %v3003, %v3096
  %v3136 = vadd.f32 %v3004, %v3098
  %v3137 = vadd.f32 %v3005, %v3101
  %v3138 = vadd.f32 %v3006, %v3103
  %v3139 = vadd.f32 %v3007, %v3106
  %v3140 = vadd.f32 %v3008, %v3108
  %v3141 = vadd.f32 %v3009, %v3111
  %v3142 = vadd.f32 %v3010, %v3113
  %v3143 = vadd.f32 %v3011, %v3116
  %v3144 = vadd.f32 %v3012, %v3118
  %v3145 = vadd.f32 %v3013, %v3121
  %v3146 = vadd.f32 %v3014, %v3123
  %v3147 = vadd.f32 %v3015, %v3126
  %v3148 = vadd.f32 %v3016, %v3128
  %v3149 = vadd.f32 %v3017, %v3131
  %v3150 = vadd.f32 %v3018, %v3133
  %v3151 = vld [vmem:[%s11] sm:$0xff]
  %vm3152 = vcmask 64512
  %v3154 = vsel %vm3152, %v3135, 0
  %v3157 = vsel %vm3152, %v3136, 0
  %v3160 = vsel %vm3152, %v3137, 0
  %v3163 = vsel %vm3152, %v3138, 0
  %v3166 = vsel %vm3152, %v3139, 0
  %v3169 = vsel %vm3152, %v3140, 0
  %v3172 = vsel %vm3152, %v3141, 0
  %v3175 = vsel %vm3152, %v3142, 0
  %v3178 = vsel %vm3152, %v3143, 0
  %v3181 = vsel %vm3152, %v3144, 0
  %v3184 = vsel %vm3152, %v3145, 0
  %v3187 = vsel %vm3152, %v3146, 0
  %v3190 = vsel %vm3152, %v3147, 0
  %v3193 = vsel %vm3152, %v3148, 0
  %v3196 = vsel %vm3152, %v3149, 0
  %v3199 = vsel %vm3152, %v3150, 0
  %3201 = vmatpush.msra.mxu0 0.0
  %3202 = vmatpush.msra.mxu0 0.0
  %3203 = vmatpush.msra.mxu0 0.0
  %3204 = vmatpush.msra.mxu0 0.0
  %3205 = vmatpush.msra.mxu0 0.0
  %3206 = vmatpush.msra.mxu0 0.0
  %3207 = vmatpush.msra.mxu0 0.0
  %3208 = vmatpush.msra.mxu0 0.0
  %3209 = vmatpush.msra.mxu0 0.0
  %3210 = vmatpush.msra.mxu0 0.0
  %3211 = vmatpush.msra.mxu0 0.0
  %3212 = vmatpush.msra.mxu0 0.0
  %3213 = vmatpush.msra.mxu0 0.0
  %3214 = vmatpush.msra.mxu0 0.0
  %3215 = vmatpush.msra.mxu0 0.0
  %3216 = vmatpush.msra.mxu0 %v3151
  %3217 = vmatmul.f32.gmra.mxu0 %v3154
  %v3218 = vpop.f32.mrf.mxu0
  %v3219 = vadd.f32 0.0, %v3218
  %3220 = vmatmul.f32.gmra.mxu0 %v3157
  %v3221 = vpop.f32.mrf.mxu0
  %v3222 = vadd.f32 0.0, %v3221
  %3223 = vmatmul.f32.gmra.mxu0 %v3160
  %v3224 = vpop.f32.mrf.mxu0
  %v3225 = vadd.f32 0.0, %v3224
  %3226 = vmatmul.f32.gmra.mxu0 %v3163
  %v3227 = vpop.f32.mrf.mxu0
  %v3228 = vadd.f32 0.0, %v3227
  %3229 = vmatmul.f32.gmra.mxu0 %v3166
  %v3230 = vpop.f32.mrf.mxu0
  %v3231 = vadd.f32 0.0, %v3230
  %3232 = vmatmul.f32.gmra.mxu0 %v3169
  %v3233 = vpop.f32.mrf.mxu0
  %v3234 = vadd.f32 0.0, %v3233
  %3235 = vmatmul.f32.gmra.mxu0 %v3172
  %v3236 = vpop.f32.mrf.mxu0
  %v3237 = vadd.f32 0.0, %v3236
  %3238 = vmatmul.f32.gmra.mxu0 %v3175
  %v3239 = vpop.f32.mrf.mxu0
  %v3240 = vadd.f32 0.0, %v3239
  %3241 = vmatmul.f32.gmra.mxu0 %v3178
  %v3242 = vpop.f32.mrf.mxu0
  %v3243 = vadd.f32 0.0, %v3242
  %3244 = vmatmul.f32.gmra.mxu0 %v3181
  %v3245 = vpop.f32.mrf.mxu0
  %v3246 = vadd.f32 0.0, %v3245
  %3247 = vmatmul.f32.gmra.mxu0 %v3184
  %v3248 = vpop.f32.mrf.mxu0
  %v3249 = vadd.f32 0.0, %v3248
  %3250 = vmatmul.f32.gmra.mxu0 %v3187
  %v3251 = vpop.f32.mrf.mxu0
  %v3252 = vadd.f32 0.0, %v3251
  %3253 = vmatmul.f32.gmra.mxu0 %v3190
  %v3254 = vpop.f32.mrf.mxu0
  %v3255 = vadd.f32 0.0, %v3254
  %3256 = vmatmul.f32.gmra.mxu0 %v3193
  %v3257 = vpop.f32.mrf.mxu0
  %v3258 = vadd.f32 0.0, %v3257
  %3259 = vmatmul.f32.gmra.mxu0 %v3196
  %v3260 = vpop.f32.mrf.mxu0
  %v3261 = vadd.f32 0.0, %v3260
  %3262 = vmatmul.f32.gmra.mxu0 %v3199
  %v3263 = vpop.f32.mrf.mxu0
  %v3264 = vadd.f32 0.0, %v3263
  %3265 = vdwg.mxu0
  %v3266 = vsel %vm1522, %v3219, 0.0
  %v3267 = vsel %vm1522, %v3222, 0.0
  %v3268 = vadd.f32 %v3266, %v3267
  %v3269 = vsel %vm1522, %v3225, 0.0
  %v3270 = vadd.f32 %v3268, %v3269
  %v3271 = vsel %vm1522, %v3228, 0.0
  %v3272 = vadd.f32 %v3270, %v3271
  %v3273 = vsel %vm1522, %v3231, 0.0
  %v3274 = vadd.f32 %v3272, %v3273
  %v3275 = vsel %vm1522, %v3234, 0.0
  %v3276 = vadd.f32 %v3274, %v3275
  %v3277 = vsel %vm1522, %v3237, 0.0
  %v3278 = vadd.f32 %v3276, %v3277
  %v3279 = vsel %vm1522, %v3240, 0.0
  %v3280 = vadd.f32 %v3278, %v3279
  %v3281 = vsel %vm1522, %v3243, 0.0
  %v3282 = vadd.f32 %v3280, %v3281
  %v3283 = vsel %vm1522, %v3246, 0.0
  %v3284 = vadd.f32 %v3282, %v3283
  %v3285 = vsel %vm1522, %v3249, 0.0
  %v3286 = vadd.f32 %v3284, %v3285
  %v3287 = vsel %vm1522, %v3252, 0.0
  %v3288 = vadd.f32 %v3286, %v3287
  %v3289 = vsel %vm1522, %v3255, 0.0
  %v3290 = vadd.f32 %v3288, %v3289
  %v3291 = vsel %vm1522, %v3258, 0.0
  %v3292 = vadd.f32 %v3290, %v3291
  %v3293 = vsel %vm1522, %v3261, 0.0
  %v3294 = vadd.f32 %v3292, %v3293
  %v3295 = vsel %vm1522, %v3264, 0.0
  %v3296 = vadd.f32 %v3294, %v3295
  %v3297 = vrot.slane %v3296, 4
  %v3298 = vadd.f32 %v3296, %v3297
  %v3299 = vrot.slane %v3298, 2
  %v3300 = vadd.f32 %v3298, %v3299
  %v3301 = vrot.slane %v3300, 1
  %v3302 = vadd.f32 %v3300, %v3301
  %v3303 = vmul.f32 %v3302, 0.00390625
  %v3304 = vmul.f32 %v3135, %v3135
  %v3305 = vmul.f32 %v3136, %v3136
  %v3306 = vmul.f32 %v3137, %v3137
  %v3307 = vmul.f32 %v3138, %v3138
  %v3308 = vmul.f32 %v3139, %v3139
  %v3309 = vmul.f32 %v3140, %v3140
  %v3310 = vmul.f32 %v3141, %v3141
  %v3311 = vmul.f32 %v3142, %v3142
  %v3312 = vmul.f32 %v3143, %v3143
  %v3313 = vmul.f32 %v3144, %v3144
  %v3314 = vmul.f32 %v3145, %v3145
  %v3315 = vmul.f32 %v3146, %v3146
  %v3316 = vmul.f32 %v3147, %v3147
  %v3317 = vmul.f32 %v3148, %v3148
  %v3318 = vmul.f32 %v3149, %v3149
  %v3319 = vmul.f32 %v3150, %v3150
  %v3321 = vsel %vm3152, %v3304, 0
  %v3324 = vsel %vm3152, %v3305, 0
  %v3327 = vsel %vm3152, %v3306, 0
  %v3330 = vsel %vm3152, %v3307, 0
  %v3333 = vsel %vm3152, %v3308, 0
  %v3336 = vsel %vm3152, %v3309, 0
  %v3339 = vsel %vm3152, %v3310, 0
  %v3342 = vsel %vm3152, %v3311, 0
  %v3345 = vsel %vm3152, %v3312, 0
  %v3348 = vsel %vm3152, %v3313, 0
  %v3351 = vsel %vm3152, %v3314, 0
  %v3354 = vsel %vm3152, %v3315, 0
  %v3357 = vsel %vm3152, %v3316, 0
  %v3360 = vsel %vm3152, %v3317, 0
  %v3363 = vsel %vm3152, %v3318, 0
  %v3366 = vsel %vm3152, %v3319, 0
  %3368 = vmatpush.msra.mxu0 0.0
  %3369 = vmatpush.msra.mxu0 0.0
  %3370 = vmatpush.msra.mxu0 0.0
  %3371 = vmatpush.msra.mxu0 0.0
  %3372 = vmatpush.msra.mxu0 0.0
  %3373 = vmatpush.msra.mxu0 0.0
  %3374 = vmatpush.msra.mxu0 0.0
  %3375 = vmatpush.msra.mxu0 0.0
  %3376 = vmatpush.msra.mxu0 0.0
  %3377 = vmatpush.msra.mxu0 0.0
  %3378 = vmatpush.msra.mxu0 0.0
  %3379 = vmatpush.msra.mxu0 0.0
  %3380 = vmatpush.msra.mxu0 0.0
  %3381 = vmatpush.msra.mxu0 0.0
  %3382 = vmatpush.msra.mxu0 0.0
  %3383 = vmatpush.msra.mxu0 %v3151
  %3384 = vmatmul.f32.gmra.mxu0 %v3321
  %v3385 = vpop.f32.mrf.mxu0
  %v3386 = vadd.f32 0.0, %v3385
  %3387 = vmatmul.f32.gmra.mxu0 %v3324
  %v3388 = vpop.f32.mrf.mxu0
  %v3389 = vadd.f32 0.0, %v3388
  %3390 = vmatmul.f32.gmra.mxu0 %v3327
  %v3391 = vpop.f32.mrf.mxu0
  %v3392 = vadd.f32 0.0, %v3391
  %3393 = vmatmul.f32.gmra.mxu0 %v3330
  %v3394 = vpop.f32.mrf.mxu0
  %v3395 = vadd.f32 0.0, %v3394
  %3396 = vmatmul.f32.gmra.mxu0 %v3333
  %v3397 = vpop.f32.mrf.mxu0
  %v3398 = vadd.f32 0.0, %v3397
  %3399 = vmatmul.f32.gmra.mxu0 %v3336
  %v3400 = vpop.f32.mrf.mxu0
  %v3401 = vadd.f32 0.0, %v3400
  %3402 = vmatmul.f32.gmra.mxu0 %v3339
  %v3403 = vpop.f32.mrf.mxu0
  %v3404 = vadd.f32 0.0, %v3403
  %3405 = vmatmul.f32.gmra.mxu0 %v3342
  %v3406 = vpop.f32.mrf.mxu0
  %v3407 = vadd.f32 0.0, %v3406
  %3408 = vmatmul.f32.gmra.mxu0 %v3345
  %v3409 = vpop.f32.mrf.mxu0
  %v3410 = vadd.f32 0.0, %v3409
  %3411 = vmatmul.f32.gmra.mxu0 %v3348
  %v3412 = vpop.f32.mrf.mxu0
  %v3413 = vadd.f32 0.0, %v3412
  %3414 = vmatmul.f32.gmra.mxu0 %v3351
  %v3415 = vpop.f32.mrf.mxu0
  %v3416 = vadd.f32 0.0, %v3415
  %3417 = vmatmul.f32.gmra.mxu0 %v3354
  %v3418 = vpop.f32.mrf.mxu0
  %v3419 = vadd.f32 0.0, %v3418
  %3420 = vmatmul.f32.gmra.mxu0 %v3357
  %v3421 = vpop.f32.mrf.mxu0
  %v3422 = vadd.f32 0.0, %v3421
  %3423 = vmatmul.f32.gmra.mxu0 %v3360
  %v3424 = vpop.f32.mrf.mxu0
  %v3425 = vadd.f32 0.0, %v3424
  %3426 = vmatmul.f32.gmra.mxu0 %v3363
  %v3427 = vpop.f32.mrf.mxu0
  %v3428 = vadd.f32 0.0, %v3427
  %3429 = vmatmul.f32.gmra.mxu0 %v3366
  %v3430 = vpop.f32.mrf.mxu0
  %v3431 = vadd.f32 0.0, %v3430
  %3432 = vdwg.mxu0
  %v3433 = vsel %vm1522, %v3386, 0.0
  %v3434 = vsel %vm1522, %v3389, 0.0
  %v3435 = vadd.f32 %v3433, %v3434
  %v3436 = vsel %vm1522, %v3392, 0.0
  %v3437 = vadd.f32 %v3435, %v3436
  %v3438 = vsel %vm1522, %v3395, 0.0
  %v3439 = vadd.f32 %v3437, %v3438
  %v3440 = vsel %vm1522, %v3398, 0.0
  %v3441 = vadd.f32 %v3439, %v3440
  %v3442 = vsel %vm1522, %v3401, 0.0
  %v3443 = vadd.f32 %v3441, %v3442
  %v3444 = vsel %vm1522, %v3404, 0.0
  %v3445 = vadd.f32 %v3443, %v3444
  %v3446 = vsel %vm1522, %v3407, 0.0
  %v3447 = vadd.f32 %v3445, %v3446
  %v3448 = vsel %vm1522, %v3410, 0.0
  %v3449 = vadd.f32 %v3447, %v3448
  %v3450 = vsel %vm1522, %v3413, 0.0
  %v3451 = vadd.f32 %v3449, %v3450
  %v3452 = vsel %vm1522, %v3416, 0.0
  %v3453 = vadd.f32 %v3451, %v3452
  %v3454 = vsel %vm1522, %v3419, 0.0
  %v3455 = vadd.f32 %v3453, %v3454
  %v3456 = vsel %vm1522, %v3422, 0.0
  %v3457 = vadd.f32 %v3455, %v3456
  %v3458 = vsel %vm1522, %v3425, 0.0
  %v3459 = vadd.f32 %v3457, %v3458
  %v3460 = vsel %vm1522, %v3428, 0.0
  %v3461 = vadd.f32 %v3459, %v3460
  %v3462 = vsel %vm1522, %v3431, 0.0
  %v3463 = vadd.f32 %v3461, %v3462
  %v3464 = vrot.slane %v3463, 4
  %v3465 = vadd.f32 %v3463, %v3464
  %v3466 = vrot.slane %v3465, 2
  %v3467 = vadd.f32 %v3465, %v3466
  %v3468 = vrot.slane %v3467, 1
  %v3469 = vadd.f32 %v3467, %v3468
  %v3470 = vmul.f32 %v3469, 0.00390625
  %v3471 = vmul.f32 %v3303, %v3303
  %v3472 = vsub.f32 %v3470, %v3471
  %v3473 = vld [vmem:[%s7] sm:$0x1]
  %v3474 = vadd.f32 %v3472, 1e-05
  %v3475 = vrsqrt.pop %v3474
  %v3476 = vmul.f32 %v3475, %v3474
  %v3477 = vmul.f32 %v3476, %v3475
  %v3478 = vmul.f32 0.5, %v3477
  %v3479 = vsub.f32 1.5, %v3478
  %v3480 = vmul.f32 %v3475, %v3479
  %vm3481 = vweird.f32 %v3474
  %vm3482 = vweird.f32 %v3475
  %vm3483 = vmor %vm3481, %vm3482
  %v3484 = vsel %vm3483, %v3475, %v3480
  %v3485 = vmul.f32 %v3473, %v3484
  %v3486 = vld [vmem:[%s8] sm:$0x1]
  %v3487 = vmul.f32 %v3303, %v3485
  %v3488 = vsub.f32 %v3486, %v3487
  %v3490 = vperm.slane %v3485, 0
  %v3491 = vld [vmem:[%s12] sm:$0xf]
  %v3492 = vsel %vm1522, %v3490, 0
  %v3495 = vsel %vm1453, %v3491, 0
  %3497 = vmatpush.msra.mxu0 0.0
  %3498 = vmatpush.msra.mxu0 0.0
  %3499 = vmatpush.msra.mxu0 0.0
  %3500 = vmatpush.msra.mxu0 0.0
  %3501 = vmatpush.msra.mxu0 0.0
  %3502 = vmatpush.msra.mxu0 0.0
  %3503 = vmatpush.msra.mxu0 0.0
  %3504 = vmatpush.msra.mxu0 0.0
  %3505 = vmatpush.msra.mxu0 0.0
  %3506 = vmatpush.msra.mxu0 0.0
  %3507 = vmatpush.msra.mxu0 0.0
  %3508 = vmatpush.msra.mxu0 0.0
  %3509 = vmatpush.msra.mxu0 0.0
  %3510 = vmatpush.msra.mxu0 0.0
  %3511 = vmatpush.msra.mxu0 0.0
  %3512 = vmatpush.msra.mxu0 %v3495
  %3513 = vmatmul.f32.gmra.mxu0 %v3492
  %v3514 = vpop.f32.mrf.mxu0
  %v3515 = vadd.f32 0.0, %v3514
  %3516 = vmatmul.f32.gmra.mxu0 %v3492
  %v3517 = vpop.f32.mrf.mxu0
  %v3518 = vadd.f32 0.0, %v3517
  %3519 = vmatmul.f32.gmra.mxu0 %v3492
  %v3520 = vpop.f32.mrf.mxu0
  %v3521 = vadd.f32 0.0, %v3520
  %3522 = vmatmul.f32.gmra.mxu0 %v3492
  %v3523 = vpop.f32.mrf.mxu0
  %v3524 = vadd.f32 0.0, %v3523
  %3525 = vmatmul.f32.gmra.mxu0 %v3492
  %v3526 = vpop.f32.mrf.mxu0
  %v3527 = vadd.f32 0.0, %v3526
  %3528 = vmatmul.f32.gmra.mxu0 %v3492
  %v3529 = vpop.f32.mrf.mxu0
  %v3530 = vadd.f32 0.0, %v3529
  %3531 = vmatmul.f32.gmra.mxu0 %v3492
  %v3532 = vpop.f32.mrf.mxu0
  %v3533 = vadd.f32 0.0, %v3532
  %3534 = vmatmul.f32.gmra.mxu0 %v3492
  %v3535 = vpop.f32.mrf.mxu0
  %v3536 = vadd.f32 0.0, %v3535
  %3537 = vmatmul.f32.gmra.mxu0 %v3492
  %v3538 = vpop.f32.mrf.mxu0
  %v3539 = vadd.f32 0.0, %v3538
  %3540 = vmatmul.f32.gmra.mxu0 %v3492
  %v3541 = vpop.f32.mrf.mxu0
  %v3542 = vadd.f32 0.0, %v3541
  %3543 = vmatmul.f32.gmra.mxu0 %v3492
  %v3544 = vpop.f32.mrf.mxu0
  %v3545 = vadd.f32 0.0, %v3544
  %3546 = vmatmul.f32.gmra.mxu0 %v3492
  %v3547 = vpop.f32.mrf.mxu0
  %v3548 = vadd.f32 0.0, %v3547
  %3549 = vmatmul.f32.gmra.mxu0 %v3492
  %v3550 = vpop.f32.mrf.mxu0
  %v3551 = vadd.f32 0.0, %v3550
  %3552 = vmatmul.f32.gmra.mxu0 %v3492
  %v3553 = vpop.f32.mrf.mxu0
  %v3554 = vadd.f32 0.0, %v3553
  %3555 = vmatmul.f32.gmra.mxu0 %v3492
  %v3556 = vpop.f32.mrf.mxu0
  %v3557 = vadd.f32 0.0, %v3556
  %3558 = vmatmul.f32.gmra.mxu0 %v3492
  %v3559 = vpop.f32.mrf.mxu0
  %v3560 = vadd.f32 0.0, %v3559
  %3561 = vdwg.mxu0
  %v3563 = vperm.slane %v3488, 0
  %v3564 = vsel %vm1522, %v3563, 0
  %3566 = vmatpush.msra.mxu0 0.0
  %3567 = vmatpush.msra.mxu0 0.0
  %3568 = vmatpush.msra.mxu0 0.0
  %3569 = vmatpush.msra.mxu0 0.0
  %3570 = vmatpush.msra.mxu0 0.0
  %3571 = vmatpush.msra.mxu0 0.0
  %3572 = vmatpush.msra.mxu0 0.0
  %3573 = vmatpush.msra.mxu0 0.0
  %3574 = vmatpush.msra.mxu0 0.0
  %3575 = vmatpush.msra.mxu0 0.0
  %3576 = vmatpush.msra.mxu0 0.0
  %3577 = vmatpush.msra.mxu0 0.0
  %3578 = vmatpush.msra.mxu0 0.0
  %3579 = vmatpush.msra.mxu0 0.0
  %3580 = vmatpush.msra.mxu0 0.0
  %3581 = vmatpush.msra.mxu0 %v3495
  %3582 = vmatmul.f32.gmra.mxu0 %v3564
  %v3583 = vpop.f32.mrf.mxu0
  %v3584 = vadd.f32 0.0, %v3583
  %3585 = vmatmul.f32.gmra.mxu0 %v3564
  %v3586 = vpop.f32.mrf.mxu0
  %v3587 = vadd.f32 0.0, %v3586
  %3588 = vmatmul.f32.gmra.mxu0 %v3564
  %v3589 = vpop.f32.mrf.mxu0
  %v3590 = vadd.f32 0.0, %v3589
  %3591 = vmatmul.f32.gmra.mxu0 %v3564
  %v3592 = vpop.f32.mrf.mxu0
  %v3593 = vadd.f32 0.0, %v3592
  %3594 = vmatmul.f32.gmra.mxu0 %v3564
  %v3595 = vpop.f32.mrf.mxu0
  %v3596 = vadd.f32 0.0, %v3595
  %3597 = vmatmul.f32.gmra.mxu0 %v3564
  %v3598 = vpop.f32.mrf.mxu0
  %v3599 = vadd.f32 0.0, %v3598
  %3600 = vmatmul.f32.gmra.mxu0 %v3564
  %v3601 = vpop.f32.mrf.mxu0
  %v3602 = vadd.f32 0.0, %v3601
  %3603 = vmatmul.f32.gmra.mxu0 %v3564
  %v3604 = vpop.f32.mrf.mxu0
  %v3605 = vadd.f32 0.0, %v3604
  %3606 = vmatmul.f32.gmra.mxu0 %v3564
  %v3607 = vpop.f32.mrf.mxu0
  %v3608 = vadd.f32 0.0, %v3607
  %3609 = vmatmul.f32.gmra.mxu0 %v3564
  %v3610 = vpop.f32.mrf.mxu0
  %v3611 = vadd.f32 0.0, %v3610
  %3612 = vmatmul.f32.gmra.mxu0 %v3564
  %v3613 = vpop.f32.mrf.mxu0
  %v3614 = vadd.f32 0.0, %v3613
  %3615 = vmatmul.f32.gmra.mxu0 %v3564
  %v3616 = vpop.f32.mrf.mxu0
  %v3617 = vadd.f32 0.0, %v3616
  %3618 = vmatmul.f32.gmra.mxu0 %v3564
  %v3619 = vpop.f32.mrf.mxu0
  %v3620 = vadd.f32 0.0, %v3619
  %3621 = vmatmul.f32.gmra.mxu0 %v3564
  %v3622 = vpop.f32.mrf.mxu0
  %v3623 = vadd.f32 0.0, %v3622
  %3624 = vmatmul.f32.gmra.mxu0 %v3564
  %v3625 = vpop.f32.mrf.mxu0
  %v3626 = vadd.f32 0.0, %v3625
  %3627 = vmatmul.f32.gmra.mxu0 %v3564
  %v3628 = vpop.f32.mrf.mxu0
  %v3629 = vadd.f32 0.0, %v3628
  %3630 = vdwg.mxu0
  %v3631 = vmul.f32 %v3135, %v3515
  %v3632 = vmul.f32 %v3136, %v3518
  %v3633 = vmul.f32 %v3137, %v3521
  %v3634 = vmul.f32 %v3138, %v3524
  %v3635 = vmul.f32 %v3139, %v3527
  %v3636 = vmul.f32 %v3140, %v3530
  %v3637 = vmul.f32 %v3141, %v3533
  %v3638 = vmul.f32 %v3142, %v3536
  %v3639 = vmul.f32 %v3143, %v3539
  %v3640 = vmul.f32 %v3144, %v3542
  %v3641 = vmul.f32 %v3145, %v3545
  %v3642 = vmul.f32 %v3146, %v3548
  %v3643 = vmul.f32 %v3147, %v3551
  %v3644 = vmul.f32 %v3148, %v3554
  %v3645 = vmul.f32 %v3149, %v3557
  %v3646 = vmul.f32 %v3150, %v3560
  %v3647 = vadd.f32 %v3631, %v3584
  %v3648 = vadd.f32 %v3632, %v3587
  %v3649 = vadd.f32 %v3633, %v3590
  %v3650 = vadd.f32 %v3634, %v3593
  %v3651 = vadd.f32 %v3635, %v3596
  %v3652 = vadd.f32 %v3636, %v3599
  %v3653 = vadd.f32 %v3637, %v3602
  %v3654 = vadd.f32 %v3638, %v3605
  %v3655 = vadd.f32 %v3639, %v3608
  %v3656 = vadd.f32 %v3640, %v3611
  %v3657 = vadd.f32 %v3641, %v3614
  %v3658 = vadd.f32 %v3642, %v3617
  %v3659 = vadd.f32 %v3643, %v3620
  %v3660 = vadd.f32 %v3644, %v3623
  %v3661 = vadd.f32 %v3645, %v3626
  %v3662 = vadd.f32 %v3646, %v3629
  %v3663 = vmax.f32 %v3647, 0.0
  %v3664 = vmax.f32 %v3648, 0.0
  %v3665 = vmax.f32 %v3649, 0.0
  %v3666 = vmax.f32 %v3650, 0.0
  %v3667 = vmax.f32 %v3651, 0.0
  %v3668 = vmax.f32 %v3652, 0.0
  %v3669 = vmax.f32 %v3653, 0.0
  %v3670 = vmax.f32 %v3654, 0.0
  %v3671 = vmax.f32 %v3655, 0.0
  %v3672 = vmax.f32 %v3656, 0.0
  %v3673 = vmax.f32 %v3657, 0.0
  %v3674 = vmax.f32 %v3658, 0.0
  %v3675 = vmax.f32 %v3659, 0.0
  %v3676 = vmax.f32 %v3660, 0.0
  %v3677 = vmax.f32 %v3661, 0.0
  %v3678 = vmax.f32 %v3662, 0.0
  %3679 = vst.msk [vmem:[#allocation3] sm:$0xff] %vm3152, 0.0
  %vm3680 = vcmask 58368
  %3681 = vst.msk [vmem:[#allocation3 + $0x8] sm:$0x3] %vm3680, 0.0
  %3682 = vst.msk [vmem:[#allocation3 + $0x10] sm:$0xff] %vm3152, 0.0
  %3683 = vst.msk [vmem:[#allocation3 + $0x18] sm:$0x3] %vm3680, 0.0
  %3684 = vst.msk [vmem:[#allocation3 + $0x20] sm:$0xff] %vm3152, 0.0
  %3685 = vst.msk [vmem:[#allocation3 + $0x28] sm:$0x3] %vm3680, 0.0
  %3686 = vst.msk [vmem:[#allocation3 + $0x30] sm:$0xff] %vm3152, 0.0
  %3687 = vst.msk [vmem:[#allocation3 + $0x38] sm:$0x3] %vm3680, 0.0
  %3688 = vst.msk [vmem:[#allocation3 + $0x40] sm:$0xff] %vm3152, 0.0
  %3689 = vst.msk [vmem:[#allocation3 + $0x48] sm:$0x3] %vm3680, 0.0
  %3690 = vst.msk [vmem:[#allocation3 + $0x50] sm:$0xff] %vm3152, 0.0
  %3691 = vst.msk [vmem:[#allocation3 + $0x58] sm:$0x3] %vm3680, 0.0
  %3692 = vst.msk [vmem:[#allocation3 + $0x60] sm:$0xff] %vm3152, 0.0
  %3693 = vst.msk [vmem:[#allocation3 + $0x68] sm:$0x3] %vm3680, 0.0
  %3694 = vst.msk [vmem:[#allocation3 + $0x70] sm:$0xff] %vm3152, 0.0
  %3695 = vst.msk [vmem:[#allocation3 + $0x78] sm:$0x3] %vm3680, 0.0
  %3696 = vst.msk [vmem:[#allocation3 + $0x80] sm:$0xff] %vm3152, 0.0
  %3697 = vst.msk [vmem:[#allocation3 + $0x88] sm:$0x3] %vm3680, 0.0
  %3698 = vst.msk [vmem:[#allocation3 + $0x90] sm:$0xff] %vm3152, 0.0
  %3699 = vst.msk [vmem:[#allocation3 + $0x98] sm:$0x3] %vm3680, 0.0
  %3700 = vst.msk [vmem:[#allocation3 + $0xa0] sm:$0xff] %vm3152, 0.0
  %3701 = vst.msk [vmem:[#allocation3 + $0xa8] sm:$0x3] %vm3680, 0.0
  %3702 = vst.msk [vmem:[#allocation3 + $0xb0] sm:$0xff] %vm3152, 0.0
  %3703 = vst.msk [vmem:[#allocation3 + $0xb8] sm:$0x3] %vm3680, 0.0
  %3704 = vst.msk [vmem:[#allocation3 + $0xc0] sm:$0xff] %vm3152, 0.0
  %3705 = vst.msk [vmem:[#allocation3 + $0xc8] sm:$0x3] %vm3680, 0.0
  %3706 = vst.msk [vmem:[#allocation3 + $0xd0] sm:$0xff] %vm3152, 0.0
  %3707 = vst.msk [vmem:[#allocation3 + $0xd8] sm:$0x3] %vm3680, 0.0
  %3708 = vst.msk [vmem:[#allocation3 + $0xe0] sm:$0xff] %vm3152, 0.0
  %3709 = vst.msk [vmem:[#allocation3 + $0xe8] sm:$0x3] %vm3680, 0.0
  %3710 = vst.msk [vmem:[#allocation3 + $0xf0] sm:$0xff] %vm3152, 0.0
  %3711 = vst.msk [vmem:[#allocation3 + $0xf8] sm:$0x3] %vm3680, 0.0
  %3712 = vst.msk [vmem:[#allocation3 + $0x100] sm:$0xff] %vm3152, 0.0
  %3713 = vst.msk [vmem:[#allocation3 + $0x108] sm:$0x3] %vm3680, 0.0
  %3714 = vst.msk [vmem:[#allocation3 + $0x110] sm:$0xff] %vm3152, 0.0
  %3715 = vst.msk [vmem:[#allocation3 + $0x118] sm:$0x3] %vm3680, 0.0
  %3716 = vst.msk [vmem:[#allocation3 + $0x120] sm:$0xff] %vm3152, 0.0
  %3717 = vst.msk [vmem:[#allocation3 + $0x128] sm:$0x3] %vm3680, 0.0
  %3718 = vst.msk [vmem:[#allocation3 + $0x130] sm:$0xff] %vm3152, 0.0
  %3719 = vst.msk [vmem:[#allocation3 + $0x138] sm:$0x3] %vm3680, 0.0
  %s3720 = scalar_lea.vmem [#allocation3], 16
  %3721 = vst.msk [vmem:[%s3720 + $0x1] sm:$0xff] %vm3152, %v3663
  %3722 = vst.msk [vmem:[%s3720 + $0x11] sm:$0xff] %vm3152, %v3664
  %3723 = vst.msk [vmem:[%s3720 + $0x21] sm:$0xff] %vm3152, %v3665
  %3724 = vst.msk [vmem:[%s3720 + $0x31] sm:$0xff] %vm3152, %v3666
  %3725 = vst.msk [vmem:[%s3720 + $0x41] sm:$0xff] %vm3152, %v3667
  %3726 = vst.msk [vmem:[%s3720 + $0x51] sm:$0xff] %vm3152, %v3668
  %3727 = vst.msk [vmem:[%s3720 + $0x61] sm:$0xff] %vm3152, %v3669
  %3728 = vst.msk [vmem:[%s3720 + $0x71] sm:$0xff] %vm3152, %v3670
  %3729 = vst.msk [vmem:[%s3720 + $0xa1] sm:$0xff] %vm3152, %v3671
  %3730 = vst.msk [vmem:[%s3720 + $0xb1] sm:$0xff] %vm3152, %v3672
  %3731 = vst.msk [vmem:[%s3720 + $0xc1] sm:$0xff] %vm3152, %v3673
  %3732 = vst.msk [vmem:[%s3720 + $0xd1] sm:$0xff] %vm3152, %v3674
  %3733 = vst.msk [vmem:[%s3720 + $0xe1] sm:$0xff] %vm3152, %v3675
  %3734 = vst.msk [vmem:[%s3720 + $0xf1] sm:$0xff] %vm3152, %v3676
  %3735 = vst.msk [vmem:[%s3720 + $0x101] sm:$0xff] %vm3152, %v3677
  %3736 = vst.msk [vmem:[%s3720 + $0x111] sm:$0xff] %vm3152, %v3678
  %v3737 = vld [vmem:[#allocation3] sm:$0xff]
  %v3738 = vld [vmem:[#allocation3 + $0x10] sm:$0xff]
  %v3739 = vld [vmem:[#allocation3 + $0x20] sm:$0xff]
  %v3740 = vld [vmem:[#allocation3 + $0x30] sm:$0xff]
  %v3741 = vld [vmem:[#allocation3 + $0x40] sm:$0xff]
  %v3742 = vld [vmem:[#allocation3 + $0x50] sm:$0xff]
  %v3743 = vld [vmem:[#allocation3 + $0x60] sm:$0xff]
  %v3744 = vld [vmem:[#allocation3 + $0x70] sm:$0xff]
  %v3745 = vld [vmem:[#allocation3 + $0xa0] sm:$0xff]
  %v3746 = vld [vmem:[#allocation3 + $0xb0] sm:$0xff]
  %v3747 = vld [vmem:[#allocation3 + $0xc0] sm:$0xff]
  %v3748 = vld [vmem:[#allocation3 + $0xd0] sm:$0xff]
  %v3749 = vld [vmem:[#allocation3 + $0xe0] sm:$0xff]
  %v3750 = vld [vmem:[#allocation3 + $0xf0] sm:$0xff]
  %v3751 = vld [vmem:[#allocation3 + $0x100] sm:$0xff]
  %v3752 = vld [vmem:[#allocation3 + $0x110] sm:$0xff]
  %v3753 = vpack.c.bf16 %v3738, %v3737
  %v3754 = vpack.c.bf16 %v3740, %v3739
  %v3755 = vpack.c.bf16 %v3742, %v3741
  %v3756 = vpack.c.bf16 %v3744, %v3743
  %v3757 = vpack.c.bf16 %v3746, %v3745
  %v3758 = vpack.c.bf16 %v3748, %v3747
  %v3759 = vpack.c.bf16 %v3750, %v3749
  %v3760 = vpack.c.bf16 %v3752, %v3751
  %v3761 = vld [vmem:[%s3] sm:$0xf]
  %v3762 = vld [vmem:[#allocation3 + $0x1] sm:$0xff]
  %v3763 = vld [vmem:[#allocation3 + $0x11] sm:$0xff]
  %v3764 = vld [vmem:[#allocation3 + $0x21] sm:$0xff]
  %v3765 = vld [vmem:[#allocation3 + $0x31] sm:$0xff]
  %v3766 = vld [vmem:[#allocation3 + $0x41] sm:$0xff]
  %v3767 = vld [vmem:[#allocation3 + $0x51] sm:$0xff]
  %v3768 = vld [vmem:[#allocation3 + $0x61] sm:$0xff]
  %v3769 = vld [vmem:[#allocation3 + $0x71] sm:$0xff]
  %v3770 = vld [vmem:[#allocation3 + $0xa1] sm:$0xff]
  %v3771 = vld [vmem:[#allocation3 + $0xb1] sm:$0xff]
  %v3772 = vld [vmem:[#allocation3 + $0xc1] sm:$0xff]
  %v3773 = vld [vmem:[#allocation3 + $0xd1] sm:$0xff]
  %v3774 = vld [vmem:[#allocation3 + $0xe1] sm:$0xff]
  %v3775 = vld [vmem:[#allocation3 + $0xf1] sm:$0xff]
  %v3776 = vld [vmem:[#allocation3 + $0x101] sm:$0xff]
  %v3777 = vld [vmem:[#allocation3 + $0x111] sm:$0xff]
  %v3778 = vpack.c.bf16 %v3763, %v3762
  %v3779 = vpack.c.bf16 %v3765, %v3764
  %v3780 = vpack.c.bf16 %v3767, %v3766
  %v3781 = vpack.c.bf16 %v3769, %v3768
  %v3782 = vpack.c.bf16 %v3771, %v3770
  %v3783 = vpack.c.bf16 %v3773, %v3772
  %v3784 = vpack.c.bf16 %v3775, %v3774
  %v3785 = vpack.c.bf16 %v3777, %v3776
  %s3786 = scalar_lea.vmem %s3, 4
  %v3787 = vld [vmem:[%s3786] sm:$0xf]
  %v3789 = vsel %vm3152, %v3778, 0
  %v3792 = vsel %vm3152, %v3779, 0
  %v3795 = vsel %vm3152, %v3780, 0
  %v3798 = vsel %vm3152, %v3781, 0
  %v3801 = vsel %vm3152, %v3782, 0
  %v3804 = vsel %vm3152, %v3783, 0
  %v3807 = vsel %vm3152, %v3784, 0
  %v3810 = vsel %vm3152, %v3785, 0
  %v3813 = vsel %vm1453, %v3787, 0
  %3815 = vmatpush.bf16.msra.mxu0 0
  %3816 = vmatpush.bf16.msra.mxu0 0
  %3817 = vmatpush.bf16.msra.mxu0 0
  %3818 = vmatpush.bf16.msra.mxu0 0
  %3819 = vmatpush.bf16.msra.mxu0 0
  %3820 = vmatpush.bf16.msra.mxu0 0
  %3821 = vmatpush.bf16.msra.mxu0 0
  %3822 = vmatpush.bf16.msra.mxu0 %v3813
  %3823 = vmatmul.bf16.gmra.mxu0 %v3789
  %v3824 = vpop.f32.mrf.mxu0
  %v3825 = vadd.f32 0.0, %v3824
  %v3826 = vpop.f32.mrf.mxu0
  %v3827 = vadd.f32 0.0, %v3826
  %3828 = vmatmul.bf16.gmra.mxu0 %v3792
  %v3829 = vpop.f32.mrf.mxu0
  %v3830 = vadd.f32 0.0, %v3829
  %v3831 = vpop.f32.mrf.mxu0
  %v3832 = vadd.f32 0.0, %v3831
  %3833 = vmatmul.bf16.gmra.mxu0 %v3795
  %v3834 = vpop.f32.mrf.mxu0
  %v3835 = vadd.f32 0.0, %v3834
  %v3836 = vpop.f32.mrf.mxu0
  %v3837 = vadd.f32 0.0, %v3836
  %3838 = vmatmul.bf16.gmra.mxu0 %v3798
  %v3839 = vpop.f32.mrf.mxu0
  %v3840 = vadd.f32 0.0, %v3839
  %v3841 = vpop.f32.mrf.mxu0
  %v3842 = vadd.f32 0.0, %v3841
  %3843 = vmatmul.bf16.gmra.mxu0 %v3801
  %v3844 = vpop.f32.mrf.mxu0
  %v3845 = vadd.f32 0.0, %v3844
  %v3846 = vpop.f32.mrf.mxu0
  %v3847 = vadd.f32 0.0, %v3846
  %3848 = vmatmul.bf16.gmra.mxu0 %v3804
  %v3849 = vpop.f32.mrf.mxu0
  %v3850 = vadd.f32 0.0, %v3849
  %v3851 = vpop.f32.mrf.mxu0
  %v3852 = vadd.f32 0.0, %v3851
  %3853 = vmatmul.bf16.gmra.mxu0 %v3807
  %v3854 = vpop.f32.mrf.mxu0
  %v3855 = vadd.f32 0.0, %v3854
  %v3856 = vpop.f32.mrf.mxu0
  %v3857 = vadd.f32 0.0, %v3856
  %3858 = vmatmul.bf16.gmra.mxu0 %v3810
  %v3859 = vpop.f32.mrf.mxu0
  %v3860 = vadd.f32 0.0, %v3859
  %v3861 = vpop.f32.mrf.mxu0
  %v3862 = vadd.f32 0.0, %v3861
  %3863 = vdwg.mxu0
  %v3865 = vsel %vm3152, %v3753, 0
  %v3868 = vsel %vm3152, %v3754, 0
  %v3871 = vsel %vm3152, %v3755, 0
  %v3874 = vsel %vm3152, %v3756, 0
  %v3877 = vsel %vm3152, %v3757, 0
  %v3880 = vsel %vm3152, %v3758, 0
  %v3883 = vsel %vm3152, %v3759, 0
  %v3886 = vsel %vm3152, %v3760, 0
  %v3889 = vsel %vm1453, %v3761, 0
  %3891 = vmatpush.bf16.msra.mxu0 0
  %3892 = vmatpush.bf16.msra.mxu0 0
  %3893 = vmatpush.bf16.msra.mxu0 0
  %3894 = vmatpush.bf16.msra.mxu0 0
  %3895 = vmatpush.bf16.msra.mxu0 0
  %3896 = vmatpush.bf16.msra.mxu0 0
  %3897 = vmatpush.bf16.msra.mxu0 0
  %3898 = vmatpush.bf16.msra.mxu0 %v3889
  %3899 = vmatmul.bf16.gmra.mxu0 %v3865
  %v3900 = vpop.f32.mrf.mxu0
  %v3901 = vadd.f32 %v3825, %v3900
  %v3902 = vpop.f32.mrf.mxu0
  %v3903 = vadd.f32 %v3827, %v3902
  %3904 = vmatmul.bf16.gmra.mxu0 %v3868
  %v3905 = vpop.f32.mrf.mxu0
  %v3906 = vadd.f32 %v3830, %v3905
  %v3907 = vpop.f32.mrf.mxu0
  %v3908 = vadd.f32 %v3832, %v3907
  %3909 = vmatmul.bf16.gmra.mxu0 %v3871
  %v3910 = vpop.f32.mrf.mxu0
  %v3911 = vadd.f32 %v3835, %v3910
  %v3912 = vpop.f32.mrf.mxu0
  %v3913 = vadd.f32 %v3837, %v3912
  %3914 = vmatmul.bf16.gmra.mxu0 %v3874
  %v3915 = vpop.f32.mrf.mxu0
  %v3916 = vadd.f32 %v3840, %v3915
  %v3917 = vpop.f32.mrf.mxu0
  %v3918 = vadd.f32 %v3842, %v3917
  %3919 = vmatmul.bf16.gmra.mxu0 %v3877
  %v3920 = vpop.f32.mrf.mxu0
  %v3921 = vadd.f32 %v3845, %v3920
  %v3922 = vpop.f32.mrf.mxu0
  %v3923 = vadd.f32 %v3847, %v3922
  %3924 = vmatmul.bf16.gmra.mxu0 %v3880
  %v3925 = vpop.f32.mrf.mxu0
  %v3926 = vadd.f32 %v3850, %v3925
  %v3927 = vpop.f32.mrf.mxu0
  %v3928 = vadd.f32 %v3852, %v3927
  %3929 = vmatmul.bf16.gmra.mxu0 %v3883
  %v3930 = vpop.f32.mrf.mxu0
  %v3931 = vadd.f32 %v3855, %v3930
  %v3932 = vpop.f32.mrf.mxu0
  %v3933 = vadd.f32 %v3857, %v3932
  %3934 = vmatmul.bf16.gmra.mxu0 %v3886
  %v3935 = vpop.f32.mrf.mxu0
  %v3936 = vadd.f32 %v3860, %v3935
  %v3937 = vpop.f32.mrf.mxu0
  %v3938 = vadd.f32 %v3862, %v3937
  %3939 = vdwg.mxu0
  %v3940 = vld [vmem:[#allocation3 + $0x2] sm:$0xff]
  %v3941 = vld [vmem:[#allocation3 + $0x12] sm:$0xff]
  %v3942 = vld [vmem:[#allocation3 + $0x22] sm:$0xff]
  %v3943 = vld [vmem:[#allocation3 + $0x32] sm:$0xff]
  %v3944 = vld [vmem:[#allocation3 + $0x42] sm:$0xff]
  %v3945 = vld [vmem:[#allocation3 + $0x52] sm:$0xff]
  %v3946 = vld [vmem:[#allocation3 + $0x62] sm:$0xff]
  %v3947 = vld [vmem:[#allocation3 + $0x72] sm:$0xff]
  %v3948 = vld [vmem:[#allocation3 + $0xa2] sm:$0xff]
  %v3949 = vld [vmem:[#allocation3 + $0xb2] sm:$0xff]
  %v3950 = vld [vmem:[#allocation3 + $0xc2] sm:$0xff]
  %v3951 = vld [vmem:[#allocation3 + $0xd2] sm:$0xff]
  %v3952 = vld [vmem:[#allocation3 + $0xe2] sm:$0xff]
  %v3953 = vld [vmem:[#allocation3 + $0xf2] sm:$0xff]
  %v3954 = vld [vmem:[#allocation3 + $0x102] sm:$0xff]
  %v3955 = vld [vmem:[#allocation3 + $0x112] sm:$0xff]
  %v3956 = vpack.c.bf16 %v3941, %v3940
  %v3957 = vpack.c.bf16 %v3943, %v3942
  %v3958 = vpack.c.bf16 %v3945, %v3944
  %v3959 = vpack.c.bf16 %v3947, %v3946
  %v3960 = vpack.c.bf16 %v3949, %v3948
  %v3961 = vpack.c.bf16 %v3951, %v3950
  %v3962 = vpack.c.bf16 %v3953, %v3952
  %v3963 = vpack.c.bf16 %v3955, %v3954
  %s3964 = scalar_lea.vmem %s3, 8
  %v3965 = vld [vmem:[%s3964] sm:$0xf]
  %v3967 = vsel %vm3152, %v3956, 0
  %v3970 = vsel %vm3152, %v3957, 0
  %v3973 = vsel %vm3152, %v3958, 0
  %v3976 = vsel %vm3152, %v3959, 0
  %v3979 = vsel %vm3152, %v3960, 0
  %v3982 = vsel %vm3152, %v3961, 0
  %v3985 = vsel %vm3152, %v3962, 0
  %v3988 = vsel %vm3152, %v3963, 0
  %v3991 = vsel %vm1453, %v3965, 0
  %3993 = vmatpush.bf16.msra.mxu0 0
  %3994 = vmatpush.bf16.msra.mxu0 0
  %3995 = vmatpush.bf16.msra.mxu0 0
  %3996 = vmatpush.bf16.msra.mxu0 0
  %3997 = vmatpush.bf16.msra.mxu0 0
  %3998 = vmatpush.bf16.msra.mxu0 0
  %3999 = vmatpush.bf16.msra.mxu0 0
  %4000 = vmatpush.bf16.msra.mxu0 %v3991
  %4001 = vmatmul.bf16.gmra.mxu0 %v3967
  %v4002 = vpop.f32.mrf.mxu0
  %v4003 = vadd.f32 0.0, %v4002
  %v4004 = vpop.f32.mrf.mxu0
  %v4005 = vadd.f32 0.0, %v4004
  %4006 = vmatmul.bf16.gmra.mxu0 %v3970
  %v4007 = vpop.f32.mrf.mxu0
  %v4008 = vadd.f32 0.0, %v4007
  %v4009 = vpop.f32.mrf.mxu0
  %v4010 = vadd.f32 0.0, %v4009
  %4011 = vmatmul.bf16.gmra.mxu0 %v3973
  %v4012 = vpop.f32.mrf.mxu0
  %v4013 = vadd.f32 0.0, %v4012
  %v4014 = vpop.f32.mrf.mxu0
  %v4015 = vadd.f32 0.0, %v4014
  %4016 = vmatmul.bf16.gmra.mxu0 %v3976
  %v4017 = vpop.f32.mrf.mxu0
  %v4018 = vadd.f32 0.0, %v4017
  %v4019 = vpop.f32.mrf.mxu0
  %v4020 = vadd.f32 0.0, %v4019
  %4021 = vmatmul.bf16.gmra.mxu0 %v3979
  %v4022 = vpop.f32.mrf.mxu0
  %v4023 = vadd.f32 0.0, %v4022
  %v4024 = vpop.f32.mrf.mxu0
  %v4025 = vadd.f32 0.0, %v4024
  %4026 = vmatmul.bf16.gmra.mxu0 %v3982
  %v4027 = vpop.f32.mrf.mxu0
  %v4028 = vadd.f32 0.0, %v4027
  %v4029 = vpop.f32.mrf.mxu0
  %v4030 = vadd.f32 0.0, %v4029
  %4031 = vmatmul.bf16.gmra.mxu0 %v3985
  %v4032 = vpop.f32.mrf.mxu0
  %v4033 = vadd.f32 0.0, %v4032
  %v4034 = vpop.f32.mrf.mxu0
  %v4035 = vadd.f32 0.0, %v4034
  %4036 = vmatmul.bf16.gmra.mxu0 %v3988
  %v4037 = vpop.f32.mrf.mxu0
  %v4038 = vadd.f32 0.0, %v4037
  %v4039 = vpop.f32.mrf.mxu0
  %v4040 = vadd.f32 0.0, %v4039
  %4041 = vdwg.mxu0
  %v4042 = vadd.f32 %v3901, %v4003
  %v4043 = vadd.f32 %v3903, %v4005
  %v4044 = vadd.f32 %v3906, %v4008
  %v4045 = vadd.f32 %v3908, %v4010
  %v4046 = vadd.f32 %v3911, %v4013
  %v4047 = vadd.f32 %v3913, %v4015
  %v4048 = vadd.f32 %v3916, %v4018
  %v4049 = vadd.f32 %v3918, %v4020
  %v4050 = vadd.f32 %v3921, %v4023
  %v4051 = vadd.f32 %v3923, %v4025
  %v4052 = vadd.f32 %v3926, %v4028
  %v4053 = vadd.f32 %v3928, %v4030
  %v4054 = vadd.f32 %v3931, %v4033
  %v4055 = vadd.f32 %v3933, %v4035
  %v4056 = vadd.f32 %v3936, %v4038
  %v4057 = vadd.f32 %v3938, %v4040
  %v4058 = vld [vmem:[%s3720] sm:$0xff]
  %v4059 = vld [vmem:[%s3720 + $0x10] sm:$0xff]
  %v4060 = vld [vmem:[%s3720 + $0x20] sm:$0xff]
  %v4061 = vld [vmem:[%s3720 + $0x30] sm:$0xff]
  %v4062 = vld [vmem:[%s3720 + $0x40] sm:$0xff]
  %v4063 = vld [vmem:[%s3720 + $0x50] sm:$0xff]
  %v4064 = vld [vmem:[%s3720 + $0x60] sm:$0xff]
  %v4065 = vld [vmem:[%s3720 + $0x70] sm:$0xff]
  %v4066 = vld [vmem:[%s3720 + $0xa0] sm:$0xff]
  %v4067 = vld [vmem:[%s3720 + $0xb0] sm:$0xff]
  %v4068 = vld [vmem:[%s3720 + $0xc0] sm:$0xff]
  %v4069 = vld [vmem:[%s3720 + $0xd0] sm:$0xff]
  %v4070 = vld [vmem:[%s3720 + $0xe0] sm:$0xff]
  %v4071 = vld [vmem:[%s3720 + $0xf0] sm:$0xff]
  %v4072 = vld [vmem:[%s3720 + $0x100] sm:$0xff]
  %v4073 = vld [vmem:[%s3720 + $0x110] sm:$0xff]
  %v4074 = vpack.c.bf16 %v4059, %v4058
  %v4075 = vpack.c.bf16 %v4061, %v4060
  %v4076 = vpack.c.bf16 %v4063, %v4062
  %v4077 = vpack.c.bf16 %v4065, %v4064
  %v4078 = vpack.c.bf16 %v4067, %v4066
  %v4079 = vpack.c.bf16 %v4069, %v4068
  %v4080 = vpack.c.bf16 %v4071, %v4070
  %v4081 = vpack.c.bf16 %v4073, %v4072
  %s4082 = scalar_lea.vmem %s3, 12
  %v4083 = vld [vmem:[%s4082] sm:$0xf]
  %v4085 = vsel %vm3152, %v4074, 0
  %v4088 = vsel %vm3152, %v4075, 0
  %v4091 = vsel %vm3152, %v4076, 0
  %v4094 = vsel %vm3152, %v4077, 0
  %v4097 = vsel %vm3152, %v4078, 0
  %v4100 = vsel %vm3152, %v4079, 0
  %v4103 = vsel %vm3152, %v4080, 0
  %v4106 = vsel %vm3152, %v4081, 0
  %v4109 = vsel %vm1453, %v4083, 0
  %4111 = vmatpush.bf16.msra.mxu0 0
  %4112 = vmatpush.bf16.msra.mxu0 0
  %4113 = vmatpush.bf16.msra.mxu0 0
  %4114 = vmatpush.bf16.msra.mxu0 0
  %4115 = vmatpush.bf16.msra.mxu0 0
  %4116 = vmatpush.bf16.msra.mxu0 0
  %4117 = vmatpush.bf16.msra.mxu0 0
  %4118 = vmatpush.bf16.msra.mxu0 %v4109
  %4119 = vmatmul.bf16.gmra.mxu0 %v4085
  %v4120 = vpop.f32.mrf.mxu0
  %v4121 = vadd.f32 0.0, %v4120
  %v4122 = vpop.f32.mrf.mxu0
  %v4123 = vadd.f32 0.0, %v4122
  %4124 = vmatmul.bf16.gmra.mxu0 %v4088
  %v4125 = vpop.f32.mrf.mxu0
  %v4126 = vadd.f32 0.0, %v4125
  %v4127 = vpop.f32.mrf.mxu0
  %v4128 = vadd.f32 0.0, %v4127
  %4129 = vmatmul.bf16.gmra.mxu0 %v4091
  %v4130 = vpop.f32.mrf.mxu0
  %v4131 = vadd.f32 0.0, %v4130
  %v4132 = vpop.f32.mrf.mxu0
  %v4133 = vadd.f32 0.0, %v4132
  %4134 = vmatmul.bf16.gmra.mxu0 %v4094
  %v4135 = vpop.f32.mrf.mxu0
  %v4136 = vadd.f32 0.0, %v4135
  %v4137 = vpop.f32.mrf.mxu0
  %v4138 = vadd.f32 0.0, %v4137
  %4139 = vmatmul.bf16.gmra.mxu0 %v4097
  %v4140 = vpop.f32.mrf.mxu0
  %v4141 = vadd.f32 0.0, %v4140
  %v4142 = vpop.f32.mrf.mxu0
  %v4143 = vadd.f32 0.0, %v4142
  %4144 = vmatmul.bf16.gmra.mxu0 %v4100
  %v4145 = vpop.f32.mrf.mxu0
  %v4146 = vadd.f32 0.0, %v4145
  %v4147 = vpop.f32.mrf.mxu0
  %v4148 = vadd.f32 0.0, %v4147
  %4149 = vmatmul.bf16.gmra.mxu0 %v4103
  %v4150 = vpop.f32.mrf.mxu0
  %v4151 = vadd.f32 0.0, %v4150
  %v4152 = vpop.f32.mrf.mxu0
  %v4153 = vadd.f32 0.0, %v4152
  %4154 = vmatmul.bf16.gmra.mxu0 %v4106
  %v4155 = vpop.f32.mrf.mxu0
  %v4156 = vadd.f32 0.0, %v4155
  %v4157 = vpop.f32.mrf.mxu0
  %v4158 = vadd.f32 0.0, %v4157
  %4159 = vdwg.mxu0
  %v4160 = vadd.f32 %v4042, %v4121
  %v4161 = vadd.f32 %v4043, %v4123
  %v4162 = vadd.f32 %v4044, %v4126
  %v4163 = vadd.f32 %v4045, %v4128
  %v4164 = vadd.f32 %v4046, %v4131
  %v4165 = vadd.f32 %v4047, %v4133
  %v4166 = vadd.f32 %v4048, %v4136
  %v4167 = vadd.f32 %v4049, %v4138
  %v4168 = vadd.f32 %v4050, %v4141
  %v4169 = vadd.f32 %v4051, %v4143
  %v4170 = vadd.f32 %v4052, %v4146
  %v4171 = vadd.f32 %v4053, %v4148
  %v4172 = vadd.f32 %v4054, %v4151
  %v4173 = vadd.f32 %v4055, %v4153
  %v4174 = vadd.f32 %v4056, %v4156
  %v4175 = vadd.f32 %v4057, %v4158
  %v4176 = vld [vmem:[%s3720 + $0x1] sm:$0xff]
  %v4177 = vld [vmem:[%s3720 + $0x11] sm:$0xff]
  %v4178 = vld [vmem:[%s3720 + $0x21] sm:$0xff]
  %v4179 = vld [vmem:[%s3720 + $0x31] sm:$0xff]
  %v4180 = vld [vmem:[%s3720 + $0x41] sm:$0xff]
  %v4181 = vld [vmem:[%s3720 + $0x51] sm:$0xff]
  %v4182 = vld [vmem:[%s3720 + $0x61] sm:$0xff]
  %v4183 = vld [vmem:[%s3720 + $0x71] sm:$0xff]
  %v4184 = vld [vmem:[%s3720 + $0xa1] sm:$0xff]
  %v4185 = vld [vmem:[%s3720 + $0xb1] sm:$0xff]
  %v4186 = vld [vmem:[%s3720 + $0xc1] sm:$0xff]
  %v4187 = vld [vmem:[%s3720 + $0xd1] sm:$0xff]
  %v4188 = vld [vmem:[%s3720 + $0xe1] sm:$0xff]
  %v4189 = vld [vmem:[%s3720 + $0xf1] sm:$0xff]
  %v4190 = vld [vmem:[%s3720 + $0x101] sm:$0xff]
  %v4191 = vld [vmem:[%s3720 + $0x111] sm:$0xff]
  %v4192 = vpack.c.bf16 %v4177, %v4176
  %v4193 = vpack.c.bf16 %v4179, %v4178
  %v4194 = vpack.c.bf16 %v4181, %v4180
  %v4195 = vpack.c.bf16 %v4183, %v4182
  %v4196 = vpack.c.bf16 %v4185, %v4184
  %v4197 = vpack.c.bf16 %v4187, %v4186
  %v4198 = vpack.c.bf16 %v4189, %v4188
  %v4199 = vpack.c.bf16 %v4191, %v4190
  %s4200 = scalar_lea.vmem %s3, 16
  %v4201 = vld [vmem:[%s4200] sm:$0xf]
  %v4203 = vsel %vm3152, %v4192, 0
  %v4206 = vsel %vm3152, %v4193, 0
  %v4209 = vsel %vm3152, %v4194, 0
  %v4212 = vsel %vm3152, %v4195, 0
  %v4215 = vsel %vm3152, %v4196, 0
  %v4218 = vsel %vm3152, %v4197, 0
  %v4221 = vsel %vm3152, %v4198, 0
  %v4224 = vsel %vm3152, %v4199, 0
  %v4227 = vsel %vm1453, %v4201, 0
  %4229 = vmatpush.bf16.msra.mxu0 0
  %4230 = vmatpush.bf16.msra.mxu0 0
  %4231 = vmatpush.bf16.msra.mxu0 0
  %4232 = vmatpush.bf16.msra.mxu0 0
  %4233 = vmatpush.bf16.msra.mxu0 0
  %4234 = vmatpush.bf16.msra.mxu0 0
  %4235 = vmatpush.bf16.msra.mxu0 0
  %4236 = vmatpush.bf16.msra.mxu0 %v4227
  %4237 = vmatmul.bf16.gmra.mxu0 %v4203
  %v4238 = vpop.f32.mrf.mxu0
  %v4239 = vadd.f32 0.0, %v4238
  %v4240 = vpop.f32.mrf.mxu0
  %v4241 = vadd.f32 0.0, %v4240
  %4242 = vmatmul.bf16.gmra.mxu0 %v4206
  %v4243 = vpop.f32.mrf.mxu0
  %v4244 = vadd.f32 0.0, %v4243
  %v4245 = vpop.f32.mrf.mxu0
  %v4246 = vadd.f32 0.0, %v4245
  %4247 = vmatmul.bf16.gmra.mxu0 %v4209
  %v4248 = vpop.f32.mrf.mxu0
  %v4249 = vadd.f32 0.0, %v4248
  %v4250 = vpop.f32.mrf.mxu0
  %v4251 = vadd.f32 0.0, %v4250
  %4252 = vmatmul.bf16.gmra.mxu0 %v4212
  %v4253 = vpop.f32.mrf.mxu0
  %v4254 = vadd.f32 0.0, %v4253
  %v4255 = vpop.f32.mrf.mxu0
  %v4256 = vadd.f32 0.0, %v4255
  %4257 = vmatmul.bf16.gmra.mxu0 %v4215
  %v4258 = vpop.f32.mrf.mxu0
  %v4259 = vadd.f32 0.0, %v4258
  %v4260 = vpop.f32.mrf.mxu0
  %v4261 = vadd.f32 0.0, %v4260
  %4262 = vmatmul.bf16.gmra.mxu0 %v4218
  %v4263 = vpop.f32.mrf.mxu0
  %v4264 = vadd.f32 0.0, %v4263
  %v4265 = vpop.f32.mrf.mxu0
  %v4266 = vadd.f32 0.0, %v4265
  %4267 = vmatmul.bf16.gmra.mxu0 %v4221
  %v4268 = vpop.f32.mrf.mxu0
  %v4269 = vadd.f32 0.0, %v4268
  %v4270 = vpop.f32.mrf.mxu0
  %v4271 = vadd.f32 0.0, %v4270
  %4272 = vmatmul.bf16.gmra.mxu0 %v4224
  %v4273 = vpop.f32.mrf.mxu0
  %v4274 = vadd.f32 0.0, %v4273
  %v4275 = vpop.f32.mrf.mxu0
  %v4276 = vadd.f32 0.0, %v4275
  %4277 = vdwg.mxu0
  %v4278 = vadd.f32 %v4160, %v4239
  %v4279 = vadd.f32 %v4161, %v4241
  %v4280 = vadd.f32 %v4162, %v4244
  %v4281 = vadd.f32 %v4163, %v4246
  %v4282 = vadd.f32 %v4164, %v4249
  %v4283 = vadd.f32 %v4165, %v4251
  %v4284 = vadd.f32 %v4166, %v4254
  %v4285 = vadd.f32 %v4167, %v4256
  %v4286 = vadd.f32 %v4168, %v4259
  %v4287 = vadd.f32 %v4169, %v4261
  %v4288 = vadd.f32 %v4170, %v4264
  %v4289 = vadd.f32 %v4171, %v4266
  %v4290 = vadd.f32 %v4172, %v4269
  %v4291 = vadd.f32 %v4173, %v4271
  %v4292 = vadd.f32 %v4174, %v4274
  %v4293 = vadd.f32 %v4175, %v4276
  %v4294 = vld [vmem:[%s3720 + $0x2] sm:$0xff]
  %v4295 = vld [vmem:[%s3720 + $0x12] sm:$0xff]
  %v4296 = vld [vmem:[%s3720 + $0x22] sm:$0xff]
  %v4297 = vld [vmem:[%s3720 + $0x32] sm:$0xff]
  %v4298 = vld [vmem:[%s3720 + $0x42] sm:$0xff]
  %v4299 = vld [vmem:[%s3720 + $0x52] sm:$0xff]
  %v4300 = vld [vmem:[%s3720 + $0x62] sm:$0xff]
  %v4301 = vld [vmem:[%s3720 + $0x72] sm:$0xff]
  %v4302 = vld [vmem:[%s3720 + $0xa2] sm:$0xff]
  %v4303 = vld [vmem:[%s3720 + $0xb2] sm:$0xff]
  %v4304 = vld [vmem:[%s3720 + $0xc2] sm:$0xff]
  %v4305 = vld [vmem:[%s3720 + $0xd2] sm:$0xff]
  %v4306 = vld [vmem:[%s3720 + $0xe2] sm:$0xff]
  %v4307 = vld [vmem:[%s3720 + $0xf2] sm:$0xff]
  %v4308 = vld [vmem:[%s3720 + $0x102] sm:$0xff]
  %v4309 = vld [vmem:[%s3720 + $0x112] sm:$0xff]
  %v4310 = vpack.c.bf16 %v4295, %v4294
  %v4311 = vpack.c.bf16 %v4297, %v4296
  %v4312 = vpack.c.bf16 %v4299, %v4298
  %v4313 = vpack.c.bf16 %v4301, %v4300
  %v4314 = vpack.c.bf16 %v4303, %v4302
  %v4315 = vpack.c.bf16 %v4305, %v4304
  %v4316 = vpack.c.bf16 %v4307, %v4306
  %v4317 = vpack.c.bf16 %v4309, %v4308
  %s4318 = scalar_lea.vmem %s3, 20
  %v4319 = vld [vmem:[%s4318] sm:$0xf]
  %v4321 = vsel %vm3152, %v4310, 0
  %v4324 = vsel %vm3152, %v4311, 0
  %v4327 = vsel %vm3152, %v4312, 0
  %v4330 = vsel %vm3152, %v4313, 0
  %v4333 = vsel %vm3152, %v4314, 0
  %v4336 = vsel %vm3152, %v4315, 0
  %v4339 = vsel %vm3152, %v4316, 0
  %v4342 = vsel %vm3152, %v4317, 0
  %v4345 = vsel %vm1453, %v4319, 0
  %4347 = vmatpush.bf16.msra.mxu0 0
  %4348 = vmatpush.bf16.msra.mxu0 0
  %4349 = vmatpush.bf16.msra.mxu0 0
  %4350 = vmatpush.bf16.msra.mxu0 0
  %4351 = vmatpush.bf16.msra.mxu0 0
  %4352 = vmatpush.bf16.msra.mxu0 0
  %4353 = vmatpush.bf16.msra.mxu0 0
  %4354 = vmatpush.bf16.msra.mxu0 %v4345
  %4355 = vmatmul.bf16.gmra.mxu0 %v4321
  %v4356 = vpop.f32.mrf.mxu0
  %v4357 = vadd.f32 0.0, %v4356
  %v4358 = vpop.f32.mrf.mxu0
  %v4359 = vadd.f32 0.0, %v4358
  %4360 = vmatmul.bf16.gmra.mxu0 %v4324
  %v4361 = vpop.f32.mrf.mxu0
  %v4362 = vadd.f32 0.0, %v4361
  %v4363 = vpop.f32.mrf.mxu0
  %v4364 = vadd.f32 0.0, %v4363
  %4365 = vmatmul.bf16.gmra.mxu0 %v4327
  %v4366 = vpop.f32.mrf.mxu0
  %v4367 = vadd.f32 0.0, %v4366
  %v4368 = vpop.f32.mrf.mxu0
  %v4369 = vadd.f32 0.0, %v4368
  %4370 = vmatmul.bf16.gmra.mxu0 %v4330
  %v4371 = vpop.f32.mrf.mxu0
  %v4372 = vadd.f32 0.0, %v4371
  %v4373 = vpop.f32.mrf.mxu0
  %v4374 = vadd.f32 0.0, %v4373
  %4375 = vmatmul.bf16.gmra.mxu0 %v4333
  %v4376 = vpop.f32.mrf.mxu0
  %v4377 = vadd.f32 0.0, %v4376
  %v4378 = vpop.f32.mrf.mxu0
  %v4379 = vadd.f32 0.0, %v4378
  %4380 = vmatmul.bf16.gmra.mxu0 %v4336
  %v4381 = vpop.f32.mrf.mxu0
  %v4382 = vadd.f32 0.0, %v4381
  %v4383 = vpop.f32.mrf.mxu0
  %v4384 = vadd.f32 0.0, %v4383
  %4385 = vmatmul.bf16.gmra.mxu0 %v4339
  %v4386 = vpop.f32.mrf.mxu0
  %v4387 = vadd.f32 0.0, %v4386
  %v4388 = vpop.f32.mrf.mxu0
  %v4389 = vadd.f32 0.0, %v4388
  %4390 = vmatmul.bf16.gmra.mxu0 %v4342
  %v4391 = vpop.f32.mrf.mxu0
  %v4392 = vadd.f32 0.0, %v4391
  %v4393 = vpop.f32.mrf.mxu0
  %v4394 = vadd.f32 0.0, %v4393
  %4395 = vdwg.mxu0
  %v4396 = vadd.f32 %v4278, %v4357
  %v4397 = vadd.f32 %v4279, %v4359
  %v4398 = vadd.f32 %v4280, %v4362
  %v4399 = vadd.f32 %v4281, %v4364
  %v4400 = vadd.f32 %v4282, %v4367
  %v4401 = vadd.f32 %v4283, %v4369
  %v4402 = vadd.f32 %v4284, %v4372
  %v4403 = vadd.f32 %v4285, %v4374
  %v4404 = vadd.f32 %v4286, %v4377
  %v4405 = vadd.f32 %v4287, %v4379
  %v4406 = vadd.f32 %v4288, %v4382
  %v4407 = vadd.f32 %v4289, %v4384
  %v4408 = vadd.f32 %v4290, %v4387
  %v4409 = vadd.f32 %v4291, %v4389
  %v4410 = vadd.f32 %v4292, %v4392
  %v4411 = vadd.f32 %v4293, %v4394
  %s4412 = scalar_lea.vmem [#allocation3], 32
  %v4413 = vld [vmem:[%s4412] sm:$0xff]
  %v4414 = vld [vmem:[%s4412 + $0x10] sm:$0xff]
  %v4415 = vld [vmem:[%s4412 + $0x20] sm:$0xff]
  %v4416 = vld [vmem:[%s4412 + $0x30] sm:$0xff]
  %v4417 = vld [vmem:[%s4412 + $0x40] sm:$0xff]
  %v4418 = vld [vmem:[%s4412 + $0x50] sm:$0xff]
  %v4419 = vld [vmem:[%s4412 + $0x60] sm:$0xff]
  %v4420 = vld [vmem:[%s4412 + $0x70] sm:$0xff]
  %v4421 = vld [vmem:[%s4412 + $0xa0] sm:$0xff]
  %v4422 = vld [vmem:[%s4412 + $0xb0] sm:$0xff]
  %v4423 = vld [vmem:[%s4412 + $0xc0] sm:$0xff]
  %v4424 = vld [vmem:[%s4412 + $0xd0] sm:$0xff]
  %v4425 = vld [vmem:[%s4412 + $0xe0] sm:$0xff]
  %v4426 = vld [vmem:[%s4412 + $0xf0] sm:$0xff]
  %v4427 = vld [vmem:[%s4412 + $0x100] sm:$0xff]
  %v4428 = vld [vmem:[%s4412 + $0x110] sm:$0xff]
  %v4429 = vpack.c.bf16 %v4414, %v4413
  %v4430 = vpack.c.bf16 %v4416, %v4415
  %v4431 = vpack.c.bf16 %v4418, %v4417
  %v4432 = vpack.c.bf16 %v4420, %v4419
  %v4433 = vpack.c.bf16 %v4422, %v4421
  %v4434 = vpack.c.bf16 %v4424, %v4423
  %v4435 = vpack.c.bf16 %v4426, %v4425
  %v4436 = vpack.c.bf16 %v4428, %v4427
  %s4437 = scalar_lea.vmem %s3, 24
  %v4438 = vld [vmem:[%s4437] sm:$0xf]
  %v4440 = vsel %vm3152, %v4429, 0
  %v4443 = vsel %vm3152, %v4430, 0
  %v4446 = vsel %vm3152, %v4431, 0
  %v4449 = vsel %vm3152, %v4432, 0
  %v4452 = vsel %vm3152, %v4433, 0
  %v4455 = vsel %vm3152, %v4434, 0
  %v4458 = vsel %vm3152, %v4435, 0
  %v4461 = vsel %vm3152, %v4436, 0
  %v4464 = vsel %vm1453, %v4438, 0
  %4466 = vmatpush.bf16.msra.mxu0 0
  %4467 = vmatpush.bf16.msra.mxu0 0
  %4468 = vmatpush.bf16.msra.mxu0 0
  %4469 = vmatpush.bf16.msra.mxu0 0
  %4470 = vmatpush.bf16.msra.mxu0 0
  %4471 = vmatpush.bf16.msra.mxu0 0
  %4472 = vmatpush.bf16.msra.mxu0 0
  %4473 = vmatpush.bf16.msra.mxu0 %v4464
  %4474 = vmatmul.bf16.gmra.mxu0 %v4440
  %v4475 = vpop.f32.mrf.mxu0
  %v4476 = vadd.f32 0.0, %v4475
  %v4477 = vpop.f32.mrf.mxu0
  %v4478 = vadd.f32 0.0, %v4477
  %4479 = vmatmul.bf16.gmra.mxu0 %v4443
  %v4480 = vpop.f32.mrf.mxu0
  %v4481 = vadd.f32 0.0, %v4480
  %v4482 = vpop.f32.mrf.mxu0
  %v4483 = vadd.f32 0.0, %v4482
  %4484 = vmatmul.bf16.gmra.mxu0 %v4446
  %v4485 = vpop.f32.mrf.mxu0
  %v4486 = vadd.f32 0.0, %v4485
  %v4487 = vpop.f32.mrf.mxu0
  %v4488 = vadd.f32 0.0, %v4487
  %4489 = vmatmul.bf16.gmra.mxu0 %v4449
  %v4490 = vpop.f32.mrf.mxu0
  %v4491 = vadd.f32 0.0, %v4490
  %v4492 = vpop.f32.mrf.mxu0
  %v4493 = vadd.f32 0.0, %v4492
  %4494 = vmatmul.bf16.gmra.mxu0 %v4452
  %v4495 = vpop.f32.mrf.mxu0
  %v4496 = vadd.f32 0.0, %v4495
  %v4497 = vpop.f32.mrf.mxu0
  %v4498 = vadd.f32 0.0, %v4497
  %4499 = vmatmul.bf16.gmra.mxu0 %v4455
  %v4500 = vpop.f32.mrf.mxu0
  %v4501 = vadd.f32 0.0, %v4500
  %v4502 = vpop.f32.mrf.mxu0
  %v4503 = vadd.f32 0.0, %v4502
  %4504 = vmatmul.bf16.gmra.mxu0 %v4458
  %v4505 = vpop.f32.mrf.mxu0
  %v4506 = vadd.f32 0.0, %v4505
  %v4507 = vpop.f32.mrf.mxu0
  %v4508 = vadd.f32 0.0, %v4507
  %4509 = vmatmul.bf16.gmra.mxu0 %v4461
  %v4510 = vpop.f32.mrf.mxu0
  %v4511 = vadd.f32 0.0, %v4510
  %v4512 = vpop.f32.mrf.mxu0
  %v4513 = vadd.f32 0.0, %v4512
  %4514 = vdwg.mxu0
  %v4515 = vadd.f32 %v4396, %v4476
  %v4516 = vadd.f32 %v4397, %v4478
  %v4517 = vadd.f32 %v4398, %v4481
  %v4518 = vadd.f32 %v4399, %v4483
  %v4519 = vadd.f32 %v4400, %v4486
  %v4520 = vadd.f32 %v4401, %v4488
  %v4521 = vadd.f32 %v4402, %v4491
  %v4522 = vadd.f32 %v4403, %v4493
  %v4523 = vadd.f32 %v4404, %v4496
  %v4524 = vadd.f32 %v4405, %v4498
  %v4525 = vadd.f32 %v4406, %v4501
  %v4526 = vadd.f32 %v4407, %v4503
  %v4527 = vadd.f32 %v4408, %v4506
  %v4528 = vadd.f32 %v4409, %v4508
  %v4529 = vadd.f32 %v4410, %v4511
  %v4530 = vadd.f32 %v4411, %v4513
  %v4531 = vld [vmem:[%s4412 + $0x1] sm:$0xff]
  %v4532 = vld [vmem:[%s4412 + $0x11] sm:$0xff]
  %v4533 = vld [vmem:[%s4412 + $0x21] sm:$0xff]
  %v4534 = vld [vmem:[%s4412 + $0x31] sm:$0xff]
  %v4535 = vld [vmem:[%s4412 + $0x41] sm:$0xff]
  %v4536 = vld [vmem:[%s4412 + $0x51] sm:$0xff]
  %v4537 = vld [vmem:[%s4412 + $0x61] sm:$0xff]
  %v4538 = vld [vmem:[%s4412 + $0x71] sm:$0xff]
  %v4539 = vld [vmem:[%s4412 + $0xa1] sm:$0xff]
  %v4540 = vld [vmem:[%s4412 + $0xb1] sm:$0xff]
  %v4541 = vld [vmem:[%s4412 + $0xc1] sm:$0xff]
  %v4542 = vld [vmem:[%s4412 + $0xd1] sm:$0xff]
  %v4543 = vld [vmem:[%s4412 + $0xe1] sm:$0xff]
  %v4544 = vld [vmem:[%s4412 + $0xf1] sm:$0xff]
  %v4545 = vld [vmem:[%s4412 + $0x101] sm:$0xff]
  %v4546 = vld [vmem:[%s4412 + $0x111] sm:$0xff]
  %v4547 = vpack.c.bf16 %v4532, %v4531
  %v4548 = vpack.c.bf16 %v4534, %v4533
  %v4549 = vpack.c.bf16 %v4536, %v4535
  %v4550 = vpack.c.bf16 %v4538, %v4537
  %v4551 = vpack.c.bf16 %v4540, %v4539
  %v4552 = vpack.c.bf16 %v4542, %v4541
  %v4553 = vpack.c.bf16 %v4544, %v4543
  %v4554 = vpack.c.bf16 %v4546, %v4545
  %s4555 = scalar_lea.vmem %s3, 28
  %v4556 = vld [vmem:[%s4555] sm:$0xf]
  %v4558 = vsel %vm3152, %v4547, 0
  %v4561 = vsel %vm3152, %v4548, 0
  %v4564 = vsel %vm3152, %v4549, 0
  %v4567 = vsel %vm3152, %v4550, 0
  %v4570 = vsel %vm3152, %v4551, 0
  %v4573 = vsel %vm3152, %v4552, 0
  %v4576 = vsel %vm3152, %v4553, 0
  %v4579 = vsel %vm3152, %v4554, 0
  %v4582 = vsel %vm1453, %v4556, 0
  %4584 = vmatpush.bf16.msra.mxu0 0
  %4585 = vmatpush.bf16.msra.mxu0 0
  %4586 = vmatpush.bf16.msra.mxu0 0
  %4587 = vmatpush.bf16.msra.mxu0 0
  %4588 = vmatpush.bf16.msra.mxu0 0
  %4589 = vmatpush.bf16.msra.mxu0 0
  %4590 = vmatpush.bf16.msra.mxu0 0
  %4591 = vmatpush.bf16.msra.mxu0 %v4582
  %4592 = vmatmul.bf16.gmra.mxu0 %v4558
  %v4593 = vpop.f32.mrf.mxu0
  %v4594 = vadd.f32 0.0, %v4593
  %v4595 = vpop.f32.mrf.mxu0
  %v4596 = vadd.f32 0.0, %v4595
  %4597 = vmatmul.bf16.gmra.mxu0 %v4561
  %v4598 = vpop.f32.mrf.mxu0
  %v4599 = vadd.f32 0.0, %v4598
  %v4600 = vpop.f32.mrf.mxu0
  %v4601 = vadd.f32 0.0, %v4600
  %4602 = vmatmul.bf16.gmra.mxu0 %v4564
  %v4603 = vpop.f32.mrf.mxu0
  %v4604 = vadd.f32 0.0, %v4603
  %v4605 = vpop.f32.mrf.mxu0
  %v4606 = vadd.f32 0.0, %v4605
  %4607 = vmatmul.bf16.gmra.mxu0 %v4567
  %v4608 = vpop.f32.mrf.mxu0
  %v4609 = vadd.f32 0.0, %v4608
  %v4610 = vpop.f32.mrf.mxu0
  %v4611 = vadd.f32 0.0, %v4610
  %4612 = vmatmul.bf16.gmra.mxu0 %v4570
  %v4613 = vpop.f32.mrf.mxu0
  %v4614 = vadd.f32 0.0, %v4613
  %v4615 = vpop.f32.mrf.mxu0
  %v4616 = vadd.f32 0.0, %v4615
  %4617 = vmatmul.bf16.gmra.mxu0 %v4573
  %v4618 = vpop.f32.mrf.mxu0
  %v4619 = vadd.f32 0.0, %v4618
  %v4620 = vpop.f32.mrf.mxu0
  %v4621 = vadd.f32 0.0, %v4620
  %4622 = vmatmul.bf16.gmra.mxu0 %v4576
  %v4623 = vpop.f32.mrf.mxu0
  %v4624 = vadd.f32 0.0, %v4623
  %v4625 = vpop.f32.mrf.mxu0
  %v4626 = vadd.f32 0.0, %v4625
  %4627 = vmatmul.bf16.gmra.mxu0 %v4579
  %v4628 = vpop.f32.mrf.mxu0
  %v4629 = vadd.f32 0.0, %v4628
  %v4630 = vpop.f32.mrf.mxu0
  %v4631 = vadd.f32 0.0, %v4630
  %4632 = vdwg.mxu0
  %v4633 = vadd.f32 %v4515, %v4594
  %v4634 = vadd.f32 %v4516, %v4596
  %v4635 = vadd.f32 %v4517, %v4599
  %v4636 = vadd.f32 %v4518, %v4601
  %v4637 = vadd.f32 %v4519, %v4604
  %v4638 = vadd.f32 %v4520, %v4606
  %v4639 = vadd.f32 %v4521, %v4609
  %v4640 = vadd.f32 %v4522, %v4611
  %v4641 = vadd.f32 %v4523, %v4614
  %v4642 = vadd.f32 %v4524, %v4616
  %v4643 = vadd.f32 %v4525, %v4619
  %v4644 = vadd.f32 %v4526, %v4621
  %v4645 = vadd.f32 %v4527, %v4624
  %v4646 = vadd.f32 %v4528, %v4626
  %v4647 = vadd.f32 %v4529, %v4629
  %v4648 = vadd.f32 %v4530, %v4631
  %v4649 = vld [vmem:[%s4412 + $0x2] sm:$0xff]
  %v4650 = vld [vmem:[%s4412 + $0x12] sm:$0xff]
  %v4651 = vld [vmem:[%s4412 + $0x22] sm:$0xff]
  %v4652 = vld [vmem:[%s4412 + $0x32] sm:$0xff]
  %v4653 = vld [vmem:[%s4412 + $0x42] sm:$0xff]
  %v4654 = vld [vmem:[%s4412 + $0x52] sm:$0xff]
  %v4655 = vld [vmem:[%s4412 + $0x62] sm:$0xff]
  %v4656 = vld [vmem:[%s4412 + $0x72] sm:$0xff]
  %v4657 = vld [vmem:[%s4412 + $0xa2] sm:$0xff]
  %v4658 = vld [vmem:[%s4412 + $0xb2] sm:$0xff]
  %v4659 = vld [vmem:[%s4412 + $0xc2] sm:$0xff]
  %v4660 = vld [vmem:[%s4412 + $0xd2] sm:$0xff]
  %v4661 = vld [vmem:[%s4412 + $0xe2] sm:$0xff]
  %v4662 = vld [vmem:[%s4412 + $0xf2] sm:$0xff]
  %v4663 = vld [vmem:[%s4412 + $0x102] sm:$0xff]
  %v4664 = vld [vmem:[%s4412 + $0x112] sm:$0xff]
  %v4665 = vpack.c.bf16 %v4650, %v4649
  %v4666 = vpack.c.bf16 %v4652, %v4651
  %v4667 = vpack.c.bf16 %v4654, %v4653
  %v4668 = vpack.c.bf16 %v4656, %v4655
  %v4669 = vpack.c.bf16 %v4658, %v4657
  %v4670 = vpack.c.bf16 %v4660, %v4659
  %v4671 = vpack.c.bf16 %v4662, %v4661
  %v4672 = vpack.c.bf16 %v4664, %v4663
  %s4673 = scalar_lea.vmem %s3, 32
  %v4674 = vld [vmem:[%s4673] sm:$0xf]
  %v4676 = vsel %vm3152, %v4665, 0
  %v4679 = vsel %vm3152, %v4666, 0
  %v4682 = vsel %vm3152, %v4667, 0
  %v4685 = vsel %vm3152, %v4668, 0
  %v4688 = vsel %vm3152, %v4669, 0
  %v4691 = vsel %vm3152, %v4670, 0
  %v4694 = vsel %vm3152, %v4671, 0
  %v4697 = vsel %vm3152, %v4672, 0
  %v4700 = vsel %vm1453, %v4674, 0
  %4702 = vmatpush.bf16.msra.mxu0 0
  %4703 = vmatpush.bf16.msra.mxu0 0
  %4704 = vmatpush.bf16.msra.mxu0 0
  %4705 = vmatpush.bf16.msra.mxu0 0
  %4706 = vmatpush.bf16.msra.mxu0 0
  %4707 = vmatpush.bf16.msra.mxu0 0
  %4708 = vmatpush.bf16.msra.mxu0 0
  %4709 = vmatpush.bf16.msra.mxu0 %v4700
  %4710 = vmatmul.bf16.gmra.mxu0 %v4676
  %v4711 = vpop.f32.mrf.mxu0
  %v4712 = vadd.f32 0.0, %v4711
  %v4713 = vpop.f32.mrf.mxu0
  %v4714 = vadd.f32 0.0, %v4713
  %4715 = vmatmul.bf16.gmra.mxu0 %v4679
  %v4716 = vpop.f32.mrf.mxu0
  %v4717 = vadd.f32 0.0, %v4716
  %v4718 = vpop.f32.mrf.mxu0
  %v4719 = vadd.f32 0.0, %v4718
  %4720 = vmatmul.bf16.gmra.mxu0 %v4682
  %v4721 = vpop.f32.mrf.mxu0
  %v4722 = vadd.f32 0.0, %v4721
  %v4723 = vpop.f32.mrf.mxu0
  %v4724 = vadd.f32 0.0, %v4723
  %4725 = vmatmul.bf16.gmra.mxu0 %v4685
  %v4726 = vpop.f32.mrf.mxu0
  %v4727 = vadd.f32 0.0, %v4726
  %v4728 = vpop.f32.mrf.mxu0
  %v4729 = vadd.f32 0.0, %v4728
  %4730 = vmatmul.bf16.gmra.mxu0 %v4688
  %v4731 = vpop.f32.mrf.mxu0
  %v4732 = vadd.f32 0.0, %v4731
  %v4733 = vpop.f32.mrf.mxu0
  %v4734 = vadd.f32 0.0, %v4733
  %4735 = vmatmul.bf16.gmra.mxu0 %v4691
  %v4736 = vpop.f32.mrf.mxu0
  %v4737 = vadd.f32 0.0, %v4736
  %v4738 = vpop.f32.mrf.mxu0
  %v4739 = vadd.f32 0.0, %v4738
  %4740 = vmatmul.bf16.gmra.mxu0 %v4694
  %v4741 = vpop.f32.mrf.mxu0
  %v4742 = vadd.f32 0.0, %v4741
  %v4743 = vpop.f32.mrf.mxu0
  %v4744 = vadd.f32 0.0, %v4743
  %4745 = vmatmul.bf16.gmra.mxu0 %v4697
  %v4746 = vpop.f32.mrf.mxu0
  %v4747 = vadd.f32 0.0, %v4746
  %v4748 = vpop.f32.mrf.mxu0
  %v4749 = vadd.f32 0.0, %v4748
  %4750 = vdwg.mxu0
  %v4751 = vadd.f32 %v4633, %v4712
  %v4752 = vadd.f32 %v4634, %v4714
  %v4753 = vadd.f32 %v4635, %v4717
  %v4754 = vadd.f32 %v4636, %v4719
  %v4755 = vadd.f32 %v4637, %v4722
  %v4756 = vadd.f32 %v4638, %v4724
  %v4757 = vadd.f32 %v4639, %v4727
  %v4758 = vadd.f32 %v4640, %v4729
  %v4759 = vadd.f32 %v4641, %v4732
  %v4760 = vadd.f32 %v4642, %v4734
  %v4761 = vadd.f32 %v4643, %v4737
  %v4762 = vadd.f32 %v4644, %v4739
  %v4763 = vadd.f32 %v4645, %v4742
  %v4764 = vadd.f32 %v4646, %v4744
  %v4765 = vadd.f32 %v4647, %v4747
  %v4766 = vadd.f32 %v4648, %v4749
  %v4767 = vld [vmem:[%s4] sm:$0x1]
  %v4769 = vperm.slane %v4767, 0
  %v4771 = vadd.f32 %v4751, %v4769
  %v4772 = vadd.f32 %v4752, %v4769
  %v4773 = vadd.f32 %v4753, %v4769
  %v4774 = vadd.f32 %v4754, %v4769
  %v4775 = vadd.f32 %v4755, %v4769
  %v4776 = vadd.f32 %v4756, %v4769
  %v4777 = vadd.f32 %v4757, %v4769
  %v4778 = vadd.f32 %v4758, %v4769
  %v4779 = vadd.f32 %v4759, %v4769
  %v4780 = vadd.f32 %v4760, %v4769
  %v4781 = vadd.f32 %v4761, %v4769
  %v4782 = vadd.f32 %v4762, %v4769
  %v4783 = vadd.f32 %v4763, %v4769
  %v4784 = vadd.f32 %v4764, %v4769
  %v4785 = vadd.f32 %v4765, %v4769
  %v4786 = vadd.f32 %v4766, %v4769
  %v4787 = vand.u32 2147483647, %v4771
  %v4788 = vand.u32 2147483647, %v4772
  %v4789 = vand.u32 2147483647, %v4773
  %v4790 = vand.u32 2147483647, %v4774
  %v4791 = vand.u32 2147483647, %v4775
  %v4792 = vand.u32 2147483647, %v4776
  %v4793 = vand.u32 2147483647, %v4777
  %v4794 = vand.u32 2147483647, %v4778
  %v4795 = vand.u32 2147483647, %v4779
  %v4796 = vand.u32 2147483647, %v4780
  %v4797 = vand.u32 2147483647, %v4781
  %v4798 = vand.u32 2147483647, %v4782
  %v4799 = vand.u32 2147483647, %v4783
  %v4800 = vand.u32 2147483647, %v4784
  %v4801 = vand.u32 2147483647, %v4785
  %v4802 = vand.u32 2147483647, %v4786
  %4803 = vst.msk [vmem:[%s13] sm:$0xff] %vm1522, %v4787
  %4804 = vst.msk [vmem:[%s13 + $0x8] sm:$0xff] %vm1522, %v4788
  %4805 = vst.msk [vmem:[%s13 + $0x10] sm:$0xff] %vm1522, %v4789
  %4806 = vst.msk [vmem:[%s13 + $0x18] sm:$0xff] %vm1522, %v4790
  %4807 = vst.msk [vmem:[%s13 + $0x20] sm:$0xff] %vm1522, %v4791
  %4808 = vst.msk [vmem:[%s13 + $0x28] sm:$0xff] %vm1522, %v4792
  %4809 = vst.msk [vmem:[%s13 + $0x30] sm:$0xff] %vm1522, %v4793
  %4810 = vst.msk [vmem:[%s13 + $0x38] sm:$0xff] %vm1522, %v4794
  %4811 = vst.msk [vmem:[%s13 + $0x40] sm:$0xff] %vm1522, %v4795
  %4812 = vst.msk [vmem:[%s13 + $0x48] sm:$0xff] %vm1522, %v4796
  %4813 = vst.msk [vmem:[%s13 + $0x50] sm:$0xff] %vm1522, %v4797
  %4814 = vst.msk [vmem:[%s13 + $0x58] sm:$0xff] %vm1522, %v4798
  %4815 = vst.msk [vmem:[%s13 + $0x60] sm:$0xff] %vm1522, %v4799
  %4816 = vst.msk [vmem:[%s13 + $0x68] sm:$0xff] %vm1522, %v4800
  %4817 = vst.msk [vmem:[%s13 + $0x70] sm:$0xff] %vm1522, %v4801
  %4818 = vst.msk [vmem:[%s13 + $0x78] sm:$0xff] %vm1522, %v4802
  // Predicated region
  $region54: #{_lambda_.1} parent=0 // pred_check
    _
  $region55: #{_lambda_.1} parent=0 // pred_check_branch
    %4820 = sbr.rel (0) target = $region57
  $region56: #{_lambda_.1} parent=0 // pred_region
    _
  $region57: #{_lambda_.1} parent=0 // pred_fallthru
    _
  // Predicated region
  $region58: #{_lambda_.1} parent=0 // pred_check
    _
  $region59: #{_lambda_.1} parent=0 // pred_check_branch
    %4822 = sbr.rel (0) target = $region61
  $region60: #{_lambda_.1} parent=0 // pred_region
    _
  $region61: #{_lambda_.1} parent=0 // pred_fallthru
    _

</llo_original>
